<compile_context>
chip_gen: v5e
topology: v5e:2x2
jax: 0.10.0
libtpu: 0.0.40
codegen_flags: <defaults>
</compile_context>

<pallas_src>
import functools

import jax
import jax.numpy as jnp
from jax import lax
from jax.experimental import pallas as pl
from jax.experimental.pallas import tpu as pltpu

_LANE = 128


def _round_up(x, m):
    return ((x + m - 1) // m) * m


def _res_mlp_kernel(x_ref, w0_ref, b0_ref, wres_ref, bres_ref, w2_ref, b2_ref,
                    o_ref):
    """Whole forward pass for one batch tile, entirely in VMEM."""
    # Input projection: (TB, 3072) @ (3072, H) -> (TB, H).
    # x is cast to bf16 here (in VMEM, no extra HBM traffic); f32 accumulate.
    x_bf = x_ref[...].astype(jnp.bfloat16)
    h = jnp.dot(x_bf, w0_ref[...],
                preferred_element_type=jnp.float32) + b0_ref[...]

    n_blocks = wres_ref.shape[0]  # static

    def block_body(i, h):
        # Residual chain fully in f32 to match the PyTorch f32 forward.
        x_res = jnp.maximum(h, 0.0)
        x_res = jnp.dot(x_res, wres_ref[i],                       # (TB,H)@(H,H)
                        preferred_element_type=jnp.float32) + bres_ref[i]
        return h + x_res                                          # residual add (f32)

    h = lax.fori_loop(0, n_blocks, block_body, h, unroll=True)

    # Output head: (TB, H) @ (H, 128-padded) -> (TB, 128), lane-dense store.
    o_ref[...] = (jnp.dot(h, w2_ref[...],
                          preferred_element_type=jnp.float32)
                  + b2_ref[...]).astype(o_ref.dtype)


@functools.partial(jax.jit, static_argnames=("tile_b",))
def simple_res_mlp(x, w0, b0, wres, bres, w2, b2, *, tile_b=512):
    B, D_in = x.shape
    H = w0.shape[1]
    n_out = w2.shape[1]
    L = wres.shape[0]

    # --- batch tile selection (no wrapper padding of x) ------------------------
    if B <= _LANE:
        tile_eff = B                       # block dim == array dim is always legal
    else:
        tile_eff = min(tile_b, _round_up(B, _LANE))
        tile_eff = max(_LANE, (tile_eff // _LANE) * _LANE)
        # v7x has 2 TensorCores: make sure the "parallel" axis has >= 2 steps.
        while tile_eff > _LANE and pl.cdiv(B, tile_eff) < 2:
            tile_eff -= _LANE
    grid = (pl.cdiv(B, tile_eff),)         # ragged tail handled by Pallas masking

    # --- lane-dense output: pad the 10-wide head to 128 columns ----------------
    n_out_pad = _round_up(n_out, _LANE)

    # --- weights: bf16 only for the big input projection; everything else f32 --
    w0_c = w0.astype(jnp.bfloat16)
    b0_c = b0.astype(jnp.float32)
    wres_c = wres.astype(jnp.float32)
    bres_c = bres.astype(jnp.float32)
    w2_c = jnp.pad(w2, ((0, 0), (0, n_out_pad - n_out))).astype(jnp.float32)
    b2_c = jnp.pad(b2, ((0, 0), (0, n_out_pad - n_out))).astype(jnp.float32)

    out = pl.pallas_call(
        _res_mlp_kernel,
        out_shape=jax.ShapeDtypeStruct((B, n_out_pad), jnp.float32),
        grid_spec=pltpu.PrefetchScalarGridSpec(
            num_scalar_prefetch=0,
            grid=grid,
            in_specs=[
                pl.BlockSpec((tile_eff, D_in), lambda i: (i, 0)),    # x tile (orig dtype)
                pl.BlockSpec((D_in, H), lambda i: (0, 0)),           # W0 (bf16)
                pl.BlockSpec((1, H), lambda i: (0, 0)),              # b0 (f32)
                pl.BlockSpec((L, H, H), lambda i: (0, 0, 0)),        # Wres stack (f32)
                pl.BlockSpec((L, 1, H), lambda i: (0, 0, 0)),        # bres stack (f32)
                pl.BlockSpec((H, n_out_pad), lambda i: (0, 0)),      # W2 padded (f32)
                pl.BlockSpec((1, n_out_pad), lambda i: (0, 0)),      # b2 padded (f32)
            ],
            out_specs=pl.BlockSpec((tile_eff, n_out_pad), lambda i: (i, 0)),
        ),
        compiler_params=pltpu.CompilerParams(
            dimension_semantics=("parallel",),
            vmem_limit_bytes=48 * 1024 * 1024,
        ),
    )(x, w0_c, b0_c, wres_c, bres_c, w2_c, b2_c)

    # Drop the lane padding of the 10-way head.
    return out[:, :n_out].astype(x.dtype)


def init_params(key, width_mult=1, depth_mult=1, block_size=1):
    """Deterministic parameter init mirroring SimpleResMLP.__init__ shapes."""
    D_in = 3072
    H = 128 * width_mult
    n_out = 10
    n_blocks = 4 * depth_mult * block_size  # block_size linears per block; flattened

    k0, k1, k2, k3, k4 = jax.random.split(key, 5)

    # layers[0]: kaiming_normal_(nonlinearity='linear') -> std = 1/sqrt(fan_in), zero bias
    w0 = jax.random.normal(k0, (D_in, H), jnp.float32) * (1.0 / jnp.sqrt(D_in))
    b0 = jnp.zeros((1, H), jnp.float32)

    # residual blocks: kaiming_normal_(nonlinearity='relu') -> std = sqrt(2/fan_in),
    # then scaled by 1 / ((depth_mult ** (1/block_size)) ** 0.5)
    scale = 1.0 / ((depth_mult ** (1.0 / block_size)) ** 0.5)
    wres = (jax.random.normal(k1, (n_blocks, H, H), jnp.float32)
            * jnp.sqrt(2.0 / H) * scale)
    # nn.Linear default bias init: uniform(-1/sqrt(fan_in), 1/sqrt(fan_in))
    bres = jax.random.uniform(k2, (n_blocks, 1, H), jnp.float32,
                              minval=-1.0 / jnp.sqrt(H), maxval=1.0 / jnp.sqrt(H))

    # layers[2]: nn.Linear default init (uniform) for both weight and bias
    w2 = jax.random.uniform(k3, (H, n_out), jnp.float32,
                            minval=-1.0 / jnp.sqrt(H), maxval=1.0 / jnp.sqrt(H))
    b2 = jax.random.uniform(k4, (1, n_out), jnp.float32,
                            minval=-1.0 / jnp.sqrt(H), maxval=1.0 / jnp.sqrt(H))

    return w0, b0, wres, bres, w2, b2


def reference_forward(x, w0, b0, wres, bres, w2, b2):
    """Plain-JAX reference matching SimpleResMLP.forward (block_size=1, no rootL)."""
    h = x @ w0 + b0
    for i in range(wres.shape[0]):
        x_res = jnp.maximum(h, 0.0)
        x_res = x_res @ wres[i] + bres[i]
        h = h + x_res
    return h @ w2 + b2


if __name__ == "__main__":
    key = jax.random.PRNGKey(0)
    kx, kp = jax.random.split(key)

    # B not a multiple of the tile: exercises the ragged trailing block (no pad)
    # and a 2-step grid at tile_b=128.
    B = 200
    x = jax.random.normal(kx, (B, 3072), jnp.float32)
    params = init_params(kp, width_mult=1, depth_mult=1, block_size=1)

    out = simple_res_mlp(x, *params, tile_b=128)
    out = jax.block_until_ready(out)
    assert out.shape == (B, 10)

    w0, b0, wres, bres, w2, b2 = params

    # The kernel's only reduced-precision step is the bf16 input projection
    # (x, W0 rounded to bf16, accumulated in f32); mirror that in the reference
    # and keep the residual chain / head in plain f32 exactly like the kernel.
    def _rt(a):
        return a.astype(jnp.bfloat16).astype(jnp.float32)

    ref = reference_forward(_rt(x), _rt(w0), b0, wres, bres, w2, b2)

    max_diff = float(jnp.max(jnp.abs(out - ref)))
    assert jnp.allclose(out, ref, atol=2e-2, rtol=2e-2), \
        f"mismatch vs reference, max abs diff = {max_diff}"

    print("KERNEL_OK")
</pallas_src>

<mosaic_0001>
module attributes {stable_mosaic.version = 11 : i64} {
  func.func @_res_mlp_kernel(%arg0: i32, %arg1: memref<128x3072xf32, #tpu.memory_space<vmem>>, %arg2: memref<3072x128xbf16, #tpu.memory_space<vmem>>, %arg3: memref<1x128xf32, #tpu.memory_space<vmem>>, %arg4: memref<4x128x128xf32, #tpu.memory_space<vmem>>, %arg5: memref<4x1x128xf32, #tpu.memory_space<vmem>>, %arg6: memref<128x128xf32, #tpu.memory_space<vmem>>, %arg7: memref<1x128xf32, #tpu.memory_space<vmem>>, %arg8: memref<128x128xf32, #tpu.memory_space<vmem>>) attributes {dimension_semantics = [#tpu.dimension_semantics<parallel>], iteration_bounds = array<i64: 2>, scalar_prefetch = 0 : i64, scratch_operands = 0 : i64, tpu.core_type = #tpu.core_type<tc>, window_params = [{transform_indices = @transform_0, window_bounds = array<i64: 128, 3072>}, {pipeline_mode = #tpu.pipeline_mode<synchronous>, transform_indices = @transform_1, window_bounds = array<i64: 3072, 128>}, {pipeline_mode = #tpu.pipeline_mode<synchronous>, transform_indices = @transform_2, window_bounds = array<i64: 1, 128>}, {pipeline_mode = #tpu.pipeline_mode<synchronous>, transform_indices = @transform_3, window_bounds = array<i64: 4, 128, 128>}, {pipeline_mode = #tpu.pipeline_mode<synchronous>, transform_indices = @transform_4, window_bounds = array<i64: 4, 1, 128>}, {pipeline_mode = #tpu.pipeline_mode<synchronous>, transform_indices = @transform_5, window_bounds = array<i64: 128, 128>}, {pipeline_mode = #tpu.pipeline_mode<synchronous>, transform_indices = @transform_6, window_bounds = array<i64: 1, 128>}, {transform_indices = @transform_7, window_bounds = array<i64: 128, 128>}]} {
    %c0 = arith.constant 0 : index
    %c0_0 = arith.constant 0 : index
    %0 = vector.load %arg1[%c0, %c0_0] : memref<128x3072xf32, #tpu.memory_space<vmem>>, vector<128x3072xf32>
    %1 = arith.truncf %0 : vector<128x3072xf32> to vector<128x3072xbf16>
    %c0_1 = arith.constant 0 : index
    %c0_2 = arith.constant 0 : index
    %2 = vector.load %arg2[%c0_1, %c0_2] : memref<3072x128xbf16, #tpu.memory_space<vmem>>, vector<3072x128xbf16>
    %cst = arith.constant dense<0.000000e+00> : vector<128x128xf32>
    %3 = tpu.matmul %1, %2, %cst {dimension_numbers = #tpu.dot_dimension_numbers<[1], [0], [0], [1], [0, 0, 1, 1], [], []>} : vector<128x3072xbf16>, vector<3072x128xbf16>, vector<128x128xf32> -> vector<128x128xf32>
    %c0_3 = arith.constant 0 : index
    %c0_4 = arith.constant 0 : index
    %4 = vector.load %arg3[%c0_3, %c0_4] : memref<1x128xf32, #tpu.memory_space<vmem>>, vector<1x128xf32>
    %5 = vector.broadcast %4 : vector<1x128xf32> to vector<128x128xf32>
    %6 = arith.addf %3, %5 : vector<128x128xf32>
    %c0_i32 = arith.constant 0 : i32
    %cst_5 = arith.constant 0.000000e+00 : f32
    %7 = vector.broadcast %cst_5 : f32 to vector<128x128xf32>
    %8 = arith.maximumf %6, %7 : vector<128x128xf32>
    %9 = arith.index_cast %c0_i32 : i32 to index
    %c0_6 = arith.constant 0 : index
    %c0_7 = arith.constant 0 : index
    %10 = vector.load %arg4[%9, %c0_6, %c0_7] : memref<4x128x128xf32, #tpu.memory_space<vmem>>, vector<1x128x128xf32>
    %11 = vector.shape_cast %10 : vector<1x128x128xf32> to vector<128x128xf32>
    %cst_8 = arith.constant dense<0.000000e+00> : vector<128x128xf32>
    %12 = tpu.matmul %8, %11, %cst_8 {dimension_numbers = #tpu.dot_dimension_numbers<[1], [0], [0], [1], [0, 0, 1, 1], [], []>} : vector<128x128xf32>, vector<128x128xf32>, vector<128x128xf32> -> vector<128x128xf32>
    %13 = arith.index_cast %c0_i32 : i32 to index
    %c0_9 = arith.constant 0 : index
    %c0_10 = arith.constant 0 : index
    %14 = vector.load %arg5[%13, %c0_9, %c0_10] : memref<4x1x128xf32, #tpu.memory_space<vmem>>, vector<1x1x128xf32>
    %15 = vector.shape_cast %14 : vector<1x1x128xf32> to vector<1x128xf32>
    %16 = vector.broadcast %15 : vector<1x128xf32> to vector<128x128xf32>
    %17 = arith.addf %12, %16 : vector<128x128xf32>
    %18 = arith.addf %6, %17 : vector<128x128xf32>
    %c1_i32 = arith.constant 1 : i32
    %cst_11 = arith.constant 0.000000e+00 : f32
    %19 = vector.broadcast %cst_11 : f32 to vector<128x128xf32>
    %20 = arith.maximumf %18, %19 : vector<128x128xf32>
    %21 = arith.index_cast %c1_i32 : i32 to index
    %c0_12 = arith.constant 0 : index
    %c0_13 = arith.constant 0 : index
    %22 = vector.load %arg4[%21, %c0_12, %c0_13] : memref<4x128x128xf32, #tpu.memory_space<vmem>>, vector<1x128x128xf32>
    %23 = vector.shape_cast %22 : vector<1x128x128xf32> to vector<128x128xf32>
    %cst_14 = arith.constant dense<0.000000e+00> : vector<128x128xf32>
    %24 = tpu.matmul %20, %23, %cst_14 {dimension_numbers = #tpu.dot_dimension_numbers<[1], [0], [0], [1], [0, 0, 1, 1], [], []>} : vector<128x128xf32>, vector<128x128xf32>, vector<128x128xf32> -> vector<128x128xf32>
    %25 = arith.index_cast %c1_i32 : i32 to index
    %c0_15 = arith.constant 0 : index
    %c0_16 = arith.constant 0 : index
    %26 = vector.load %arg5[%25, %c0_15, %c0_16] : memref<4x1x128xf32, #tpu.memory_space<vmem>>, vector<1x1x128xf32>
    %27 = vector.shape_cast %26 : vector<1x1x128xf32> to vector<1x128xf32>
    %28 = vector.broadcast %27 : vector<1x128xf32> to vector<128x128xf32>
    %29 = arith.addf %24, %28 : vector<128x128xf32>
    %30 = arith.addf %18, %29 : vector<128x128xf32>
    %c2_i32 = arith.constant 2 : i32
    %cst_17 = arith.constant 0.000000e+00 : f32
    %31 = vector.broadcast %cst_17 : f32 to vector<128x128xf32>
    %32 = arith.maximumf %30, %31 : vector<128x128xf32>
    %33 = arith.index_cast %c2_i32 : i32 to index
    %c0_18 = arith.constant 0 : index
    %c0_19 = arith.constant 0 : index
    %34 = vector.load %arg4[%33, %c0_18, %c0_19] : memref<4x128x128xf32, #tpu.memory_space<vmem>>, vector<1x128x128xf32>
    %35 = vector.shape_cast %34 : vector<1x128x128xf32> to vector<128x128xf32>
    %cst_20 = arith.constant dense<0.000000e+00> : vector<128x128xf32>
    %36 = tpu.matmul %32, %35, %cst_20 {dimension_numbers = #tpu.dot_dimension_numbers<[1], [0], [0], [1], [0, 0, 1, 1], [], []>} : vector<128x128xf32>, vector<128x128xf32>, vector<128x128xf32> -> vector<128x128xf32>
    %37 = arith.index_cast %c2_i32 : i32 to index
    %c0_21 = arith.constant 0 : index
    %c0_22 = arith.constant 0 : index
    %38 = vector.load %arg5[%37, %c0_21, %c0_22] : memref<4x1x128xf32, #tpu.memory_space<vmem>>, vector<1x1x128xf32>
    %39 = vector.shape_cast %38 : vector<1x1x128xf32> to vector<1x128xf32>
    %40 = vector.broadcast %39 : vector<1x128xf32> to vector<128x128xf32>
    %41 = arith.addf %36, %40 : vector<128x128xf32>
    %42 = arith.addf %30, %41 : vector<128x128xf32>
    %c3_i32 = arith.constant 3 : i32
    %cst_23 = arith.constant 0.000000e+00 : f32
    %43 = vector.broadcast %cst_23 : f32 to vector<128x128xf32>
    %44 = arith.maximumf %42, %43 : vector<128x128xf32>
    %45 = arith.index_cast %c3_i32 : i32 to index
    %c0_24 = arith.constant 0 : index
    %c0_25 = arith.constant 0 : index
    %46 = vector.load %arg4[%45, %c0_24, %c0_25] : memref<4x128x128xf32, #tpu.memory_space<vmem>>, vector<1x128x128xf32>
    %47 = vector.shape_cast %46 : vector<1x128x128xf32> to vector<128x128xf32>
    %cst_26 = arith.constant dense<0.000000e+00> : vector<128x128xf32>
    %48 = tpu.matmul %44, %47, %cst_26 {dimension_numbers = #tpu.dot_dimension_numbers<[1], [0], [0], [1], [0, 0, 1, 1], [], []>} : vector<128x128xf32>, vector<128x128xf32>, vector<128x128xf32> -> vector<128x128xf32>
    %49 = arith.index_cast %c3_i32 : i32 to index
    %c0_27 = arith.constant 0 : index
    %c0_28 = arith.constant 0 : index
    %50 = vector.load %arg5[%49, %c0_27, %c0_28] : memref<4x1x128xf32, #tpu.memory_space<vmem>>, vector<1x1x128xf32>
    %51 = vector.shape_cast %50 : vector<1x1x128xf32> to vector<1x128xf32>
    %52 = vector.broadcast %51 : vector<1x128xf32> to vector<128x128xf32>
    %53 = arith.addf %48, %52 : vector<128x128xf32>
    %54 = arith.addf %42, %53 : vector<128x128xf32>
    %c4_i32 = arith.constant 4 : i32
    %c0_29 = arith.constant 0 : index
    %c0_30 = arith.constant 0 : index
    %55 = vector.load %arg6[%c0_29, %c0_30] : memref<128x128xf32, #tpu.memory_space<vmem>>, vector<128x128xf32>
    %cst_31 = arith.constant dense<0.000000e+00> : vector<128x128xf32>
    %56 = tpu.matmul %54, %55, %cst_31 {dimension_numbers = #tpu.dot_dimension_numbers<[1], [0], [0], [1], [0, 0, 1, 1], [], []>} : vector<128x128xf32>, vector<128x128xf32>, vector<128x128xf32> -> vector<128x128xf32>
    %c0_32 = arith.constant 0 : index
    %c0_33 = arith.constant 0 : index
    %57 = vector.load %arg7[%c0_32, %c0_33] : memref<1x128xf32, #tpu.memory_space<vmem>>, vector<1x128xf32>
    %58 = vector.broadcast %57 : vector<1x128xf32> to vector<128x128xf32>
    %59 = arith.addf %56, %58 : vector<128x128xf32>
    %c0_34 = arith.constant 0 : index
    %c0_35 = arith.constant 0 : index
    %60 = vector.load %arg8[%c0_34, %c0_35] : memref<128x128xf32, #tpu.memory_space<vmem>>, vector<128x128xf32>
    tpu.vector_store %arg8[%c0_34, %c0_35], %59 {strides = array<i32>} : memref<128x128xf32, #tpu.memory_space<vmem>>, vector<128x128xf32>,
    return
  }
  func.func @transform_0(%arg0: i32) -> (i32, i32) {
    %c0_i32 = arith.constant 0 : i32
    %c0_i32_0 = arith.constant 0 : i32
    return %arg0, %c0_i32 : i32, i32
  }
  func.func @transform_1(%arg0: i32) -> (i32, i32) {
    %c0_i32 = arith.constant 0 : i32
    %c0_i32_0 = arith.constant 0 : i32
    %c0_i32_1 = arith.constant 0 : i32
    return %c0_i32, %c0_i32_0 : i32, i32
  }
  func.func @transform_2(%arg0: i32) -> (i32, i32) {
    %c0_i32 = arith.constant 0 : i32
    %c0_i32_0 = arith.constant 0 : i32
    %c0_i32_1 = arith.constant 0 : i32
    return %c0_i32, %c0_i32_0 : i32, i32
  }
  func.func @transform_3(%arg0: i32) -> (i32, i32, i32) {
    %c0_i32 = arith.constant 0 : i32
    %c0_i32_0 = arith.constant 0 : i32
    %c0_i32_1 = arith.constant 0 : i32
    %c0_i32_2 = arith.constant 0 : i32
    return %c0_i32, %c0_i32_0, %c0_i32_1 : i32, i32, i32
  }
  func.func @transform_4(%arg0: i32) -> (i32, i32, i32) {
    %c0_i32 = arith.constant 0 : i32
    %c0_i32_0 = arith.constant 0 : i32
    %c0_i32_1 = arith.constant 0 : i32
    %c0_i32_2 = arith.constant 0 : i32
    return %c0_i32, %c0_i32_0, %c0_i32_1 : i32, i32, i32
  }
  func.func @transform_5(%arg0: i32) -> (i32, i32) {
    %c0_i32 = arith.constant 0 : i32
    %c0_i32_0 = arith.constant 0 : i32
    %c0_i32_1 = arith.constant 0 : i32
    return %c0_i32, %c0_i32_0 : i32, i32
  }
  func.func @transform_6(%arg0: i32) -> (i32, i32) {
    %c0_i32 = arith.constant 0 : i32
    %c0_i32_0 = arith.constant 0 : i32
    %c0_i32_1 = arith.constant 0 : i32
    return %c0_i32, %c0_i32_0 : i32, i32
  }
  func.func @transform_7(%arg0: i32) -> (i32, i32) {
    %c0_i32 = arith.constant 0 : i32
    %c0_i32_0 = arith.constant 0 : i32
    return %arg0, %c0_i32 : i32, i32
  }
}

</mosaic_0001>

<llo_original>
// kernel: simple_res_mlp.1
$region0: #{simple_res_mlp.1}
  #allocation0 [shape = 'u32[]', space=smem, size = 0x4, offset = 0x4, fixed_abs, tag = 'smem constant byte address 0x4 - core index']
  #allocation1 [shape = 'u32[72,128]{1,0:T(1,128)}', space=vmem, size = 0x9000, scoped, tag = 'internal scratch']
  %s0 = inlined_call_operand.vmem [shape: f32[200,3072], index: 0, kind: input, shape index: {}]
  %s1 = inlined_call_operand.vmem [shape: bf16[3072,128], index: 1, kind: input, shape index: {}]
  %s2 = inlined_call_operand.vmem [shape: f32[1,128], index: 2, kind: input, shape index: {}]
  %s3 = inlined_call_operand.hbm [shape: f32[4,128,128], index: 3, kind: input, shape index: {}]
  %s4 = inlined_call_operand.vmem [shape: f32[4,1,128], index: 4, kind: input, shape index: {}]
  %s5 = inlined_call_operand.vmem [shape: f32[128,128], index: 5, kind: input, shape index: {}]
  %s6 = inlined_call_operand.vmem [shape: f32[1,128], index: 6, kind: input, shape index: {}]
  %s7 = inlined_call_operand.vmem [shape: f32[200,128], index: 7, kind: output, shape index: {}]
  %s8 = sld [smem:[#allocation0]]
  $region113: #{simple_res_mlp.1} parent=0
    _
  %s10 = ssub.s32 1, %s8
  %s11 = scalar_select 0, %s10, %s8
  $region1: #{simple_res_mlp.1} parent=0
    #allocation2 [shape = 'u8[262144]{0}', space=vmem, size = 0x40000, scoped, tag = 'input window, operand 3, single buffered']
    #allocation3 [shape = 's32[2]{0}', space=sflag, size = 0x8, scoped, tag = 'scoped memory for simple_res_mlp.1']
    #allocation4 [shape = 'u8[131072]{0}', space=vmem, size = 0x20000, scoped, tag = 'output window, operand 0']
    %12 = vsyncpa [#allocation3], 0
    loop: start=0, step=1, limit=4
    $region2: #{simple_res_mlp.1} parent=1 // loop_pre_header
      _
    $region3: #{simple_res_mlp.1} parent=1 // loop_header
      %s14 = sphi 0, %s18
      %p15 = scmp.ge.s32.totalorder %s14, 4
      %s24 = sphi 0, %s26
      %s27 = sphi 0, %s24
      %s28 = sphi 0, %s27
      %s44 = sphi 0, %s28
      %s48 = sphi 0, %s48
      %s50 = sphi 0, %s48
      %s51 = sphi 0, %s50
      %s65 = sphi 0, %s51
      %s69 = sphi 0, %s69
      %s71 = sphi 0, %s69
      %s72 = sphi 0, %s71
      %s86 = sphi 0, %s72
      %s90 = sphi 0, %s90
      %s92 = sphi 0, %s90
      %s93 = sphi 0, %s92
      %s107 = sphi 0, %s93
      %s111 = sphi 0, %s111
      %s113 = sphi 0, %s111
      %s114 = sphi 0, %s113
      %s128 = sphi 0, %s114
      %s132 = sphi 0, %s132
      %s134 = sphi 0, %s132
      %s135 = sphi 0, %s134
      %s149 = sphi 0, %s135
      %s153 = sphi 0, %s153
      %s155 = sphi 0, %s153
      %s156 = sphi 0, %s155
      %s170 = sphi 0, %s156
      %s176 = sphi 0, %s178
      %s179 = sphi 0, %s176
      %s180 = sphi 0, %s179
      %s196 = sphi 0, %s180
    $region4: #{simple_res_mlp.1} parent=1 // loop_header_branch
      %17 = sbr.rel (%p15) target = $region8
    $region5: #{simple_res_mlp.1} parent=1 // loop_body
      %s19 = ssub.s32 %s14, 1
      %s20 = ssub.s32 %s14, 2
      %s21 = sadd.s32 %s14, 1
      %s22 = ssub.s32 %s14, %s21
      %p23 = scmp.eq.s32.totalorder %s22, 0
      %s25 = sadd.s32 %s24, 1
      %s26 = scalar_select %p23, %s24, %s25
      %p29 = pneg %p23
      %p30 = scmp.eq.s32.totalorder %s14, 1
      %p31 = por %p29, %p30
      %p32 = scmp.ne.s32.totalorder %s24, %s27
      %p33 = scmp.eq.s32.totalorder %s14, 0
      %p34 = por %p32, %p33
      %p35 = scmp.ne.s32.totalorder %s24, %s27
      %p36 = scmp.eq.s32.totalorder %s19, 1
      %p37 = por %p35, %p36
      %p38 = scmp.ne.s32.totalorder %s27, %s28
      %p39 = scmp.eq.s32.totalorder %s19, 0
      %p40 = por %p38, %p39
      %p41 = scmp.ne.s32.totalorder %s27, %s28
      %p42 = scmp.eq.s32.totalorder %s20, 1
      %p43 = por %p41, %p42
      %p45 = scmp.ne.s32.totalorder %s28, %s44
      %p46 = scmp.eq.s32.totalorder %s20, 0
      %p47 = por %p45, %p46
      %s49 = sadd.s32 %s48, 1
      %p52 = scmp.eq.s32.totalorder %s14, 1
      %p53 = scmp.ne.s32.totalorder %s48, %s50
      %p54 = scmp.eq.s32.totalorder %s14, 0
      %p55 = por %p53, %p54
      %p56 = scmp.ne.s32.totalorder %s48, %s50
      %p57 = scmp.eq.s32.totalorder %s19, 1
      %p58 = por %p56, %p57
      %p59 = scmp.ne.s32.totalorder %s50, %s51
      %p60 = scmp.eq.s32.totalorder %s19, 0
      %p61 = por %p59, %p60
      %p62 = scmp.ne.s32.totalorder %s50, %s51
      %p63 = scmp.eq.s32.totalorder %s20, 1
      %p64 = por %p62, %p63
      %p66 = scmp.ne.s32.totalorder %s51, %s65
      %p67 = scmp.eq.s32.totalorder %s20, 0
      %p68 = por %p66, %p67
      %s70 = sadd.s32 %s69, 1
      %p73 = scmp.eq.s32.totalorder %s14, 1
      %p74 = scmp.ne.s32.totalorder %s69, %s71
      %p75 = scmp.eq.s32.totalorder %s14, 0
      %p76 = por %p74, %p75
      %p77 = scmp.ne.s32.totalorder %s69, %s71
      %p78 = scmp.eq.s32.totalorder %s19, 1
      %p79 = por %p77, %p78
      %p80 = scmp.ne.s32.totalorder %s71, %s72
      %p81 = scmp.eq.s32.totalorder %s19, 0
      %p82 = por %p80, %p81
      %p83 = scmp.ne.s32.totalorder %s71, %s72
      %p84 = scmp.eq.s32.totalorder %s20, 1
      %p85 = por %p83, %p84
      %p87 = scmp.ne.s32.totalorder %s72, %s86
      %p88 = scmp.eq.s32.totalorder %s20, 0
      %p89 = por %p87, %p88
      %s91 = sadd.s32 %s90, 1
      %p94 = scmp.eq.s32.totalorder %s14, 1
      %p95 = scmp.ne.s32.totalorder %s90, %s92
      %p96 = scmp.eq.s32.totalorder %s14, 0
      %p97 = por %p95, %p96
      %p98 = scmp.ne.s32.totalorder %s90, %s92
      %p99 = scmp.eq.s32.totalorder %s19, 1
      %p100 = por %p98, %p99
      %p101 = scmp.ne.s32.totalorder %s92, %s93
      %p102 = scmp.eq.s32.totalorder %s19, 0
      %p103 = por %p101, %p102
      %p104 = scmp.ne.s32.totalorder %s92, %s93
      %p105 = scmp.eq.s32.totalorder %s20, 1
      %p106 = por %p104, %p105
      %p108 = scmp.ne.s32.totalorder %s93, %s107
      %p109 = scmp.eq.s32.totalorder %s20, 0
      %p110 = por %p108, %p109
      %s112 = sadd.s32 %s111, 1
      %p115 = scmp.eq.s32.totalorder %s14, 1
      %p116 = scmp.ne.s32.totalorder %s111, %s113
      %p117 = scmp.eq.s32.totalorder %s14, 0
      %p118 = por %p116, %p117
      %p119 = scmp.ne.s32.totalorder %s111, %s113
      %p120 = scmp.eq.s32.totalorder %s19, 1
      %p121 = por %p119, %p120
      %p122 = scmp.ne.s32.totalorder %s113, %s114
      %p123 = scmp.eq.s32.totalorder %s19, 0
      %p124 = por %p122, %p123
      %p125 = scmp.ne.s32.totalorder %s113, %s114
      %p126 = scmp.eq.s32.totalorder %s20, 1
      %p127 = por %p125, %p126
      %p129 = scmp.ne.s32.totalorder %s114, %s128
      %p130 = scmp.eq.s32.totalorder %s20, 0
      %p131 = por %p129, %p130
      %s133 = sadd.s32 %s132, 1
      %p136 = scmp.eq.s32.totalorder %s14, 1
      %p137 = scmp.ne.s32.totalorder %s132, %s134
      %p138 = scmp.eq.s32.totalorder %s14, 0
      %p139 = por %p137, %p138
      %p140 = scmp.ne.s32.totalorder %s132, %s134
      %p141 = scmp.eq.s32.totalorder %s19, 1
      %p142 = por %p140, %p141
      %p143 = scmp.ne.s32.totalorder %s134, %s135
      %p144 = scmp.eq.s32.totalorder %s19, 0
      %p145 = por %p143, %p144
      %p146 = scmp.ne.s32.totalorder %s134, %s135
      %p147 = scmp.eq.s32.totalorder %s20, 1
      %p148 = por %p146, %p147
      %p150 = scmp.ne.s32.totalorder %s135, %s149
      %p151 = scmp.eq.s32.totalorder %s20, 0
      %p152 = por %p150, %p151
      %s154 = sadd.s32 %s153, 1
      %p157 = scmp.eq.s32.totalorder %s14, 1
      %p158 = scmp.ne.s32.totalorder %s153, %s155
      %p159 = scmp.eq.s32.totalorder %s14, 0
      %p160 = por %p158, %p159
      %p161 = scmp.ne.s32.totalorder %s153, %s155
      %p162 = scmp.eq.s32.totalorder %s19, 1
      %p163 = por %p161, %p162
      %p164 = scmp.ne.s32.totalorder %s155, %s156
      %p165 = scmp.eq.s32.totalorder %s19, 0
      %p166 = por %p164, %p165
      %p167 = scmp.ne.s32.totalorder %s155, %s156
      %p168 = scmp.eq.s32.totalorder %s20, 1
      %p169 = por %p167, %p168
      %p171 = scmp.ne.s32.totalorder %s156, %s170
      %p172 = scmp.eq.s32.totalorder %s20, 0
      %p173 = por %p171, %p172
      %s174 = ssub.s32 %s14, %s21
      %p175 = scmp.eq.s32.totalorder %s174, 0
      %s177 = sadd.s32 %s176, 1
      %s178 = scalar_select %p175, %s176, %s177
      %p181 = pneg %p175
      %p182 = scmp.eq.s32.totalorder %s14, 1
      %p183 = por %p181, %p182
      %p184 = scmp.ne.s32.totalorder %s176, %s179
      %p185 = scmp.eq.s32.totalorder %s14, 0
      %p186 = por %p184, %p185
      %p187 = scmp.ne.s32.totalorder %s176, %s179
      %p188 = scmp.eq.s32.totalorder %s19, 1
      %p189 = por %p187, %p188
      %p190 = scmp.ne.s32.totalorder %s179, %s180
      %p191 = scmp.eq.s32.totalorder %s19, 0
      %p192 = por %p190, %p191
      %p193 = scmp.ne.s32.totalorder %s179, %s180
      %p194 = scmp.eq.s32.totalorder %s20, 1
      %p195 = por %p193, %p194
      %p197 = scmp.ne.s32.totalorder %s180, %s196
      %p198 = scmp.eq.s32.totalorder %s20, 0
      %p199 = por %p197, %p198
      %p200 = scmp.le.s32.totalorder 1, %s14
      %p201 = scmp.lt.s32.totalorder %s14, 3
      %p202 = pnand %p200, %p201
      %p203 = pneg %p202
      // Predicated region
      $region9: #{simple_res_mlp.1} parent=5 // pred_check
        _
      $region10: #{simple_res_mlp.1} parent=5 // pred_check_branch
        %205 = sbr.rel (%p202) target = $region12
      $region11: #{simple_res_mlp.1} parent=5 // pred_region
        %s206 = ssub.s32 %s14, 1
        // Predicated region
        $region13: #{simple_res_mlp.1} parent=11 // pred_check
          %p207 = pneg %p61
        $region14: #{simple_res_mlp.1} parent=11 // pred_check_branch
          %209 = sbr.rel (%p207) target = $region16
        $region15: #{simple_res_mlp.1} parent=11 // pred_region
          _
        $region16: #{simple_res_mlp.1} parent=11 // pred_fallthru
          _
        // Predicated region
        $region17: #{simple_res_mlp.1} parent=11 // pred_check
          %p210 = pneg %p82
        $region18: #{simple_res_mlp.1} parent=11 // pred_check_branch
          %212 = sbr.rel (%p210) target = $region20
        $region19: #{simple_res_mlp.1} parent=11 // pred_region
          _
        $region20: #{simple_res_mlp.1} parent=11 // pred_fallthru
          _
        // Predicated region
        $region21: #{simple_res_mlp.1} parent=11 // pred_check
          %p213 = pneg %p103
        $region22: #{simple_res_mlp.1} parent=11 // pred_check_branch
          %215 = sbr.rel (%p213) target = $region24
        $region23: #{simple_res_mlp.1} parent=11 // pred_region
          %217 = vsyncadd [#allocation3], 0
          %s218 = sshll.u32 %s3, 4
          %s219 = int_to_ptr.hbm [resolvable:$true] %s218
          %s220 = sshll.u32 [#allocation2], 4
          %s221 = int_to_ptr.vmem [resolvable:$true] %s220
          %226 = dma.hbm_to_vmem [thread:$0]  %s219, 8192, %s221, [#allocation3], 128, 128, 8
        $region24: #{simple_res_mlp.1} parent=11 // pred_fallthru
          _
        // Predicated region
        $region25: #{simple_res_mlp.1} parent=11 // pred_check
          %p227 = pneg %p124
        $region26: #{simple_res_mlp.1} parent=11 // pred_check_branch
          %229 = sbr.rel (%p227) target = $region28
        $region27: #{simple_res_mlp.1} parent=11 // pred_region
          _
        $region28: #{simple_res_mlp.1} parent=11 // pred_fallthru
          _
        // Predicated region
        $region29: #{simple_res_mlp.1} parent=11 // pred_check
          %p230 = pneg %p145
        $region30: #{simple_res_mlp.1} parent=11 // pred_check_branch
          %232 = sbr.rel (%p230) target = $region32
        $region31: #{simple_res_mlp.1} parent=11 // pred_region
          _
        $region32: #{simple_res_mlp.1} parent=11 // pred_fallthru
          _
        // Predicated region
        $region33: #{simple_res_mlp.1} parent=11 // pred_check
          %p233 = pneg %p166
        $region34: #{simple_res_mlp.1} parent=11 // pred_check_branch
          %235 = sbr.rel (%p233) target = $region36
        $region35: #{simple_res_mlp.1} parent=11 // pred_region
          _
        $region36: #{simple_res_mlp.1} parent=11 // pred_fallthru
          _
      $region12: #{simple_res_mlp.1} parent=5 // pred_fallthru
        _
      %p236 = scmp.lt.s32.totalorder %s14, 2
      // Predicated region
      $region37: #{simple_res_mlp.1} parent=5 // pred_check
        %p237 = pneg %p236
      $region38: #{simple_res_mlp.1} parent=5 // pred_check_branch
        %239 = sbr.rel (%p237) target = $region40
      $region39: #{simple_res_mlp.1} parent=5 // pred_region
        // Predicated region
        $region41: #{simple_res_mlp.1} parent=39 // pred_check
          %p240 = pneg %p34
        $region42: #{simple_res_mlp.1} parent=39 // pred_check_branch
          %242 = sbr.rel (%p240) target = $region44
        $region43: #{simple_res_mlp.1} parent=39 // pred_region
          %s243 = smul.u32 16, %s14
          %s244 = ssub.s32 25, %s243
          %p245 = scmp.lt.s32.totalorder %s244, 16
          %s246 = scalar_select %p245, %s244, 16
          %s247 = smul.u32 8, %s246
          %s248 = smul.u32 %s247, 24
          %p249 = scmp.lt.s32.totalorder %s243, 24
          %s250 = scalar_select %p249, %s243, 24
          %s251 = smul.addr %s250, 24
          %s252 = smul.addr %s251, 8
          %s253 = scalar_lea.vmem %s0, %s252
          %s254 = smul.u32 16, %s14
          %s255 = ssub.s32 25, %s254
          %p256 = scmp.lt.s32.totalorder %s255, 16
          %s257 = scalar_select %p256, %s255, 16
          %s258 = smul.u32 8, %s257
          %s259 = smul.u32 %s258, 24
        $region44: #{simple_res_mlp.1} parent=39 // pred_fallthru
          _
      $region40: #{simple_res_mlp.1} parent=5 // pred_fallthru
        _
      %p260 = scmp.le.s32.totalorder 1, %s14
      %p261 = scmp.lt.s32.totalorder %s14, 3
      %p262 = pnand %p260, %p261
      %p263 = pneg %p262
      // Predicated region
      $region45: #{simple_res_mlp.1} parent=5 // pred_check
        _
      $region46: #{simple_res_mlp.1} parent=5 // pred_check_branch
        %265 = sbr.rel (%p262) target = $region48
      $region47: #{simple_res_mlp.1} parent=5 // pred_region
        %s266 = ssub.s32 %s14, 1
        // Predicated region
        $region49: #{simple_res_mlp.1} parent=47 // pred_check
          %p267 = pneg %p103
        $region50: #{simple_res_mlp.1} parent=47 // pred_check_branch
          %269 = sbr.rel (%p267) target = $region52
        $region51: #{simple_res_mlp.1} parent=47 // pred_region
          %271 = dma.done [#allocation3], 8192
        $region52: #{simple_res_mlp.1} parent=47 // pred_fallthru
          _
        %s272 = smul.u32 16, %s19
        %s273 = ssub.s32 25, %s272
        %p274 = scmp.lt.s32.totalorder %s273, 16
        %s275 = scalar_select %p274, %s273, 16
        %s276 = smul.u32 8, %s275
        %s277 = smul.u32 %s276, 24
        %p278 = scmp.lt.s32.totalorder %s272, 24
        %s279 = scalar_select %p278, %s272, 24
        %s280 = smul.addr %s279, 24
        %s281 = smul.addr %s280, 8
        %s282 = scalar_lea.vmem %s0, %s281
        %p283 = pneg %p40
        %p284 = pneg %p37
        %p285 = pneg %p61
        %p286 = pneg %p58
        %p287 = pneg %p82
        %p288 = pneg %p79
        %p289 = pneg %p103
        %p290 = pneg %p100
        %p291 = pneg %p124
        %p292 = pneg %p121
        %p293 = pneg %p145
        %p294 = pneg %p142
        %p295 = pneg %p166
        %p296 = pneg %p163
        %p297 = pneg %p192
        %p298 = pneg %p189
        %s299 = sand.u32 %s179, 1
        %s300 = sand.u32 %s179, 1
        %s301 = smul.addr %s300, 128
        %s302 = scalar_lea.vmem [#allocation4], %s301
        %s303 = smul.u32 16, %s19
        %s304 = ssub.s32 25, %s303
        %p305 = scmp.lt.s32.totalorder %s304, 16
        %s306 = scalar_select %p305, %s304, 16
        %s307 = smul.u32 8, %s306
        %s308 = smul.u32 %s307, 24
        %p309 = scmp.lt.s32.totalorder %s303, 24
        %s310 = scalar_select %p309, %s303, 24
        %s311 = smul.addr %s310, 24
        %s312 = smul.addr %s311, 8
        %s313 = scalar_lea.vmem %s0, %s312
        %s314 = smul.u32 16, %s19
        %s315 = ssub.s32 25, %s314
        %p316 = scmp.lt.s32.totalorder %s315, 16
        %s317 = scalar_select %p316, %s315, 16
        %s318 = smul.u32 8, %s317
        %s319 = smul.u32 %s318, 24
        %s320 = smul.u32 16, %s19
        %s321 = ssub.s32 25, %s320
        %p322 = scmp.lt.s32.totalorder %s321, 16
        %s323 = scalar_select %p322, %s321, 16
        %s324 = smul.u32 8, %s323
        %v325 = vld [vmem:[%s313] sm:$0xff]
        %v326 = vld [vmem:[%s313 + $0x8] sm:$0xff]
        %v327 = vld [vmem:[%s313 + $0x10] sm:$0xff]
        %v328 = vld [vmem:[%s313 + $0x18] sm:$0xff]
        %v329 = vld [vmem:[%s313 + $0x20] sm:$0xff]
        %v330 = vld [vmem:[%s313 + $0x28] sm:$0xff]
        %v331 = vld [vmem:[%s313 + $0x30] sm:$0xff]
        %v332 = vld [vmem:[%s313 + $0x38] sm:$0xff]
        %v333 = vld [vmem:[%s313 + $0x40] sm:$0xff]
        %v334 = vld [vmem:[%s313 + $0x48] sm:$0xff]
        %v335 = vld [vmem:[%s313 + $0x50] sm:$0xff]
        %v336 = vld [vmem:[%s313 + $0x58] sm:$0xff]
        %v337 = vld [vmem:[%s313 + $0x60] sm:$0xff]
        %v338 = vld [vmem:[%s313 + $0x68] sm:$0xff]
        %v339 = vld [vmem:[%s313 + $0x70] sm:$0xff]
        %v340 = vld [vmem:[%s313 + $0x78] sm:$0xff]
        %v341 = vld [vmem:[%s313 + $0x80] sm:$0xff]
        %v342 = vld [vmem:[%s313 + $0x88] sm:$0xff]
        %v343 = vld [vmem:[%s313 + $0x90] sm:$0xff]
        %v344 = vld [vmem:[%s313 + $0x98] sm:$0xff]
        %v345 = vld [vmem:[%s313 + $0xa0] sm:$0xff]
        %v346 = vld [vmem:[%s313 + $0xa8] sm:$0xff]
        %v347 = vld [vmem:[%s313 + $0xb0] sm:$0xff]
        %v348 = vld [vmem:[%s313 + $0xb8] sm:$0xff]
        %v349 = vld [vmem:[%s313 + $0xc0] sm:$0xff]
        %v350 = vld [vmem:[%s313 + $0xc8] sm:$0xff]
        %v351 = vld [vmem:[%s313 + $0xd0] sm:$0xff]
        %v352 = vld [vmem:[%s313 + $0xd8] sm:$0xff]
        %v353 = vld [vmem:[%s313 + $0xe0] sm:$0xff]
        %v354 = vld [vmem:[%s313 + $0xe8] sm:$0xff]
        %v355 = vld [vmem:[%s313 + $0xf0] sm:$0xff]
        %v356 = vld [vmem:[%s313 + $0xf8] sm:$0xff]
        %v357 = vld [vmem:[%s313 + $0x100] sm:$0xff]
        %v358 = vld [vmem:[%s313 + $0x108] sm:$0xff]
        %v359 = vld [vmem:[%s313 + $0x110] sm:$0xff]
        %v360 = vld [vmem:[%s313 + $0x118] sm:$0xff]
        %v361 = vld [vmem:[%s313 + $0x120] sm:$0xff]
        %v362 = vld [vmem:[%s313 + $0x128] sm:$0xff]
        %v363 = vld [vmem:[%s313 + $0x130] sm:$0xff]
        %v364 = vld [vmem:[%s313 + $0x138] sm:$0xff]
        %v365 = vld [vmem:[%s313 + $0x140] sm:$0xff]
        %v366 = vld [vmem:[%s313 + $0x148] sm:$0xff]
        %v367 = vld [vmem:[%s313 + $0x150] sm:$0xff]
        %v368 = vld [vmem:[%s313 + $0x158] sm:$0xff]
        %v369 = vld [vmem:[%s313 + $0x160] sm:$0xff]
        %v370 = vld [vmem:[%s313 + $0x168] sm:$0xff]
        %v371 = vld [vmem:[%s313 + $0x170] sm:$0xff]
        %v372 = vld [vmem:[%s313 + $0x178] sm:$0xff]
        %v373 = vld [vmem:[%s313 + $0x180] sm:$0xff]
        %v374 = vld [vmem:[%s313 + $0x188] sm:$0xff]
        %v375 = vld [vmem:[%s313 + $0x190] sm:$0xff]
        %v376 = vld [vmem:[%s313 + $0x198] sm:$0xff]
        %v377 = vld [vmem:[%s313 + $0x1a0] sm:$0xff]
        %v378 = vld [vmem:[%s313 + $0x1a8] sm:$0xff]
        %v379 = vld [vmem:[%s313 + $0x1b0] sm:$0xff]
        %v380 = vld [vmem:[%s313 + $0x1b8] sm:$0xff]
        %v381 = vld [vmem:[%s313 + $0x1c0] sm:$0xff]
        %v382 = vld [vmem:[%s313 + $0x1c8] sm:$0xff]
        %v383 = vld [vmem:[%s313 + $0x1d0] sm:$0xff]
        %v384 = vld [vmem:[%s313 + $0x1d8] sm:$0xff]
        %v385 = vld [vmem:[%s313 + $0x1e0] sm:$0xff]
        %v386 = vld [vmem:[%s313 + $0x1e8] sm:$0xff]
        %v387 = vld [vmem:[%s313 + $0x1f0] sm:$0xff]
        %v388 = vld [vmem:[%s313 + $0x1f8] sm:$0xff]
        %v389 = vld [vmem:[%s313 + $0x200] sm:$0xff]
        %v390 = vld [vmem:[%s313 + $0x208] sm:$0xff]
        %v391 = vld [vmem:[%s313 + $0x210] sm:$0xff]
        %v392 = vld [vmem:[%s313 + $0x218] sm:$0xff]
        %v393 = vld [vmem:[%s313 + $0x220] sm:$0xff]
        %v394 = vld [vmem:[%s313 + $0x228] sm:$0xff]
        %v395 = vld [vmem:[%s313 + $0x230] sm:$0xff]
        %v396 = vld [vmem:[%s313 + $0x238] sm:$0xff]
        %v397 = vld [vmem:[%s313 + $0x240] sm:$0xff]
        %v398 = vld [vmem:[%s313 + $0x248] sm:$0xff]
        %v399 = vld [vmem:[%s313 + $0x250] sm:$0xff]
        %v400 = vld [vmem:[%s313 + $0x258] sm:$0xff]
        %v401 = vld [vmem:[%s313 + $0x260] sm:$0xff]
        %v402 = vld [vmem:[%s313 + $0x268] sm:$0xff]
        %v403 = vld [vmem:[%s313 + $0x270] sm:$0xff]
        %v404 = vld [vmem:[%s313 + $0x278] sm:$0xff]
        %v405 = vld [vmem:[%s313 + $0x280] sm:$0xff]
        %v406 = vld [vmem:[%s313 + $0x288] sm:$0xff]
        %v407 = vld [vmem:[%s313 + $0x290] sm:$0xff]
        %v408 = vld [vmem:[%s313 + $0x298] sm:$0xff]
        %v409 = vld [vmem:[%s313 + $0x2a0] sm:$0xff]
        %v410 = vld [vmem:[%s313 + $0x2a8] sm:$0xff]
        %v411 = vld [vmem:[%s313 + $0x2b0] sm:$0xff]
        %v412 = vld [vmem:[%s313 + $0x2b8] sm:$0xff]
        %v413 = vld [vmem:[%s313 + $0x2c0] sm:$0xff]
        %v414 = vld [vmem:[%s313 + $0x2c8] sm:$0xff]
        %v415 = vld [vmem:[%s313 + $0x2d0] sm:$0xff]
        %v416 = vld [vmem:[%s313 + $0x2d8] sm:$0xff]
        %v417 = vld [vmem:[%s313 + $0x2e0] sm:$0xff]
        %v418 = vld [vmem:[%s313 + $0x2e8] sm:$0xff]
        %v419 = vld [vmem:[%s313 + $0x2f0] sm:$0xff]
        %v420 = vld [vmem:[%s313 + $0x2f8] sm:$0xff]
        %v421 = vld [vmem:[%s313 + $0x300] sm:$0xff]
        %v422 = vld [vmem:[%s313 + $0x308] sm:$0xff]
        %v423 = vld [vmem:[%s313 + $0x310] sm:$0xff]
        %v424 = vld [vmem:[%s313 + $0x318] sm:$0xff]
        %v425 = vld [vmem:[%s313 + $0x320] sm:$0xff]
        %v426 = vld [vmem:[%s313 + $0x328] sm:$0xff]
        %v427 = vld [vmem:[%s313 + $0x330] sm:$0xff]
        %v428 = vld [vmem:[%s313 + $0x338] sm:$0xff]
        %v429 = vld [vmem:[%s313 + $0x340] sm:$0xff]
        %v430 = vld [vmem:[%s313 + $0x348] sm:$0xff]
        %v431 = vld [vmem:[%s313 + $0x350] sm:$0xff]
        %v432 = vld [vmem:[%s313 + $0x358] sm:$0xff]
        %v433 = vld [vmem:[%s313 + $0x360] sm:$0xff]
        %v434 = vld [vmem:[%s313 + $0x368] sm:$0xff]
        %v435 = vld [vmem:[%s313 + $0x370] sm:$0xff]
        %v436 = vld [vmem:[%s313 + $0x378] sm:$0xff]
        %v437 = vld [vmem:[%s313 + $0x380] sm:$0xff]
        %v438 = vld [vmem:[%s313 + $0x388] sm:$0xff]
        %v439 = vld [vmem:[%s313 + $0x390] sm:$0xff]
        %v440 = vld [vmem:[%s313 + $0x398] sm:$0xff]
        %v441 = vld [vmem:[%s313 + $0x3a0] sm:$0xff]
        %v442 = vld [vmem:[%s313 + $0x3a8] sm:$0xff]
        %v443 = vld [vmem:[%s313 + $0x3b0] sm:$0xff]
        %v444 = vld [vmem:[%s313 + $0x3b8] sm:$0xff]
        %v445 = vld [vmem:[%s313 + $0x3c0] sm:$0xff]
        %v446 = vld [vmem:[%s313 + $0x3c8] sm:$0xff]
        %v447 = vld [vmem:[%s313 + $0x3d0] sm:$0xff]
        %v448 = vld [vmem:[%s313 + $0x3d8] sm:$0xff]
        %v449 = vld [vmem:[%s313 + $0x3e0] sm:$0xff]
        %v450 = vld [vmem:[%s313 + $0x3e8] sm:$0xff]
        %v451 = vld [vmem:[%s313 + $0x3f0] sm:$0xff]
        %v452 = vld [vmem:[%s313 + $0x3f8] sm:$0xff]
        %v453 = vld [vmem:[%s313 + $0x400] sm:$0xff]
        %v454 = vld [vmem:[%s313 + $0x408] sm:$0xff]
        %v455 = vld [vmem:[%s313 + $0x410] sm:$0xff]
        %v456 = vld [vmem:[%s313 + $0x418] sm:$0xff]
        %v457 = vld [vmem:[%s313 + $0x420] sm:$0xff]
        %v458 = vld [vmem:[%s313 + $0x428] sm:$0xff]
        %v459 = vld [vmem:[%s313 + $0x430] sm:$0xff]
        %v460 = vld [vmem:[%s313 + $0x438] sm:$0xff]
        %v461 = vld [vmem:[%s313 + $0x440] sm:$0xff]
        %v462 = vld [vmem:[%s313 + $0x448] sm:$0xff]
        %v463 = vld [vmem:[%s313 + $0x450] sm:$0xff]
        %v464 = vld [vmem:[%s313 + $0x458] sm:$0xff]
        %v465 = vld [vmem:[%s313 + $0x460] sm:$0xff]
        %v466 = vld [vmem:[%s313 + $0x468] sm:$0xff]
        %v467 = vld [vmem:[%s313 + $0x470] sm:$0xff]
        %v468 = vld [vmem:[%s313 + $0x478] sm:$0xff]
        %v469 = vld [vmem:[%s313 + $0x480] sm:$0xff]
        %v470 = vld [vmem:[%s313 + $0x488] sm:$0xff]
        %v471 = vld [vmem:[%s313 + $0x490] sm:$0xff]
        %v472 = vld [vmem:[%s313 + $0x498] sm:$0xff]
        %v473 = vld [vmem:[%s313 + $0x4a0] sm:$0xff]
        %v474 = vld [vmem:[%s313 + $0x4a8] sm:$0xff]
        %v475 = vld [vmem:[%s313 + $0x4b0] sm:$0xff]
        %v476 = vld [vmem:[%s313 + $0x4b8] sm:$0xff]
        %v477 = vld [vmem:[%s313 + $0x4c0] sm:$0xff]
        %v478 = vld [vmem:[%s313 + $0x4c8] sm:$0xff]
        %v479 = vld [vmem:[%s313 + $0x4d0] sm:$0xff]
        %v480 = vld [vmem:[%s313 + $0x4d8] sm:$0xff]
        %v481 = vld [vmem:[%s313 + $0x4e0] sm:$0xff]
        %v482 = vld [vmem:[%s313 + $0x4e8] sm:$0xff]
        %v483 = vld [vmem:[%s313 + $0x4f0] sm:$0xff]
        %v484 = vld [vmem:[%s313 + $0x4f8] sm:$0xff]
        %v485 = vld [vmem:[%s313 + $0x500] sm:$0xff]
        %v486 = vld [vmem:[%s313 + $0x508] sm:$0xff]
        %v487 = vld [vmem:[%s313 + $0x510] sm:$0xff]
        %v488 = vld [vmem:[%s313 + $0x518] sm:$0xff]
        %v489 = vld [vmem:[%s313 + $0x520] sm:$0xff]
        %v490 = vld [vmem:[%s313 + $0x528] sm:$0xff]
        %v491 = vld [vmem:[%s313 + $0x530] sm:$0xff]
        %v492 = vld [vmem:[%s313 + $0x538] sm:$0xff]
        %v493 = vld [vmem:[%s313 + $0x540] sm:$0xff]
        %v494 = vld [vmem:[%s313 + $0x548] sm:$0xff]
        %v495 = vld [vmem:[%s313 + $0x550] sm:$0xff]
        %v496 = vld [vmem:[%s313 + $0x558] sm:$0xff]
        %v497 = vld [vmem:[%s313 + $0x560] sm:$0xff]
        %v498 = vld [vmem:[%s313 + $0x568] sm:$0xff]
        %v499 = vld [vmem:[%s313 + $0x570] sm:$0xff]
        %v500 = vld [vmem:[%s313 + $0x578] sm:$0xff]
        %v501 = vld [vmem:[%s313 + $0x580] sm:$0xff]
        %v502 = vld [vmem:[%s313 + $0x588] sm:$0xff]
        %v503 = vld [vmem:[%s313 + $0x590] sm:$0xff]
        %v504 = vld [vmem:[%s313 + $0x598] sm:$0xff]
        %v505 = vld [vmem:[%s313 + $0x5a0] sm:$0xff]
        %v506 = vld [vmem:[%s313 + $0x5a8] sm:$0xff]
        %v507 = vld [vmem:[%s313 + $0x5b0] sm:$0xff]
        %v508 = vld [vmem:[%s313 + $0x5b8] sm:$0xff]
        %v509 = vld [vmem:[%s313 + $0x5c0] sm:$0xff]
        %v510 = vld [vmem:[%s313 + $0x5c8] sm:$0xff]
        %v511 = vld [vmem:[%s313 + $0x5d0] sm:$0xff]
        %v512 = vld [vmem:[%s313 + $0x5d8] sm:$0xff]
        %v513 = vld [vmem:[%s313 + $0x5e0] sm:$0xff]
        %v514 = vld [vmem:[%s313 + $0x5e8] sm:$0xff]
        %v515 = vld [vmem:[%s313 + $0x5f0] sm:$0xff]
        %v516 = vld [vmem:[%s313 + $0x5f8] sm:$0xff]
        %v517 = vld [vmem:[%s313 + $0x600] sm:$0xff]
        %v518 = vld [vmem:[%s313 + $0x608] sm:$0xff]
        %v519 = vld [vmem:[%s313 + $0x610] sm:$0xff]
        %v520 = vld [vmem:[%s313 + $0x618] sm:$0xff]
        %v521 = vld [vmem:[%s313 + $0x620] sm:$0xff]
        %v522 = vld [vmem:[%s313 + $0x628] sm:$0xff]
        %v523 = vld [vmem:[%s313 + $0x630] sm:$0xff]
        %v524 = vld [vmem:[%s313 + $0x638] sm:$0xff]
        %v525 = vld [vmem:[%s313 + $0x640] sm:$0xff]
        %v526 = vld [vmem:[%s313 + $0x648] sm:$0xff]
        %v527 = vld [vmem:[%s313 + $0x650] sm:$0xff]
        %v528 = vld [vmem:[%s313 + $0x658] sm:$0xff]
        %v529 = vld [vmem:[%s313 + $0x660] sm:$0xff]
        %v530 = vld [vmem:[%s313 + $0x668] sm:$0xff]
        %v531 = vld [vmem:[%s313 + $0x670] sm:$0xff]
        %v532 = vld [vmem:[%s313 + $0x678] sm:$0xff]
        %v533 = vld [vmem:[%s313 + $0x680] sm:$0xff]
        %v534 = vld [vmem:[%s313 + $0x688] sm:$0xff]
        %v535 = vld [vmem:[%s313 + $0x690] sm:$0xff]
        %v536 = vld [vmem:[%s313 + $0x698] sm:$0xff]
        %v537 = vld [vmem:[%s313 + $0x6a0] sm:$0xff]
        %v538 = vld [vmem:[%s313 + $0x6a8] sm:$0xff]
        %v539 = vld [vmem:[%s313 + $0x6b0] sm:$0xff]
        %v540 = vld [vmem:[%s313 + $0x6b8] sm:$0xff]
        %v541 = vld [vmem:[%s313 + $0x6c0] sm:$0xff]
        %v542 = vld [vmem:[%s313 + $0x6c8] sm:$0xff]
        %v543 = vld [vmem:[%s313 + $0x6d0] sm:$0xff]
        %v544 = vld [vmem:[%s313 + $0x6d8] sm:$0xff]
        %v545 = vld [vmem:[%s313 + $0x6e0] sm:$0xff]
        %v546 = vld [vmem:[%s313 + $0x6e8] sm:$0xff]
        %v547 = vld [vmem:[%s313 + $0x6f0] sm:$0xff]
        %v548 = vld [vmem:[%s313 + $0x6f8] sm:$0xff]
        %v549 = vld [vmem:[%s313 + $0x700] sm:$0xff]
        %v550 = vld [vmem:[%s313 + $0x708] sm:$0xff]
        %v551 = vld [vmem:[%s313 + $0x710] sm:$0xff]
        %v552 = vld [vmem:[%s313 + $0x718] sm:$0xff]
        %v553 = vld [vmem:[%s313 + $0x720] sm:$0xff]
        %v554 = vld [vmem:[%s313 + $0x728] sm:$0xff]
        %v555 = vld [vmem:[%s313 + $0x730] sm:$0xff]
        %v556 = vld [vmem:[%s313 + $0x738] sm:$0xff]
        %v557 = vld [vmem:[%s313 + $0x740] sm:$0xff]
        %v558 = vld [vmem:[%s313 + $0x748] sm:$0xff]
        %v559 = vld [vmem:[%s313 + $0x750] sm:$0xff]
        %v560 = vld [vmem:[%s313 + $0x758] sm:$0xff]
        %v561 = vld [vmem:[%s313 + $0x760] sm:$0xff]
        %v562 = vld [vmem:[%s313 + $0x768] sm:$0xff]
        %v563 = vld [vmem:[%s313 + $0x770] sm:$0xff]
        %v564 = vld [vmem:[%s313 + $0x778] sm:$0xff]
        %v565 = vld [vmem:[%s313 + $0x780] sm:$0xff]
        %v566 = vld [vmem:[%s313 + $0x788] sm:$0xff]
        %v567 = vld [vmem:[%s313 + $0x790] sm:$0xff]
        %v568 = vld [vmem:[%s313 + $0x798] sm:$0xff]
        %v569 = vld [vmem:[%s313 + $0x7a0] sm:$0xff]
        %v570 = vld [vmem:[%s313 + $0x7a8] sm:$0xff]
        %v571 = vld [vmem:[%s313 + $0x7b0] sm:$0xff]
        %v572 = vld [vmem:[%s313 + $0x7b8] sm:$0xff]
        %v573 = vld [vmem:[%s313 + $0x7c0] sm:$0xff]
        %v574 = vld [vmem:[%s313 + $0x7c8] sm:$0xff]
        %v575 = vld [vmem:[%s313 + $0x7d0] sm:$0xff]
        %v576 = vld [vmem:[%s313 + $0x7d8] sm:$0xff]
        %v577 = vld [vmem:[%s313 + $0x7e0] sm:$0xff]
        %v578 = vld [vmem:[%s313 + $0x7e8] sm:$0xff]
        %v579 = vld [vmem:[%s313 + $0x7f0] sm:$0xff]
        %v580 = vld [vmem:[%s313 + $0x7f8] sm:$0xff]
        %v581 = vld [vmem:[%s313 + $0x800] sm:$0xff]
        %v582 = vld [vmem:[%s313 + $0x808] sm:$0xff]
        %v583 = vld [vmem:[%s313 + $0x810] sm:$0xff]
        %v584 = vld [vmem:[%s313 + $0x818] sm:$0xff]
        %v585 = vld [vmem:[%s313 + $0x820] sm:$0xff]
        %v586 = vld [vmem:[%s313 + $0x828] sm:$0xff]
        %v587 = vld [vmem:[%s313 + $0x830] sm:$0xff]
        %v588 = vld [vmem:[%s313 + $0x838] sm:$0xff]
        %v589 = vld [vmem:[%s313 + $0x840] sm:$0xff]
        %v590 = vld [vmem:[%s313 + $0x848] sm:$0xff]
        %v591 = vld [vmem:[%s313 + $0x850] sm:$0xff]
        %v592 = vld [vmem:[%s313 + $0x858] sm:$0xff]
        %v593 = vld [vmem:[%s313 + $0x860] sm:$0xff]
        %v594 = vld [vmem:[%s313 + $0x868] sm:$0xff]
        %v595 = vld [vmem:[%s313 + $0x870] sm:$0xff]
        %v596 = vld [vmem:[%s313 + $0x878] sm:$0xff]
        %v597 = vld [vmem:[%s313 + $0x880] sm:$0xff]
        %v598 = vld [vmem:[%s313 + $0x888] sm:$0xff]
        %v599 = vld [vmem:[%s313 + $0x890] sm:$0xff]
        %v600 = vld [vmem:[%s313 + $0x898] sm:$0xff]
        %v601 = vld [vmem:[%s313 + $0x8a0] sm:$0xff]
        %v602 = vld [vmem:[%s313 + $0x8a8] sm:$0xff]
        %v603 = vld [vmem:[%s313 + $0x8b0] sm:$0xff]
        %v604 = vld [vmem:[%s313 + $0x8b8] sm:$0xff]
        %v605 = vld [vmem:[%s313 + $0x8c0] sm:$0xff]
        %v606 = vld [vmem:[%s313 + $0x8c8] sm:$0xff]
        %v607 = vld [vmem:[%s313 + $0x8d0] sm:$0xff]
        %v608 = vld [vmem:[%s313 + $0x8d8] sm:$0xff]
        %v609 = vld [vmem:[%s313 + $0x8e0] sm:$0xff]
        %v610 = vld [vmem:[%s313 + $0x8e8] sm:$0xff]
        %v611 = vld [vmem:[%s313 + $0x8f0] sm:$0xff]
        %v612 = vld [vmem:[%s313 + $0x8f8] sm:$0xff]
        %v613 = vld [vmem:[%s313 + $0x900] sm:$0xff]
        %v614 = vld [vmem:[%s313 + $0x908] sm:$0xff]
        %v615 = vld [vmem:[%s313 + $0x910] sm:$0xff]
        %v616 = vld [vmem:[%s313 + $0x918] sm:$0xff]
        %v617 = vld [vmem:[%s313 + $0x920] sm:$0xff]
        %v618 = vld [vmem:[%s313 + $0x928] sm:$0xff]
        %v619 = vld [vmem:[%s313 + $0x930] sm:$0xff]
        %v620 = vld [vmem:[%s313 + $0x938] sm:$0xff]
        %v621 = vld [vmem:[%s313 + $0x940] sm:$0xff]
        %v622 = vld [vmem:[%s313 + $0x948] sm:$0xff]
        %v623 = vld [vmem:[%s313 + $0x950] sm:$0xff]
        %v624 = vld [vmem:[%s313 + $0x958] sm:$0xff]
        %v625 = vld [vmem:[%s313 + $0x960] sm:$0xff]
        %v626 = vld [vmem:[%s313 + $0x968] sm:$0xff]
        %v627 = vld [vmem:[%s313 + $0x970] sm:$0xff]
        %v628 = vld [vmem:[%s313 + $0x978] sm:$0xff]
        %v629 = vld [vmem:[%s313 + $0x980] sm:$0xff]
        %v630 = vld [vmem:[%s313 + $0x988] sm:$0xff]
        %v631 = vld [vmem:[%s313 + $0x990] sm:$0xff]
        %v632 = vld [vmem:[%s313 + $0x998] sm:$0xff]
        %v633 = vld [vmem:[%s313 + $0x9a0] sm:$0xff]
        %v634 = vld [vmem:[%s313 + $0x9a8] sm:$0xff]
        %v635 = vld [vmem:[%s313 + $0x9b0] sm:$0xff]
        %v636 = vld [vmem:[%s313 + $0x9b8] sm:$0xff]
        %v637 = vld [vmem:[%s313 + $0x9c0] sm:$0xff]
        %v638 = vld [vmem:[%s313 + $0x9c8] sm:$0xff]
        %v639 = vld [vmem:[%s313 + $0x9d0] sm:$0xff]
        %v640 = vld [vmem:[%s313 + $0x9d8] sm:$0xff]
        %v641 = vld [vmem:[%s313 + $0x9e0] sm:$0xff]
        %v642 = vld [vmem:[%s313 + $0x9e8] sm:$0xff]
        %v643 = vld [vmem:[%s313 + $0x9f0] sm:$0xff]
        %v644 = vld [vmem:[%s313 + $0x9f8] sm:$0xff]
        %v645 = vld [vmem:[%s313 + $0xa00] sm:$0xff]
        %v646 = vld [vmem:[%s313 + $0xa08] sm:$0xff]
        %v647 = vld [vmem:[%s313 + $0xa10] sm:$0xff]
        %v648 = vld [vmem:[%s313 + $0xa18] sm:$0xff]
        %v649 = vld [vmem:[%s313 + $0xa20] sm:$0xff]
        %v650 = vld [vmem:[%s313 + $0xa28] sm:$0xff]
        %v651 = vld [vmem:[%s313 + $0xa30] sm:$0xff]
        %v652 = vld [vmem:[%s313 + $0xa38] sm:$0xff]
        %v653 = vld [vmem:[%s313 + $0xa40] sm:$0xff]
        %v654 = vld [vmem:[%s313 + $0xa48] sm:$0xff]
        %v655 = vld [vmem:[%s313 + $0xa50] sm:$0xff]
        %v656 = vld [vmem:[%s313 + $0xa58] sm:$0xff]
        %v657 = vld [vmem:[%s313 + $0xa60] sm:$0xff]
        %v658 = vld [vmem:[%s313 + $0xa68] sm:$0xff]
        %v659 = vld [vmem:[%s313 + $0xa70] sm:$0xff]
        %v660 = vld [vmem:[%s313 + $0xa78] sm:$0xff]
        %v661 = vld [vmem:[%s313 + $0xa80] sm:$0xff]
        %v662 = vld [vmem:[%s313 + $0xa88] sm:$0xff]
        %v663 = vld [vmem:[%s313 + $0xa90] sm:$0xff]
        %v664 = vld [vmem:[%s313 + $0xa98] sm:$0xff]
        %v665 = vld [vmem:[%s313 + $0xaa0] sm:$0xff]
        %v666 = vld [vmem:[%s313 + $0xaa8] sm:$0xff]
        %v667 = vld [vmem:[%s313 + $0xab0] sm:$0xff]
        %v668 = vld [vmem:[%s313 + $0xab8] sm:$0xff]
        %v669 = vld [vmem:[%s313 + $0xac0] sm:$0xff]
        %v670 = vld [vmem:[%s313 + $0xac8] sm:$0xff]
        %v671 = vld [vmem:[%s313 + $0xad0] sm:$0xff]
        %v672 = vld [vmem:[%s313 + $0xad8] sm:$0xff]
        %v673 = vld [vmem:[%s313 + $0xae0] sm:$0xff]
        %v674 = vld [vmem:[%s313 + $0xae8] sm:$0xff]
        %v675 = vld [vmem:[%s313 + $0xaf0] sm:$0xff]
        %v676 = vld [vmem:[%s313 + $0xaf8] sm:$0xff]
        %v677 = vld [vmem:[%s313 + $0xb00] sm:$0xff]
        %v678 = vld [vmem:[%s313 + $0xb08] sm:$0xff]
        %v679 = vld [vmem:[%s313 + $0xb10] sm:$0xff]
        %v680 = vld [vmem:[%s313 + $0xb18] sm:$0xff]
        %v681 = vld [vmem:[%s313 + $0xb20] sm:$0xff]
        %v682 = vld [vmem:[%s313 + $0xb28] sm:$0xff]
        %v683 = vld [vmem:[%s313 + $0xb30] sm:$0xff]
        %v684 = vld [vmem:[%s313 + $0xb38] sm:$0xff]
        %v685 = vld [vmem:[%s313 + $0xb40] sm:$0xff]
        %v686 = vld [vmem:[%s313 + $0xb48] sm:$0xff]
        %v687 = vld [vmem:[%s313 + $0xb50] sm:$0xff]
        %v688 = vld [vmem:[%s313 + $0xb58] sm:$0xff]
        %v689 = vld [vmem:[%s313 + $0xb60] sm:$0xff]
        %v690 = vld [vmem:[%s313 + $0xb68] sm:$0xff]
        %v691 = vld [vmem:[%s313 + $0xb70] sm:$0xff]
        %v692 = vld [vmem:[%s313 + $0xb78] sm:$0xff]
        %v693 = vld [vmem:[%s313 + $0xb80] sm:$0xff]
        %v694 = vld [vmem:[%s313 + $0xb88] sm:$0xff]
        %v695 = vld [vmem:[%s313 + $0xb90] sm:$0xff]
        %v696 = vld [vmem:[%s313 + $0xb98] sm:$0xff]
        %v697 = vld [vmem:[%s313 + $0xba0] sm:$0xff]
        %v698 = vld [vmem:[%s313 + $0xba8] sm:$0xff]
        %v699 = vld [vmem:[%s313 + $0xbb0] sm:$0xff]
        %v700 = vld [vmem:[%s313 + $0xbb8] sm:$0xff]
        %v701 = vld [vmem:[%s313 + $0xbc0] sm:$0xff]
        %v702 = vld [vmem:[%s313 + $0xbc8] sm:$0xff]
        %v703 = vld [vmem:[%s313 + $0xbd0] sm:$0xff]
        %v704 = vld [vmem:[%s313 + $0xbd8] sm:$0xff]
        %v705 = vld [vmem:[%s313 + $0xbe0] sm:$0xff]
        %v706 = vld [vmem:[%s313 + $0xbe8] sm:$0xff]
        %v707 = vld [vmem:[%s313 + $0xbf0] sm:$0xff]
        %v708 = vld [vmem:[%s313 + $0xbf8] sm:$0xff]
        %v709 = vpack.c.bf16 %v349, %v325
        %v710 = vpack.c.bf16 %v350, %v326
        %v711 = vpack.c.bf16 %v351, %v327
        %v712 = vpack.c.bf16 %v352, %v328
        %v713 = vpack.c.bf16 %v353, %v329
        %v714 = vpack.c.bf16 %v354, %v330
        %v715 = vpack.c.bf16 %v355, %v331
        %v716 = vpack.c.bf16 %v356, %v332
        %v717 = vpack.c.bf16 %v357, %v333
        %v718 = vpack.c.bf16 %v358, %v334
        %v719 = vpack.c.bf16 %v359, %v335
        %v720 = vpack.c.bf16 %v360, %v336
        %v721 = vpack.c.bf16 %v361, %v337
        %v722 = vpack.c.bf16 %v362, %v338
        %v723 = vpack.c.bf16 %v363, %v339
        %v724 = vpack.c.bf16 %v364, %v340
        %v725 = vpack.c.bf16 %v365, %v341
        %v726 = vpack.c.bf16 %v366, %v342
        %v727 = vpack.c.bf16 %v367, %v343
        %v728 = vpack.c.bf16 %v368, %v344
        %v729 = vpack.c.bf16 %v369, %v345
        %v730 = vpack.c.bf16 %v370, %v346
        %v731 = vpack.c.bf16 %v371, %v347
        %v732 = vpack.c.bf16 %v372, %v348
        %v733 = vpack.c.bf16 %v397, %v373
        %v734 = vpack.c.bf16 %v398, %v374
        %v735 = vpack.c.bf16 %v399, %v375
        %v736 = vpack.c.bf16 %v400, %v376
        %v737 = vpack.c.bf16 %v401, %v377
        %v738 = vpack.c.bf16 %v402, %v378
        %v739 = vpack.c.bf16 %v403, %v379
        %v740 = vpack.c.bf16 %v404, %v380
        %v741 = vpack.c.bf16 %v405, %v381
        %v742 = vpack.c.bf16 %v406, %v382
        %v743 = vpack.c.bf16 %v407, %v383
        %v744 = vpack.c.bf16 %v408, %v384
        %v745 = vpack.c.bf16 %v409, %v385
        %v746 = vpack.c.bf16 %v410, %v386
        %v747 = vpack.c.bf16 %v411, %v387
        %v748 = vpack.c.bf16 %v412, %v388
        %v749 = vpack.c.bf16 %v413, %v389
        %v750 = vpack.c.bf16 %v414, %v390
        %v751 = vpack.c.bf16 %v415, %v391
        %v752 = vpack.c.bf16 %v416, %v392
        %v753 = vpack.c.bf16 %v417, %v393
        %v754 = vpack.c.bf16 %v418, %v394
        %v755 = vpack.c.bf16 %v419, %v395
        %v756 = vpack.c.bf16 %v420, %v396
        %v757 = vpack.c.bf16 %v445, %v421
        %v758 = vpack.c.bf16 %v446, %v422
        %v759 = vpack.c.bf16 %v447, %v423
        %v760 = vpack.c.bf16 %v448, %v424
        %v761 = vpack.c.bf16 %v449, %v425
        %v762 = vpack.c.bf16 %v450, %v426
        %v763 = vpack.c.bf16 %v451, %v427
        %v764 = vpack.c.bf16 %v452, %v428
        %v765 = vpack.c.bf16 %v453, %v429
        %v766 = vpack.c.bf16 %v454, %v430
        %v767 = vpack.c.bf16 %v455, %v431
        %v768 = vpack.c.bf16 %v456, %v432
        %v769 = vpack.c.bf16 %v457, %v433
        %v770 = vpack.c.bf16 %v458, %v434
        %v771 = vpack.c.bf16 %v459, %v435
        %v772 = vpack.c.bf16 %v460, %v436
        %v773 = vpack.c.bf16 %v461, %v437
        %v774 = vpack.c.bf16 %v462, %v438
        %v775 = vpack.c.bf16 %v463, %v439
        %v776 = vpack.c.bf16 %v464, %v440
        %v777 = vpack.c.bf16 %v465, %v441
        %v778 = vpack.c.bf16 %v466, %v442
        %v779 = vpack.c.bf16 %v467, %v443
        %v780 = vpack.c.bf16 %v468, %v444
        %v781 = vpack.c.bf16 %v493, %v469
        %v782 = vpack.c.bf16 %v494, %v470
        %v783 = vpack.c.bf16 %v495, %v471
        %v784 = vpack.c.bf16 %v496, %v472
        %v785 = vpack.c.bf16 %v497, %v473
        %v786 = vpack.c.bf16 %v498, %v474
        %v787 = vpack.c.bf16 %v499, %v475
        %v788 = vpack.c.bf16 %v500, %v476
        %v789 = vpack.c.bf16 %v501, %v477
        %v790 = vpack.c.bf16 %v502, %v478
        %v791 = vpack.c.bf16 %v503, %v479
        %v792 = vpack.c.bf16 %v504, %v480
        %v793 = vpack.c.bf16 %v505, %v481
        %v794 = vpack.c.bf16 %v506, %v482
        %v795 = vpack.c.bf16 %v507, %v483
        %v796 = vpack.c.bf16 %v508, %v484
        %v797 = vpack.c.bf16 %v509, %v485
        %v798 = vpack.c.bf16 %v510, %v486
        %v799 = vpack.c.bf16 %v511, %v487
        %v800 = vpack.c.bf16 %v512, %v488
        %v801 = vpack.c.bf16 %v513, %v489
        %v802 = vpack.c.bf16 %v514, %v490
        %v803 = vpack.c.bf16 %v515, %v491
        %v804 = vpack.c.bf16 %v516, %v492
        %v805 = vpack.c.bf16 %v541, %v517
        %v806 = vpack.c.bf16 %v542, %v518
        %v807 = vpack.c.bf16 %v543, %v519
        %v808 = vpack.c.bf16 %v544, %v520
        %v809 = vpack.c.bf16 %v545, %v521
        %v810 = vpack.c.bf16 %v546, %v522
        %v811 = vpack.c.bf16 %v547, %v523
        %v812 = vpack.c.bf16 %v548, %v524
        %v813 = vpack.c.bf16 %v549, %v525
        %v814 = vpack.c.bf16 %v550, %v526
        %v815 = vpack.c.bf16 %v551, %v527
        %v816 = vpack.c.bf16 %v552, %v528
        %v817 = vpack.c.bf16 %v553, %v529
        %v818 = vpack.c.bf16 %v554, %v530
        %v819 = vpack.c.bf16 %v555, %v531
        %v820 = vpack.c.bf16 %v556, %v532
        %v821 = vpack.c.bf16 %v557, %v533
        %v822 = vpack.c.bf16 %v558, %v534
        %v823 = vpack.c.bf16 %v559, %v535
        %v824 = vpack.c.bf16 %v560, %v536
        %v825 = vpack.c.bf16 %v561, %v537
        %v826 = vpack.c.bf16 %v562, %v538
        %v827 = vpack.c.bf16 %v563, %v539
        %v828 = vpack.c.bf16 %v564, %v540
        %v829 = vpack.c.bf16 %v589, %v565
        %v830 = vpack.c.bf16 %v590, %v566
        %v831 = vpack.c.bf16 %v591, %v567
        %v832 = vpack.c.bf16 %v592, %v568
        %v833 = vpack.c.bf16 %v593, %v569
        %v834 = vpack.c.bf16 %v594, %v570
        %v835 = vpack.c.bf16 %v595, %v571
        %v836 = vpack.c.bf16 %v596, %v572
        %v837 = vpack.c.bf16 %v597, %v573
        %v838 = vpack.c.bf16 %v598, %v574
        %v839 = vpack.c.bf16 %v599, %v575
        %v840 = vpack.c.bf16 %v600, %v576
        %v841 = vpack.c.bf16 %v601, %v577
        %v842 = vpack.c.bf16 %v602, %v578
        %v843 = vpack.c.bf16 %v603, %v579
        %v844 = vpack.c.bf16 %v604, %v580
        %v845 = vpack.c.bf16 %v605, %v581
        %v846 = vpack.c.bf16 %v606, %v582
        %v847 = vpack.c.bf16 %v607, %v583
        %v848 = vpack.c.bf16 %v608, %v584
        %v849 = vpack.c.bf16 %v609, %v585
        %v850 = vpack.c.bf16 %v610, %v586
        %v851 = vpack.c.bf16 %v611, %v587
        %v852 = vpack.c.bf16 %v612, %v588
        %v853 = vpack.c.bf16 %v637, %v613
        %v854 = vpack.c.bf16 %v638, %v614
        %v855 = vpack.c.bf16 %v639, %v615
        %v856 = vpack.c.bf16 %v640, %v616
        %v857 = vpack.c.bf16 %v641, %v617
        %v858 = vpack.c.bf16 %v642, %v618
        %v859 = vpack.c.bf16 %v643, %v619
        %v860 = vpack.c.bf16 %v644, %v620
        %v861 = vpack.c.bf16 %v645, %v621
        %v862 = vpack.c.bf16 %v646, %v622
        %v863 = vpack.c.bf16 %v647, %v623
        %v864 = vpack.c.bf16 %v648, %v624
        %v865 = vpack.c.bf16 %v649, %v625
        %v866 = vpack.c.bf16 %v650, %v626
        %v867 = vpack.c.bf16 %v651, %v627
        %v868 = vpack.c.bf16 %v652, %v628
        %v869 = vpack.c.bf16 %v653, %v629
        %v870 = vpack.c.bf16 %v654, %v630
        %v871 = vpack.c.bf16 %v655, %v631
        %v872 = vpack.c.bf16 %v656, %v632
        %v873 = vpack.c.bf16 %v657, %v633
        %v874 = vpack.c.bf16 %v658, %v634
        %v875 = vpack.c.bf16 %v659, %v635
        %v876 = vpack.c.bf16 %v660, %v636
        %v877 = vpack.c.bf16 %v685, %v661
        %v878 = vpack.c.bf16 %v686, %v662
        %v879 = vpack.c.bf16 %v687, %v663
        %v880 = vpack.c.bf16 %v688, %v664
        %v881 = vpack.c.bf16 %v689, %v665
        %v882 = vpack.c.bf16 %v690, %v666
        %v883 = vpack.c.bf16 %v691, %v667
        %v884 = vpack.c.bf16 %v692, %v668
        %v885 = vpack.c.bf16 %v693, %v669
        %v886 = vpack.c.bf16 %v694, %v670
        %v887 = vpack.c.bf16 %v695, %v671
        %v888 = vpack.c.bf16 %v696, %v672
        %v889 = vpack.c.bf16 %v697, %v673
        %v890 = vpack.c.bf16 %v698, %v674
        %v891 = vpack.c.bf16 %v699, %v675
        %v892 = vpack.c.bf16 %v700, %v676
        %v893 = vpack.c.bf16 %v701, %v677
        %v894 = vpack.c.bf16 %v702, %v678
        %v895 = vpack.c.bf16 %v703, %v679
        %v896 = vpack.c.bf16 %v704, %v680
        %v897 = vpack.c.bf16 %v705, %v681
        %v898 = vpack.c.bf16 %v706, %v682
        %v899 = vpack.c.bf16 %v707, %v683
        %v900 = vpack.c.bf16 %v708, %v684
        %v901 = vld [vmem:[%s1] sm:$0xf]
        %v902 = vld [vmem:[%s1 + $0x4] sm:$0xf]
        %v903 = vld [vmem:[%s1 + $0x8] sm:$0xf]
        %v904 = vld [vmem:[%s1 + $0xc] sm:$0xf]
        %v905 = vld [vmem:[%s1 + $0x10] sm:$0xf]
        %v906 = vld [vmem:[%s1 + $0x14] sm:$0xf]
        %v907 = vld [vmem:[%s1 + $0x18] sm:$0xf]
        %v908 = vld [vmem:[%s1 + $0x1c] sm:$0xf]
        %v909 = vld [vmem:[%s1 + $0x20] sm:$0xf]
        %v910 = vld [vmem:[%s1 + $0x24] sm:$0xf]
        %v911 = vld [vmem:[%s1 + $0x28] sm:$0xf]
        %v912 = vld [vmem:[%s1 + $0x2c] sm:$0xf]
        %v913 = vld [vmem:[%s1 + $0x30] sm:$0xf]
        %v914 = vld [vmem:[%s1 + $0x34] sm:$0xf]
        %v915 = vld [vmem:[%s1 + $0x38] sm:$0xf]
        %v916 = vld [vmem:[%s1 + $0x3c] sm:$0xf]
        %v917 = vld [vmem:[%s1 + $0x40] sm:$0xf]
        %v918 = vld [vmem:[%s1 + $0x44] sm:$0xf]
        %v919 = vld [vmem:[%s1 + $0x48] sm:$0xf]
        %v920 = vld [vmem:[%s1 + $0x4c] sm:$0xf]
        %v921 = vld [vmem:[%s1 + $0x50] sm:$0xf]
        %v922 = vld [vmem:[%s1 + $0x54] sm:$0xf]
        %v923 = vld [vmem:[%s1 + $0x58] sm:$0xf]
        %v924 = vld [vmem:[%s1 + $0x5c] sm:$0xf]
        %v925 = vld [vmem:[%s1 + $0x60] sm:$0xf]
        %v926 = vld [vmem:[%s1 + $0x64] sm:$0xf]
        %v927 = vld [vmem:[%s1 + $0x68] sm:$0xf]
        %v928 = vld [vmem:[%s1 + $0x6c] sm:$0xf]
        %v929 = vld [vmem:[%s1 + $0x70] sm:$0xf]
        %v930 = vld [vmem:[%s1 + $0x74] sm:$0xf]
        %v931 = vld [vmem:[%s1 + $0x78] sm:$0xf]
        %v932 = vld [vmem:[%s1 + $0x7c] sm:$0xf]
        %v933 = vld [vmem:[%s1 + $0x80] sm:$0xf]
        %v934 = vld [vmem:[%s1 + $0x84] sm:$0xf]
        %v935 = vld [vmem:[%s1 + $0x88] sm:$0xf]
        %v936 = vld [vmem:[%s1 + $0x8c] sm:$0xf]
        %v937 = vld [vmem:[%s1 + $0x90] sm:$0xf]
        %v938 = vld [vmem:[%s1 + $0x94] sm:$0xf]
        %v939 = vld [vmem:[%s1 + $0x98] sm:$0xf]
        %v940 = vld [vmem:[%s1 + $0x9c] sm:$0xf]
        %v941 = vld [vmem:[%s1 + $0xa0] sm:$0xf]
        %v942 = vld [vmem:[%s1 + $0xa4] sm:$0xf]
        %v943 = vld [vmem:[%s1 + $0xa8] sm:$0xf]
        %v944 = vld [vmem:[%s1 + $0xac] sm:$0xf]
        %v945 = vld [vmem:[%s1 + $0xb0] sm:$0xf]
        %v946 = vld [vmem:[%s1 + $0xb4] sm:$0xf]
        %v947 = vld [vmem:[%s1 + $0xb8] sm:$0xf]
        %v948 = vld [vmem:[%s1 + $0xbc] sm:$0xf]
        %v949 = vld [vmem:[%s1 + $0xc0] sm:$0xf]
        %v950 = vld [vmem:[%s1 + $0xc4] sm:$0xf]
        %v951 = vld [vmem:[%s1 + $0xc8] sm:$0xf]
        %v952 = vld [vmem:[%s1 + $0xcc] sm:$0xf]
        %v953 = vld [vmem:[%s1 + $0xd0] sm:$0xf]
        %v954 = vld [vmem:[%s1 + $0xd4] sm:$0xf]
        %v955 = vld [vmem:[%s1 + $0xd8] sm:$0xf]
        %v956 = vld [vmem:[%s1 + $0xdc] sm:$0xf]
        %v957 = vld [vmem:[%s1 + $0xe0] sm:$0xf]
        %v958 = vld [vmem:[%s1 + $0xe4] sm:$0xf]
        %v959 = vld [vmem:[%s1 + $0xe8] sm:$0xf]
        %v960 = vld [vmem:[%s1 + $0xec] sm:$0xf]
        %v961 = vld [vmem:[%s1 + $0xf0] sm:$0xf]
        %v962 = vld [vmem:[%s1 + $0xf4] sm:$0xf]
        %v963 = vld [vmem:[%s1 + $0xf8] sm:$0xf]
        %v964 = vld [vmem:[%s1 + $0xfc] sm:$0xf]
        %v965 = vld [vmem:[%s1 + $0x100] sm:$0xf]
        %v966 = vld [vmem:[%s1 + $0x104] sm:$0xf]
        %v967 = vld [vmem:[%s1 + $0x108] sm:$0xf]
        %v968 = vld [vmem:[%s1 + $0x10c] sm:$0xf]
        %v969 = vld [vmem:[%s1 + $0x110] sm:$0xf]
        %v970 = vld [vmem:[%s1 + $0x114] sm:$0xf]
        %v971 = vld [vmem:[%s1 + $0x118] sm:$0xf]
        %v972 = vld [vmem:[%s1 + $0x11c] sm:$0xf]
        %v973 = vld [vmem:[%s1 + $0x120] sm:$0xf]
        %v974 = vld [vmem:[%s1 + $0x124] sm:$0xf]
        %v975 = vld [vmem:[%s1 + $0x128] sm:$0xf]
        %v976 = vld [vmem:[%s1 + $0x12c] sm:$0xf]
        %v977 = vld [vmem:[%s1 + $0x130] sm:$0xf]
        %v978 = vld [vmem:[%s1 + $0x134] sm:$0xf]
        %v979 = vld [vmem:[%s1 + $0x138] sm:$0xf]
        %v980 = vld [vmem:[%s1 + $0x13c] sm:$0xf]
        %v981 = vld [vmem:[%s1 + $0x140] sm:$0xf]
        %v982 = vld [vmem:[%s1 + $0x144] sm:$0xf]
        %v983 = vld [vmem:[%s1 + $0x148] sm:$0xf]
        %v984 = vld [vmem:[%s1 + $0x14c] sm:$0xf]
        %v985 = vld [vmem:[%s1 + $0x150] sm:$0xf]
        %v986 = vld [vmem:[%s1 + $0x154] sm:$0xf]
        %v987 = vld [vmem:[%s1 + $0x158] sm:$0xf]
        %v988 = vld [vmem:[%s1 + $0x15c] sm:$0xf]
        %v989 = vld [vmem:[%s1 + $0x160] sm:$0xf]
        %v990 = vld [vmem:[%s1 + $0x164] sm:$0xf]
        %v991 = vld [vmem:[%s1 + $0x168] sm:$0xf]
        %v992 = vld [vmem:[%s1 + $0x16c] sm:$0xf]
        %v993 = vld [vmem:[%s1 + $0x170] sm:$0xf]
        %v994 = vld [vmem:[%s1 + $0x174] sm:$0xf]
        %v995 = vld [vmem:[%s1 + $0x178] sm:$0xf]
        %v996 = vld [vmem:[%s1 + $0x17c] sm:$0xf]
        %v997 = vld [vmem:[%s1 + $0x180] sm:$0xf]
        %v998 = vld [vmem:[%s1 + $0x184] sm:$0xf]
        %v999 = vld [vmem:[%s1 + $0x188] sm:$0xf]
        %v1000 = vld [vmem:[%s1 + $0x18c] sm:$0xf]
        %v1001 = vld [vmem:[%s1 + $0x190] sm:$0xf]
        %v1002 = vld [vmem:[%s1 + $0x194] sm:$0xf]
        %v1003 = vld [vmem:[%s1 + $0x198] sm:$0xf]
        %v1004 = vld [vmem:[%s1 + $0x19c] sm:$0xf]
        %v1005 = vld [vmem:[%s1 + $0x1a0] sm:$0xf]
        %v1006 = vld [vmem:[%s1 + $0x1a4] sm:$0xf]
        %v1007 = vld [vmem:[%s1 + $0x1a8] sm:$0xf]
        %v1008 = vld [vmem:[%s1 + $0x1ac] sm:$0xf]
        %v1009 = vld [vmem:[%s1 + $0x1b0] sm:$0xf]
        %v1010 = vld [vmem:[%s1 + $0x1b4] sm:$0xf]
        %v1011 = vld [vmem:[%s1 + $0x1b8] sm:$0xf]
        %v1012 = vld [vmem:[%s1 + $0x1bc] sm:$0xf]
        %v1013 = vld [vmem:[%s1 + $0x1c0] sm:$0xf]
        %v1014 = vld [vmem:[%s1 + $0x1c4] sm:$0xf]
        %v1015 = vld [vmem:[%s1 + $0x1c8] sm:$0xf]
        %v1016 = vld [vmem:[%s1 + $0x1cc] sm:$0xf]
        %v1017 = vld [vmem:[%s1 + $0x1d0] sm:$0xf]
        %v1018 = vld [vmem:[%s1 + $0x1d4] sm:$0xf]
        %v1019 = vld [vmem:[%s1 + $0x1d8] sm:$0xf]
        %v1020 = vld [vmem:[%s1 + $0x1dc] sm:$0xf]
        %v1021 = vld [vmem:[%s1 + $0x1e0] sm:$0xf]
        %v1022 = vld [vmem:[%s1 + $0x1e4] sm:$0xf]
        %v1023 = vld [vmem:[%s1 + $0x1e8] sm:$0xf]
        %v1024 = vld [vmem:[%s1 + $0x1ec] sm:$0xf]
        %v1025 = vld [vmem:[%s1 + $0x1f0] sm:$0xf]
        %v1026 = vld [vmem:[%s1 + $0x1f4] sm:$0xf]
        %v1027 = vld [vmem:[%s1 + $0x1f8] sm:$0xf]
        %v1028 = vld [vmem:[%s1 + $0x1fc] sm:$0xf]
        %v1029 = vld [vmem:[%s1 + $0x200] sm:$0xf]
        %v1030 = vld [vmem:[%s1 + $0x204] sm:$0xf]
        %v1031 = vld [vmem:[%s1 + $0x208] sm:$0xf]
        %v1032 = vld [vmem:[%s1 + $0x20c] sm:$0xf]
        %v1033 = vld [vmem:[%s1 + $0x210] sm:$0xf]
        %v1034 = vld [vmem:[%s1 + $0x214] sm:$0xf]
        %v1035 = vld [vmem:[%s1 + $0x218] sm:$0xf]
        %v1036 = vld [vmem:[%s1 + $0x21c] sm:$0xf]
        %v1037 = vld [vmem:[%s1 + $0x220] sm:$0xf]
        %v1038 = vld [vmem:[%s1 + $0x224] sm:$0xf]
        %v1039 = vld [vmem:[%s1 + $0x228] sm:$0xf]
        %v1040 = vld [vmem:[%s1 + $0x22c] sm:$0xf]
        %v1041 = vld [vmem:[%s1 + $0x230] sm:$0xf]
        %v1042 = vld [vmem:[%s1 + $0x234] sm:$0xf]
        %v1043 = vld [vmem:[%s1 + $0x238] sm:$0xf]
        %v1044 = vld [vmem:[%s1 + $0x23c] sm:$0xf]
        %v1045 = vld [vmem:[%s1 + $0x240] sm:$0xf]
        %v1046 = vld [vmem:[%s1 + $0x244] sm:$0xf]
        %v1047 = vld [vmem:[%s1 + $0x248] sm:$0xf]
        %v1048 = vld [vmem:[%s1 + $0x24c] sm:$0xf]
        %v1049 = vld [vmem:[%s1 + $0x250] sm:$0xf]
        %v1050 = vld [vmem:[%s1 + $0x254] sm:$0xf]
        %v1051 = vld [vmem:[%s1 + $0x258] sm:$0xf]
        %v1052 = vld [vmem:[%s1 + $0x25c] sm:$0xf]
        %v1053 = vld [vmem:[%s1 + $0x260] sm:$0xf]
        %v1054 = vld [vmem:[%s1 + $0x264] sm:$0xf]
        %v1055 = vld [vmem:[%s1 + $0x268] sm:$0xf]
        %v1056 = vld [vmem:[%s1 + $0x26c] sm:$0xf]
        %v1057 = vld [vmem:[%s1 + $0x270] sm:$0xf]
        %v1058 = vld [vmem:[%s1 + $0x274] sm:$0xf]
        %v1059 = vld [vmem:[%s1 + $0x278] sm:$0xf]
        %v1060 = vld [vmem:[%s1 + $0x27c] sm:$0xf]
        %v1061 = vld [vmem:[%s1 + $0x280] sm:$0xf]
        %v1062 = vld [vmem:[%s1 + $0x284] sm:$0xf]
        %v1063 = vld [vmem:[%s1 + $0x288] sm:$0xf]
        %v1064 = vld [vmem:[%s1 + $0x28c] sm:$0xf]
        %v1065 = vld [vmem:[%s1 + $0x290] sm:$0xf]
        %v1066 = vld [vmem:[%s1 + $0x294] sm:$0xf]
        %v1067 = vld [vmem:[%s1 + $0x298] sm:$0xf]
        %v1068 = vld [vmem:[%s1 + $0x29c] sm:$0xf]
        %v1069 = vld [vmem:[%s1 + $0x2a0] sm:$0xf]
        %v1070 = vld [vmem:[%s1 + $0x2a4] sm:$0xf]
        %v1071 = vld [vmem:[%s1 + $0x2a8] sm:$0xf]
        %v1072 = vld [vmem:[%s1 + $0x2ac] sm:$0xf]
        %v1073 = vld [vmem:[%s1 + $0x2b0] sm:$0xf]
        %v1074 = vld [vmem:[%s1 + $0x2b4] sm:$0xf]
        %v1075 = vld [vmem:[%s1 + $0x2b8] sm:$0xf]
        %v1076 = vld [vmem:[%s1 + $0x2bc] sm:$0xf]
        %v1077 = vld [vmem:[%s1 + $0x2c0] sm:$0xf]
        %v1078 = vld [vmem:[%s1 + $0x2c4] sm:$0xf]
        %v1079 = vld [vmem:[%s1 + $0x2c8] sm:$0xf]
        %v1080 = vld [vmem:[%s1 + $0x2cc] sm:$0xf]
        %v1081 = vld [vmem:[%s1 + $0x2d0] sm:$0xf]
        %v1082 = vld [vmem:[%s1 + $0x2d4] sm:$0xf]
        %v1083 = vld [vmem:[%s1 + $0x2d8] sm:$0xf]
        %v1084 = vld [vmem:[%s1 + $0x2dc] sm:$0xf]
        %v1085 = vld [vmem:[%s1 + $0x2e0] sm:$0xf]
        %v1086 = vld [vmem:[%s1 + $0x2e4] sm:$0xf]
        %v1087 = vld [vmem:[%s1 + $0x2e8] sm:$0xf]
        %v1088 = vld [vmem:[%s1 + $0x2ec] sm:$0xf]
        %v1089 = vld [vmem:[%s1 + $0x2f0] sm:$0xf]
        %v1090 = vld [vmem:[%s1 + $0x2f4] sm:$0xf]
        %v1091 = vld [vmem:[%s1 + $0x2f8] sm:$0xf]
        %v1092 = vld [vmem:[%s1 + $0x2fc] sm:$0xf]
        %v1093 = vld [vmem:[%s1 + $0x300] sm:$0xf]
        %v1094 = vld [vmem:[%s1 + $0x304] sm:$0xf]
        %v1095 = vld [vmem:[%s1 + $0x308] sm:$0xf]
        %v1096 = vld [vmem:[%s1 + $0x30c] sm:$0xf]
        %v1097 = vld [vmem:[%s1 + $0x310] sm:$0xf]
        %v1098 = vld [vmem:[%s1 + $0x314] sm:$0xf]
        %v1099 = vld [vmem:[%s1 + $0x318] sm:$0xf]
        %v1100 = vld [vmem:[%s1 + $0x31c] sm:$0xf]
        %v1101 = vld [vmem:[%s1 + $0x320] sm:$0xf]
        %v1102 = vld [vmem:[%s1 + $0x324] sm:$0xf]
        %v1103 = vld [vmem:[%s1 + $0x328] sm:$0xf]
        %v1104 = vld [vmem:[%s1 + $0x32c] sm:$0xf]
        %v1105 = vld [vmem:[%s1 + $0x330] sm:$0xf]
        %v1106 = vld [vmem:[%s1 + $0x334] sm:$0xf]
        %v1107 = vld [vmem:[%s1 + $0x338] sm:$0xf]
        %v1108 = vld [vmem:[%s1 + $0x33c] sm:$0xf]
        %v1109 = vld [vmem:[%s1 + $0x340] sm:$0xf]
        %v1110 = vld [vmem:[%s1 + $0x344] sm:$0xf]
        %v1111 = vld [vmem:[%s1 + $0x348] sm:$0xf]
        %v1112 = vld [vmem:[%s1 + $0x34c] sm:$0xf]
        %v1113 = vld [vmem:[%s1 + $0x350] sm:$0xf]
        %v1114 = vld [vmem:[%s1 + $0x354] sm:$0xf]
        %v1115 = vld [vmem:[%s1 + $0x358] sm:$0xf]
        %v1116 = vld [vmem:[%s1 + $0x35c] sm:$0xf]
        %v1117 = vld [vmem:[%s1 + $0x360] sm:$0xf]
        %v1118 = vld [vmem:[%s1 + $0x364] sm:$0xf]
        %v1119 = vld [vmem:[%s1 + $0x368] sm:$0xf]
        %v1120 = vld [vmem:[%s1 + $0x36c] sm:$0xf]
        %v1121 = vld [vmem:[%s1 + $0x370] sm:$0xf]
        %v1122 = vld [vmem:[%s1 + $0x374] sm:$0xf]
        %v1123 = vld [vmem:[%s1 + $0x378] sm:$0xf]
        %v1124 = vld [vmem:[%s1 + $0x37c] sm:$0xf]
        %v1125 = vld [vmem:[%s1 + $0x380] sm:$0xf]
        %v1126 = vld [vmem:[%s1 + $0x384] sm:$0xf]
        %v1127 = vld [vmem:[%s1 + $0x388] sm:$0xf]
        %v1128 = vld [vmem:[%s1 + $0x38c] sm:$0xf]
        %v1129 = vld [vmem:[%s1 + $0x390] sm:$0xf]
        %v1130 = vld [vmem:[%s1 + $0x394] sm:$0xf]
        %v1131 = vld [vmem:[%s1 + $0x398] sm:$0xf]
        %v1132 = vld [vmem:[%s1 + $0x39c] sm:$0xf]
        %v1133 = vld [vmem:[%s1 + $0x3a0] sm:$0xf]
        %v1134 = vld [vmem:[%s1 + $0x3a4] sm:$0xf]
        %v1135 = vld [vmem:[%s1 + $0x3a8] sm:$0xf]
        %v1136 = vld [vmem:[%s1 + $0x3ac] sm:$0xf]
        %v1137 = vld [vmem:[%s1 + $0x3b0] sm:$0xf]
        %v1138 = vld [vmem:[%s1 + $0x3b4] sm:$0xf]
        %v1139 = vld [vmem:[%s1 + $0x3b8] sm:$0xf]
        %v1140 = vld [vmem:[%s1 + $0x3bc] sm:$0xf]
        %v1141 = vld [vmem:[%s1 + $0x3c0] sm:$0xf]
        %v1142 = vld [vmem:[%s1 + $0x3c4] sm:$0xf]
        %v1143 = vld [vmem:[%s1 + $0x3c8] sm:$0xf]
        %v1144 = vld [vmem:[%s1 + $0x3cc] sm:$0xf]
        %v1145 = vld [vmem:[%s1 + $0x3d0] sm:$0xf]
        %v1146 = vld [vmem:[%s1 + $0x3d4] sm:$0xf]
        %v1147 = vld [vmem:[%s1 + $0x3d8] sm:$0xf]
        %v1148 = vld [vmem:[%s1 + $0x3dc] sm:$0xf]
        %v1149 = vld [vmem:[%s1 + $0x3e0] sm:$0xf]
        %v1150 = vld [vmem:[%s1 + $0x3e4] sm:$0xf]
        %v1151 = vld [vmem:[%s1 + $0x3e8] sm:$0xf]
        %v1152 = vld [vmem:[%s1 + $0x3ec] sm:$0xf]
        %v1153 = vld [vmem:[%s1 + $0x3f0] sm:$0xf]
        %v1154 = vld [vmem:[%s1 + $0x3f4] sm:$0xf]
        %v1155 = vld [vmem:[%s1 + $0x3f8] sm:$0xf]
        %v1156 = vld [vmem:[%s1 + $0x3fc] sm:$0xf]
        %v1157 = vld [vmem:[%s1 + $0x400] sm:$0xf]
        %v1158 = vld [vmem:[%s1 + $0x404] sm:$0xf]
        %v1159 = vld [vmem:[%s1 + $0x408] sm:$0xf]
        %v1160 = vld [vmem:[%s1 + $0x40c] sm:$0xf]
        %v1161 = vld [vmem:[%s1 + $0x410] sm:$0xf]
        %v1162 = vld [vmem:[%s1 + $0x414] sm:$0xf]
        %v1163 = vld [vmem:[%s1 + $0x418] sm:$0xf]
        %v1164 = vld [vmem:[%s1 + $0x41c] sm:$0xf]
        %v1165 = vld [vmem:[%s1 + $0x420] sm:$0xf]
        %v1166 = vld [vmem:[%s1 + $0x424] sm:$0xf]
        %v1167 = vld [vmem:[%s1 + $0x428] sm:$0xf]
        %v1168 = vld [vmem:[%s1 + $0x42c] sm:$0xf]
        %v1169 = vld [vmem:[%s1 + $0x430] sm:$0xf]
        %v1170 = vld [vmem:[%s1 + $0x434] sm:$0xf]
        %v1171 = vld [vmem:[%s1 + $0x438] sm:$0xf]
        %v1172 = vld [vmem:[%s1 + $0x43c] sm:$0xf]
        %v1173 = vld [vmem:[%s1 + $0x440] sm:$0xf]
        %v1174 = vld [vmem:[%s1 + $0x444] sm:$0xf]
        %v1175 = vld [vmem:[%s1 + $0x448] sm:$0xf]
        %v1176 = vld [vmem:[%s1 + $0x44c] sm:$0xf]
        %v1177 = vld [vmem:[%s1 + $0x450] sm:$0xf]
        %v1178 = vld [vmem:[%s1 + $0x454] sm:$0xf]
        %v1179 = vld [vmem:[%s1 + $0x458] sm:$0xf]
        %v1180 = vld [vmem:[%s1 + $0x45c] sm:$0xf]
        %v1181 = vld [vmem:[%s1 + $0x460] sm:$0xf]
        %v1182 = vld [vmem:[%s1 + $0x464] sm:$0xf]
        %v1183 = vld [vmem:[%s1 + $0x468] sm:$0xf]
        %v1184 = vld [vmem:[%s1 + $0x46c] sm:$0xf]
        %v1185 = vld [vmem:[%s1 + $0x470] sm:$0xf]
        %v1186 = vld [vmem:[%s1 + $0x474] sm:$0xf]
        %v1187 = vld [vmem:[%s1 + $0x478] sm:$0xf]
        %v1188 = vld [vmem:[%s1 + $0x47c] sm:$0xf]
        %v1189 = vld [vmem:[%s1 + $0x480] sm:$0xf]
        %v1190 = vld [vmem:[%s1 + $0x484] sm:$0xf]
        %v1191 = vld [vmem:[%s1 + $0x488] sm:$0xf]
        %v1192 = vld [vmem:[%s1 + $0x48c] sm:$0xf]
        %v1193 = vld [vmem:[%s1 + $0x490] sm:$0xf]
        %v1194 = vld [vmem:[%s1 + $0x494] sm:$0xf]
        %v1195 = vld [vmem:[%s1 + $0x498] sm:$0xf]
        %v1196 = vld [vmem:[%s1 + $0x49c] sm:$0xf]
        %v1197 = vld [vmem:[%s1 + $0x4a0] sm:$0xf]
        %v1198 = vld [vmem:[%s1 + $0x4a4] sm:$0xf]
        %v1199 = vld [vmem:[%s1 + $0x4a8] sm:$0xf]
        %v1200 = vld [vmem:[%s1 + $0x4ac] sm:$0xf]
        %v1201 = vld [vmem:[%s1 + $0x4b0] sm:$0xf]
        %v1202 = vld [vmem:[%s1 + $0x4b4] sm:$0xf]
        %v1203 = vld [vmem:[%s1 + $0x4b8] sm:$0xf]
        %v1204 = vld [vmem:[%s1 + $0x4bc] sm:$0xf]
        %v1205 = vld [vmem:[%s1 + $0x4c0] sm:$0xf]
        %v1206 = vld [vmem:[%s1 + $0x4c4] sm:$0xf]
        %v1207 = vld [vmem:[%s1 + $0x4c8] sm:$0xf]
        %v1208 = vld [vmem:[%s1 + $0x4cc] sm:$0xf]
        %v1209 = vld [vmem:[%s1 + $0x4d0] sm:$0xf]
        %v1210 = vld [vmem:[%s1 + $0x4d4] sm:$0xf]
        %v1211 = vld [vmem:[%s1 + $0x4d8] sm:$0xf]
        %v1212 = vld [vmem:[%s1 + $0x4dc] sm:$0xf]
        %v1213 = vld [vmem:[%s1 + $0x4e0] sm:$0xf]
        %v1214 = vld [vmem:[%s1 + $0x4e4] sm:$0xf]
        %v1215 = vld [vmem:[%s1 + $0x4e8] sm:$0xf]
        %v1216 = vld [vmem:[%s1 + $0x4ec] sm:$0xf]
        %v1217 = vld [vmem:[%s1 + $0x4f0] sm:$0xf]
        %v1218 = vld [vmem:[%s1 + $0x4f4] sm:$0xf]
        %v1219 = vld [vmem:[%s1 + $0x4f8] sm:$0xf]
        %v1220 = vld [vmem:[%s1 + $0x4fc] sm:$0xf]
        %v1221 = vld [vmem:[%s1 + $0x500] sm:$0xf]
        %v1222 = vld [vmem:[%s1 + $0x504] sm:$0xf]
        %v1223 = vld [vmem:[%s1 + $0x508] sm:$0xf]
        %v1224 = vld [vmem:[%s1 + $0x50c] sm:$0xf]
        %v1225 = vld [vmem:[%s1 + $0x510] sm:$0xf]
        %v1226 = vld [vmem:[%s1 + $0x514] sm:$0xf]
        %v1227 = vld [vmem:[%s1 + $0x518] sm:$0xf]
        %v1228 = vld [vmem:[%s1 + $0x51c] sm:$0xf]
        %v1229 = vld [vmem:[%s1 + $0x520] sm:$0xf]
        %v1230 = vld [vmem:[%s1 + $0x524] sm:$0xf]
        %v1231 = vld [vmem:[%s1 + $0x528] sm:$0xf]
        %v1232 = vld [vmem:[%s1 + $0x52c] sm:$0xf]
        %v1233 = vld [vmem:[%s1 + $0x530] sm:$0xf]
        %v1234 = vld [vmem:[%s1 + $0x534] sm:$0xf]
        %v1235 = vld [vmem:[%s1 + $0x538] sm:$0xf]
        %v1236 = vld [vmem:[%s1 + $0x53c] sm:$0xf]
        %v1237 = vld [vmem:[%s1 + $0x540] sm:$0xf]
        %v1238 = vld [vmem:[%s1 + $0x544] sm:$0xf]
        %v1239 = vld [vmem:[%s1 + $0x548] sm:$0xf]
        %v1240 = vld [vmem:[%s1 + $0x54c] sm:$0xf]
        %v1241 = vld [vmem:[%s1 + $0x550] sm:$0xf]
        %v1242 = vld [vmem:[%s1 + $0x554] sm:$0xf]
        %v1243 = vld [vmem:[%s1 + $0x558] sm:$0xf]
        %v1244 = vld [vmem:[%s1 + $0x55c] sm:$0xf]
        %v1245 = vld [vmem:[%s1 + $0x560] sm:$0xf]
        %v1246 = vld [vmem:[%s1 + $0x564] sm:$0xf]
        %v1247 = vld [vmem:[%s1 + $0x568] sm:$0xf]
        %v1248 = vld [vmem:[%s1 + $0x56c] sm:$0xf]
        %v1249 = vld [vmem:[%s1 + $0x570] sm:$0xf]
        %v1250 = vld [vmem:[%s1 + $0x574] sm:$0xf]
        %v1251 = vld [vmem:[%s1 + $0x578] sm:$0xf]
        %v1252 = vld [vmem:[%s1 + $0x57c] sm:$0xf]
        %v1253 = vld [vmem:[%s1 + $0x580] sm:$0xf]
        %v1254 = vld [vmem:[%s1 + $0x584] sm:$0xf]
        %v1255 = vld [vmem:[%s1 + $0x588] sm:$0xf]
        %v1256 = vld [vmem:[%s1 + $0x58c] sm:$0xf]
        %v1257 = vld [vmem:[%s1 + $0x590] sm:$0xf]
        %v1258 = vld [vmem:[%s1 + $0x594] sm:$0xf]
        %v1259 = vld [vmem:[%s1 + $0x598] sm:$0xf]
        %v1260 = vld [vmem:[%s1 + $0x59c] sm:$0xf]
        %v1261 = vld [vmem:[%s1 + $0x5a0] sm:$0xf]
        %v1262 = vld [vmem:[%s1 + $0x5a4] sm:$0xf]
        %v1263 = vld [vmem:[%s1 + $0x5a8] sm:$0xf]
        %v1264 = vld [vmem:[%s1 + $0x5ac] sm:$0xf]
        %v1265 = vld [vmem:[%s1 + $0x5b0] sm:$0xf]
        %v1266 = vld [vmem:[%s1 + $0x5b4] sm:$0xf]
        %v1267 = vld [vmem:[%s1 + $0x5b8] sm:$0xf]
        %v1268 = vld [vmem:[%s1 + $0x5bc] sm:$0xf]
        %v1269 = vld [vmem:[%s1 + $0x5c0] sm:$0xf]
        %v1270 = vld [vmem:[%s1 + $0x5c4] sm:$0xf]
        %v1271 = vld [vmem:[%s1 + $0x5c8] sm:$0xf]
        %v1272 = vld [vmem:[%s1 + $0x5cc] sm:$0xf]
        %v1273 = vld [vmem:[%s1 + $0x5d0] sm:$0xf]
        %v1274 = vld [vmem:[%s1 + $0x5d4] sm:$0xf]
        %v1275 = vld [vmem:[%s1 + $0x5d8] sm:$0xf]
        %v1276 = vld [vmem:[%s1 + $0x5dc] sm:$0xf]
        %v1277 = vld [vmem:[%s1 + $0x5e0] sm:$0xf]
        %v1278 = vld [vmem:[%s1 + $0x5e4] sm:$0xf]
        %v1279 = vld [vmem:[%s1 + $0x5e8] sm:$0xf]
        %v1280 = vld [vmem:[%s1 + $0x5ec] sm:$0xf]
        %v1281 = vld [vmem:[%s1 + $0x5f0] sm:$0xf]
        %v1282 = vld [vmem:[%s1 + $0x5f4] sm:$0xf]
        %v1283 = vld [vmem:[%s1 + $0x5f8] sm:$0xf]
        %v1284 = vld [vmem:[%s1 + $0x5fc] sm:$0xf]
        %v1285 = vld [vmem:[%s2] sm:$0x1]
        %v1287 = vperm.slane %v1285, 0
        %v1673 = vunpack.c.l.b16 %v901
        %v1674 = vunpack.c.l.b16 %v902
        %v1675 = vunpack.c.l.b16 %v903
        %v1676 = vunpack.c.l.b16 %v904
        %v1677 = vunpack.c.l.b16 %v905
        %v1678 = vunpack.c.l.b16 %v906
        %v1679 = vunpack.c.l.b16 %v907
        %v1680 = vunpack.c.l.b16 %v908
        %v1681 = vunpack.c.l.b16 %v909
        %v1682 = vunpack.c.l.b16 %v910
        %v1683 = vunpack.c.l.b16 %v911
        %v1684 = vunpack.c.l.b16 %v912
        %v1685 = vunpack.c.l.b16 %v913
        %v1686 = vunpack.c.l.b16 %v914
        %v1687 = vunpack.c.l.b16 %v915
        %v1688 = vunpack.c.l.b16 %v916
        %v1689 = vunpack.c.l.b16 %v917
        %v1690 = vunpack.c.l.b16 %v918
        %v1691 = vunpack.c.l.b16 %v919
        %v1692 = vunpack.c.l.b16 %v920
        %v1693 = vunpack.c.l.b16 %v921
        %v1694 = vunpack.c.l.b16 %v922
        %v1695 = vunpack.c.l.b16 %v923
        %v1696 = vunpack.c.l.b16 %v924
        %v1697 = vunpack.c.l.b16 %v925
        %v1698 = vunpack.c.l.b16 %v926
        %v1699 = vunpack.c.l.b16 %v927
        %v1700 = vunpack.c.l.b16 %v928
        %v1701 = vunpack.c.l.b16 %v929
        %v1702 = vunpack.c.l.b16 %v930
        %v1703 = vunpack.c.l.b16 %v931
        %v1704 = vunpack.c.l.b16 %v932
        %v1705 = vunpack.c.l.b16 %v933
        %v1706 = vunpack.c.l.b16 %v934
        %v1707 = vunpack.c.l.b16 %v935
        %v1708 = vunpack.c.l.b16 %v936
        %v1709 = vunpack.c.l.b16 %v937
        %v1710 = vunpack.c.l.b16 %v938
        %v1711 = vunpack.c.l.b16 %v939
        %v1712 = vunpack.c.l.b16 %v940
        %v1713 = vunpack.c.l.b16 %v941
        %v1714 = vunpack.c.l.b16 %v942
        %v1715 = vunpack.c.l.b16 %v943
        %v1716 = vunpack.c.l.b16 %v944
        %v1717 = vunpack.c.l.b16 %v945
        %v1718 = vunpack.c.l.b16 %v946
        %v1719 = vunpack.c.l.b16 %v947
        %v1720 = vunpack.c.l.b16 %v948
        %v1721 = vunpack.c.l.b16 %v949
        %v1722 = vunpack.c.l.b16 %v950
        %v1723 = vunpack.c.l.b16 %v951
        %v1724 = vunpack.c.l.b16 %v952
        %v1725 = vunpack.c.l.b16 %v953
        %v1726 = vunpack.c.l.b16 %v954
        %v1727 = vunpack.c.l.b16 %v955
        %v1728 = vunpack.c.l.b16 %v956
        %v1729 = vunpack.c.l.b16 %v957
        %v1730 = vunpack.c.l.b16 %v958
        %v1731 = vunpack.c.l.b16 %v959
        %v1732 = vunpack.c.l.b16 %v960
        %v1733 = vunpack.c.l.b16 %v961
        %v1734 = vunpack.c.l.b16 %v962
        %v1735 = vunpack.c.l.b16 %v963
        %v1736 = vunpack.c.l.b16 %v964
        %v1737 = vunpack.c.l.b16 %v965
        %v1738 = vunpack.c.l.b16 %v966
        %v1739 = vunpack.c.l.b16 %v967
        %v1740 = vunpack.c.l.b16 %v968
        %v1741 = vunpack.c.l.b16 %v969
        %v1742 = vunpack.c.l.b16 %v970
        %v1743 = vunpack.c.l.b16 %v971
        %v1744 = vunpack.c.l.b16 %v972
        %v1745 = vunpack.c.l.b16 %v973
        %v1746 = vunpack.c.l.b16 %v974
        %v1747 = vunpack.c.l.b16 %v975
        %v1748 = vunpack.c.l.b16 %v976
        %v1749 = vunpack.c.l.b16 %v977
        %v1750 = vunpack.c.l.b16 %v978
        %v1751 = vunpack.c.l.b16 %v979
        %v1752 = vunpack.c.l.b16 %v980
        %v1753 = vunpack.c.l.b16 %v981
        %v1754 = vunpack.c.l.b16 %v982
        %v1755 = vunpack.c.l.b16 %v983
        %v1756 = vunpack.c.l.b16 %v984
        %v1757 = vunpack.c.l.b16 %v985
        %v1758 = vunpack.c.l.b16 %v986
        %v1759 = vunpack.c.l.b16 %v987
        %v1760 = vunpack.c.l.b16 %v988
        %v1761 = vunpack.c.l.b16 %v989
        %v1762 = vunpack.c.l.b16 %v990
        %v1763 = vunpack.c.l.b16 %v991
        %v1764 = vunpack.c.l.b16 %v992
        %v1765 = vunpack.c.l.b16 %v993
        %v1766 = vunpack.c.l.b16 %v994
        %v1767 = vunpack.c.l.b16 %v995
        %v1768 = vunpack.c.l.b16 %v996
        %v1769 = vunpack.c.l.b16 %v997
        %v1770 = vunpack.c.l.b16 %v998
        %v1771 = vunpack.c.l.b16 %v999
        %v1772 = vunpack.c.l.b16 %v1000
        %v1773 = vunpack.c.l.b16 %v1001
        %v1774 = vunpack.c.l.b16 %v1002
        %v1775 = vunpack.c.l.b16 %v1003
        %v1776 = vunpack.c.l.b16 %v1004
        %v1777 = vunpack.c.l.b16 %v1005
        %v1778 = vunpack.c.l.b16 %v1006
        %v1779 = vunpack.c.l.b16 %v1007
        %v1780 = vunpack.c.l.b16 %v1008
        %v1781 = vunpack.c.l.b16 %v1009
        %v1782 = vunpack.c.l.b16 %v1010
        %v1783 = vunpack.c.l.b16 %v1011
        %v1784 = vunpack.c.l.b16 %v1012
        %v1785 = vunpack.c.l.b16 %v1013
        %v1786 = vunpack.c.l.b16 %v1014
        %v1787 = vunpack.c.l.b16 %v1015
        %v1788 = vunpack.c.l.b16 %v1016
        %v1789 = vunpack.c.l.b16 %v1017
        %v1790 = vunpack.c.l.b16 %v1018
        %v1791 = vunpack.c.l.b16 %v1019
        %v1792 = vunpack.c.l.b16 %v1020
        %v1793 = vunpack.c.l.b16 %v1021
        %v1794 = vunpack.c.l.b16 %v1022
        %v1795 = vunpack.c.l.b16 %v1023
        %v1796 = vunpack.c.l.b16 %v1024
        %v1797 = vunpack.c.l.b16 %v1025
        %v1798 = vunpack.c.l.b16 %v1026
        %v1799 = vunpack.c.l.b16 %v1027
        %v1800 = vunpack.c.l.b16 %v1028
        %v1801 = vunpack.c.l.b16 %v1029
        %v1802 = vunpack.c.l.b16 %v1030
        %v1803 = vunpack.c.l.b16 %v1031
        %v1804 = vunpack.c.l.b16 %v1032
        %v1805 = vunpack.c.l.b16 %v1033
        %v1806 = vunpack.c.l.b16 %v1034
        %v1807 = vunpack.c.l.b16 %v1035
        %v1808 = vunpack.c.l.b16 %v1036
        %v1809 = vunpack.c.l.b16 %v1037
        %v1810 = vunpack.c.l.b16 %v1038
        %v1811 = vunpack.c.l.b16 %v1039
        %v1812 = vunpack.c.l.b16 %v1040
        %v1813 = vunpack.c.l.b16 %v1041
        %v1814 = vunpack.c.l.b16 %v1042
        %v1815 = vunpack.c.l.b16 %v1043
        %v1816 = vunpack.c.l.b16 %v1044
        %v1817 = vunpack.c.l.b16 %v1045
        %v1818 = vunpack.c.l.b16 %v1046
        %v1819 = vunpack.c.l.b16 %v1047
        %v1820 = vunpack.c.l.b16 %v1048
        %v1821 = vunpack.c.l.b16 %v1049
        %v1822 = vunpack.c.l.b16 %v1050
        %v1823 = vunpack.c.l.b16 %v1051
        %v1824 = vunpack.c.l.b16 %v1052
        %v1825 = vunpack.c.l.b16 %v1053
        %v1826 = vunpack.c.l.b16 %v1054
        %v1827 = vunpack.c.l.b16 %v1055
        %v1828 = vunpack.c.l.b16 %v1056
        %v1829 = vunpack.c.l.b16 %v1057
        %v1830 = vunpack.c.l.b16 %v1058
        %v1831 = vunpack.c.l.b16 %v1059
        %v1832 = vunpack.c.l.b16 %v1060
        %v1833 = vunpack.c.l.b16 %v1061
        %v1834 = vunpack.c.l.b16 %v1062
        %v1835 = vunpack.c.l.b16 %v1063
        %v1836 = vunpack.c.l.b16 %v1064
        %v1837 = vunpack.c.l.b16 %v1065
        %v1838 = vunpack.c.l.b16 %v1066
        %v1839 = vunpack.c.l.b16 %v1067
        %v1840 = vunpack.c.l.b16 %v1068
        %v1841 = vunpack.c.l.b16 %v1069
        %v1842 = vunpack.c.l.b16 %v1070
        %v1843 = vunpack.c.l.b16 %v1071
        %v1844 = vunpack.c.l.b16 %v1072
        %v1845 = vunpack.c.l.b16 %v1073
        %v1846 = vunpack.c.l.b16 %v1074
        %v1847 = vunpack.c.l.b16 %v1075
        %v1848 = vunpack.c.l.b16 %v1076
        %v1849 = vunpack.c.l.b16 %v1077
        %v1850 = vunpack.c.l.b16 %v1078
        %v1851 = vunpack.c.l.b16 %v1079
        %v1852 = vunpack.c.l.b16 %v1080
        %v1853 = vunpack.c.l.b16 %v1081
        %v1854 = vunpack.c.l.b16 %v1082
        %v1855 = vunpack.c.l.b16 %v1083
        %v1856 = vunpack.c.l.b16 %v1084
        %v1857 = vunpack.c.l.b16 %v1085
        %v1858 = vunpack.c.l.b16 %v1086
        %v1859 = vunpack.c.l.b16 %v1087
        %v1860 = vunpack.c.l.b16 %v1088
        %v1861 = vunpack.c.l.b16 %v1089
        %v1862 = vunpack.c.l.b16 %v1090
        %v1863 = vunpack.c.l.b16 %v1091
        %v1864 = vunpack.c.l.b16 %v1092
        %v1865 = vunpack.c.l.b16 %v1093
        %v1866 = vunpack.c.l.b16 %v1094
        %v1867 = vunpack.c.l.b16 %v1095
        %v1868 = vunpack.c.l.b16 %v1096
        %v1869 = vunpack.c.l.b16 %v1097
        %v1870 = vunpack.c.l.b16 %v1098
        %v1871 = vunpack.c.l.b16 %v1099
        %v1872 = vunpack.c.l.b16 %v1100
        %v1873 = vunpack.c.l.b16 %v1101
        %v1874 = vunpack.c.l.b16 %v1102
        %v1875 = vunpack.c.l.b16 %v1103
        %v1876 = vunpack.c.l.b16 %v1104
        %v1877 = vunpack.c.l.b16 %v1105
        %v1878 = vunpack.c.l.b16 %v1106
        %v1879 = vunpack.c.l.b16 %v1107
        %v1880 = vunpack.c.l.b16 %v1108
        %v1881 = vunpack.c.l.b16 %v1109
        %v1882 = vunpack.c.l.b16 %v1110
        %v1883 = vunpack.c.l.b16 %v1111
        %v1884 = vunpack.c.l.b16 %v1112
        %v1885 = vunpack.c.l.b16 %v1113
        %v1886 = vunpack.c.l.b16 %v1114
        %v1887 = vunpack.c.l.b16 %v1115
        %v1888 = vunpack.c.l.b16 %v1116
        %v1889 = vunpack.c.l.b16 %v1117
        %v1890 = vunpack.c.l.b16 %v1118
        %v1891 = vunpack.c.l.b16 %v1119
        %v1892 = vunpack.c.l.b16 %v1120
        %v1893 = vunpack.c.l.b16 %v1121
        %v1894 = vunpack.c.l.b16 %v1122
        %v1895 = vunpack.c.l.b16 %v1123
        %v1896 = vunpack.c.l.b16 %v1124
        %v1897 = vunpack.c.l.b16 %v1125
        %v1898 = vunpack.c.l.b16 %v1126
        %v1899 = vunpack.c.l.b16 %v1127
        %v1900 = vunpack.c.l.b16 %v1128
        %v1901 = vunpack.c.l.b16 %v1129
        %v1902 = vunpack.c.l.b16 %v1130
        %v1903 = vunpack.c.l.b16 %v1131
        %v1904 = vunpack.c.l.b16 %v1132
        %v1905 = vunpack.c.l.b16 %v1133
        %v1906 = vunpack.c.l.b16 %v1134
        %v1907 = vunpack.c.l.b16 %v1135
        %v1908 = vunpack.c.l.b16 %v1136
        %v1909 = vunpack.c.l.b16 %v1137
        %v1910 = vunpack.c.l.b16 %v1138
        %v1911 = vunpack.c.l.b16 %v1139
        %v1912 = vunpack.c.l.b16 %v1140
        %v1913 = vunpack.c.l.b16 %v1141
        %v1914 = vunpack.c.l.b16 %v1142
        %v1915 = vunpack.c.l.b16 %v1143
        %v1916 = vunpack.c.l.b16 %v1144
        %v1917 = vunpack.c.l.b16 %v1145
        %v1918 = vunpack.c.l.b16 %v1146
        %v1919 = vunpack.c.l.b16 %v1147
        %v1920 = vunpack.c.l.b16 %v1148
        %v1921 = vunpack.c.l.b16 %v1149
        %v1922 = vunpack.c.l.b16 %v1150
        %v1923 = vunpack.c.l.b16 %v1151
        %v1924 = vunpack.c.l.b16 %v1152
        %v1925 = vunpack.c.l.b16 %v1153
        %v1926 = vunpack.c.l.b16 %v1154
        %v1927 = vunpack.c.l.b16 %v1155
        %v1928 = vunpack.c.l.b16 %v1156
        %v1929 = vunpack.c.l.b16 %v1157
        %v1930 = vunpack.c.l.b16 %v1158
        %v1931 = vunpack.c.l.b16 %v1159
        %v1932 = vunpack.c.l.b16 %v1160
        %v1933 = vunpack.c.l.b16 %v1161
        %v1934 = vunpack.c.l.b16 %v1162
        %v1935 = vunpack.c.l.b16 %v1163
        %v1936 = vunpack.c.l.b16 %v1164
        %v1937 = vunpack.c.l.b16 %v1165
        %v1938 = vunpack.c.l.b16 %v1166
        %v1939 = vunpack.c.l.b16 %v1167
        %v1940 = vunpack.c.l.b16 %v1168
        %v1941 = vunpack.c.l.b16 %v1169
        %v1942 = vunpack.c.l.b16 %v1170
        %v1943 = vunpack.c.l.b16 %v1171
        %v1944 = vunpack.c.l.b16 %v1172
        %v1945 = vunpack.c.l.b16 %v1173
        %v1946 = vunpack.c.l.b16 %v1174
        %v1947 = vunpack.c.l.b16 %v1175
        %v1948 = vunpack.c.l.b16 %v1176
        %v1949 = vunpack.c.l.b16 %v1177
        %v1950 = vunpack.c.l.b16 %v1178
        %v1951 = vunpack.c.l.b16 %v1179
        %v1952 = vunpack.c.l.b16 %v1180
        %v1953 = vunpack.c.l.b16 %v1181
        %v1954 = vunpack.c.l.b16 %v1182
        %v1955 = vunpack.c.l.b16 %v1183
        %v1956 = vunpack.c.l.b16 %v1184
        %v1957 = vunpack.c.l.b16 %v1185
        %v1958 = vunpack.c.l.b16 %v1186
        %v1959 = vunpack.c.l.b16 %v1187
        %v1960 = vunpack.c.l.b16 %v1188
        %v1961 = vunpack.c.l.b16 %v1189
        %v1962 = vunpack.c.l.b16 %v1190
        %v1963 = vunpack.c.l.b16 %v1191
        %v1964 = vunpack.c.l.b16 %v1192
        %v1965 = vunpack.c.l.b16 %v1193
        %v1966 = vunpack.c.l.b16 %v1194
        %v1967 = vunpack.c.l.b16 %v1195
        %v1968 = vunpack.c.l.b16 %v1196
        %v1969 = vunpack.c.l.b16 %v1197
        %v1970 = vunpack.c.l.b16 %v1198
        %v1971 = vunpack.c.l.b16 %v1199
        %v1972 = vunpack.c.l.b16 %v1200
        %v1973 = vunpack.c.l.b16 %v1201
        %v1974 = vunpack.c.l.b16 %v1202
        %v1975 = vunpack.c.l.b16 %v1203
        %v1976 = vunpack.c.l.b16 %v1204
        %v1977 = vunpack.c.l.b16 %v1205
        %v1978 = vunpack.c.l.b16 %v1206
        %v1979 = vunpack.c.l.b16 %v1207
        %v1980 = vunpack.c.l.b16 %v1208
        %v1981 = vunpack.c.l.b16 %v1209
        %v1982 = vunpack.c.l.b16 %v1210
        %v1983 = vunpack.c.l.b16 %v1211
        %v1984 = vunpack.c.l.b16 %v1212
        %v1985 = vunpack.c.l.b16 %v1213
        %v1986 = vunpack.c.l.b16 %v1214
        %v1987 = vunpack.c.l.b16 %v1215
        %v1988 = vunpack.c.l.b16 %v1216
        %v1989 = vunpack.c.l.b16 %v1217
        %v1990 = vunpack.c.l.b16 %v1218
        %v1991 = vunpack.c.l.b16 %v1219
        %v1992 = vunpack.c.l.b16 %v1220
        %v1993 = vunpack.c.l.b16 %v1221
        %v1994 = vunpack.c.l.b16 %v1222
        %v1995 = vunpack.c.l.b16 %v1223
        %v1996 = vunpack.c.l.b16 %v1224
        %v1997 = vunpack.c.l.b16 %v1225
        %v1998 = vunpack.c.l.b16 %v1226
        %v1999 = vunpack.c.l.b16 %v1227
        %v2000 = vunpack.c.l.b16 %v1228
        %v2001 = vunpack.c.l.b16 %v1229
        %v2002 = vunpack.c.l.b16 %v1230
        %v2003 = vunpack.c.l.b16 %v1231
        %v2004 = vunpack.c.l.b16 %v1232
        %v2005 = vunpack.c.l.b16 %v1233
        %v2006 = vunpack.c.l.b16 %v1234
        %v2007 = vunpack.c.l.b16 %v1235
        %v2008 = vunpack.c.l.b16 %v1236
        %v2009 = vunpack.c.l.b16 %v1237
        %v2010 = vunpack.c.l.b16 %v1238
        %v2011 = vunpack.c.l.b16 %v1239
        %v2012 = vunpack.c.l.b16 %v1240
        %v2013 = vunpack.c.l.b16 %v1241
        %v2014 = vunpack.c.l.b16 %v1242
        %v2015 = vunpack.c.l.b16 %v1243
        %v2016 = vunpack.c.l.b16 %v1244
        %v2017 = vunpack.c.l.b16 %v1245
        %v2018 = vunpack.c.l.b16 %v1246
        %v2019 = vunpack.c.l.b16 %v1247
        %v2020 = vunpack.c.l.b16 %v1248
        %v2021 = vunpack.c.l.b16 %v1249
        %v2022 = vunpack.c.l.b16 %v1250
        %v2023 = vunpack.c.l.b16 %v1251
        %v2024 = vunpack.c.l.b16 %v1252
        %v2025 = vunpack.c.l.b16 %v1253
        %v2026 = vunpack.c.l.b16 %v1254
        %v2027 = vunpack.c.l.b16 %v1255
        %v2028 = vunpack.c.l.b16 %v1256
        %v2029 = vunpack.c.l.b16 %v1257
        %v2030 = vunpack.c.l.b16 %v1258
        %v2031 = vunpack.c.l.b16 %v1259
        %v2032 = vunpack.c.l.b16 %v1260
        %v2033 = vunpack.c.l.b16 %v1261
        %v2034 = vunpack.c.l.b16 %v1262
        %v2035 = vunpack.c.l.b16 %v1263
        %v2036 = vunpack.c.l.b16 %v1264
        %v2037 = vunpack.c.l.b16 %v1265
        %v2038 = vunpack.c.l.b16 %v1266
        %v2039 = vunpack.c.l.b16 %v1267
        %v2040 = vunpack.c.l.b16 %v1268
        %v2041 = vunpack.c.l.b16 %v1269
        %v2042 = vunpack.c.l.b16 %v1270
        %v2043 = vunpack.c.l.b16 %v1271
        %v2044 = vunpack.c.l.b16 %v1272
        %v2045 = vunpack.c.l.b16 %v1273
        %v2046 = vunpack.c.l.b16 %v1274
        %v2047 = vunpack.c.l.b16 %v1275
        %v2048 = vunpack.c.l.b16 %v1276
        %v2049 = vunpack.c.l.b16 %v1277
        %v2050 = vunpack.c.l.b16 %v1278
        %v2051 = vunpack.c.l.b16 %v1279
        %v2052 = vunpack.c.l.b16 %v1280
        %v2053 = vunpack.c.l.b16 %v1281
        %v2054 = vunpack.c.l.b16 %v1282
        %v2055 = vunpack.c.l.b16 %v1283
        %v2056 = vunpack.c.l.b16 %v1284
        %v2057 = vpack.c.b16 %v1674, %v1673
        %v2058 = vpack.c.b16 %v1676, %v1675
        %v2059 = vpack.c.b16 %v1678, %v1677
        %v2060 = vpack.c.b16 %v1680, %v1679
        %v2061 = vpack.c.b16 %v1682, %v1681
        %v2062 = vpack.c.b16 %v1684, %v1683
        %v2063 = vpack.c.b16 %v1686, %v1685
        %v2064 = vpack.c.b16 %v1688, %v1687
        %v2065 = vpack.c.b16 %v1690, %v1689
        %v2066 = vpack.c.b16 %v1692, %v1691
        %v2067 = vpack.c.b16 %v1694, %v1693
        %v2068 = vpack.c.b16 %v1696, %v1695
        %v2069 = vpack.c.b16 %v1698, %v1697
        %v2070 = vpack.c.b16 %v1700, %v1699
        %v2071 = vpack.c.b16 %v1702, %v1701
        %v2072 = vpack.c.b16 %v1704, %v1703
        %v2073 = vpack.c.b16 %v1706, %v1705
        %v2074 = vpack.c.b16 %v1708, %v1707
        %v2075 = vpack.c.b16 %v1710, %v1709
        %v2076 = vpack.c.b16 %v1712, %v1711
        %v2077 = vpack.c.b16 %v1714, %v1713
        %v2078 = vpack.c.b16 %v1716, %v1715
        %v2079 = vpack.c.b16 %v1718, %v1717
        %v2080 = vpack.c.b16 %v1720, %v1719
        %v2081 = vpack.c.b16 %v1722, %v1721
        %v2082 = vpack.c.b16 %v1724, %v1723
        %v2083 = vpack.c.b16 %v1726, %v1725
        %v2084 = vpack.c.b16 %v1728, %v1727
        %v2085 = vpack.c.b16 %v1730, %v1729
        %v2086 = vpack.c.b16 %v1732, %v1731
        %v2087 = vpack.c.b16 %v1734, %v1733
        %v2088 = vpack.c.b16 %v1736, %v1735
        %v2089 = vpack.c.b16 %v1738, %v1737
        %v2090 = vpack.c.b16 %v1740, %v1739
        %v2091 = vpack.c.b16 %v1742, %v1741
        %v2092 = vpack.c.b16 %v1744, %v1743
        %v2093 = vpack.c.b16 %v1746, %v1745
        %v2094 = vpack.c.b16 %v1748, %v1747
        %v2095 = vpack.c.b16 %v1750, %v1749
        %v2096 = vpack.c.b16 %v1752, %v1751
        %v2097 = vpack.c.b16 %v1754, %v1753
        %v2098 = vpack.c.b16 %v1756, %v1755
        %v2099 = vpack.c.b16 %v1758, %v1757
        %v2100 = vpack.c.b16 %v1760, %v1759
        %v2101 = vpack.c.b16 %v1762, %v1761
        %v2102 = vpack.c.b16 %v1764, %v1763
        %v2103 = vpack.c.b16 %v1766, %v1765
        %v2104 = vpack.c.b16 %v1768, %v1767
        %v2105 = vpack.c.b16 %v1770, %v1769
        %v2106 = vpack.c.b16 %v1772, %v1771
        %v2107 = vpack.c.b16 %v1774, %v1773
        %v2108 = vpack.c.b16 %v1776, %v1775
        %v2109 = vpack.c.b16 %v1778, %v1777
        %v2110 = vpack.c.b16 %v1780, %v1779
        %v2111 = vpack.c.b16 %v1782, %v1781
        %v2112 = vpack.c.b16 %v1784, %v1783
        %v2113 = vpack.c.b16 %v1786, %v1785
        %v2114 = vpack.c.b16 %v1788, %v1787
        %v2115 = vpack.c.b16 %v1790, %v1789
        %v2116 = vpack.c.b16 %v1792, %v1791
        %v2117 = vpack.c.b16 %v1794, %v1793
        %v2118 = vpack.c.b16 %v1796, %v1795
        %v2119 = vpack.c.b16 %v1798, %v1797
        %v2120 = vpack.c.b16 %v1800, %v1799
        %v2121 = vpack.c.b16 %v1802, %v1801
        %v2122 = vpack.c.b16 %v1804, %v1803
        %v2123 = vpack.c.b16 %v1806, %v1805
        %v2124 = vpack.c.b16 %v1808, %v1807
        %v2125 = vpack.c.b16 %v1810, %v1809
        %v2126 = vpack.c.b16 %v1812, %v1811
        %v2127 = vpack.c.b16 %v1814, %v1813
        %v2128 = vpack.c.b16 %v1816, %v1815
        %v2129 = vpack.c.b16 %v1818, %v1817
        %v2130 = vpack.c.b16 %v1820, %v1819
        %v2131 = vpack.c.b16 %v1822, %v1821
        %v2132 = vpack.c.b16 %v1824, %v1823
        %v2133 = vpack.c.b16 %v1826, %v1825
        %v2134 = vpack.c.b16 %v1828, %v1827
        %v2135 = vpack.c.b16 %v1830, %v1829
        %v2136 = vpack.c.b16 %v1832, %v1831
        %v2137 = vpack.c.b16 %v1834, %v1833
        %v2138 = vpack.c.b16 %v1836, %v1835
        %v2139 = vpack.c.b16 %v1838, %v1837
        %v2140 = vpack.c.b16 %v1840, %v1839
        %v2141 = vpack.c.b16 %v1842, %v1841
        %v2142 = vpack.c.b16 %v1844, %v1843
        %v2143 = vpack.c.b16 %v1846, %v1845
        %v2144 = vpack.c.b16 %v1848, %v1847
        %v2145 = vpack.c.b16 %v1850, %v1849
        %v2146 = vpack.c.b16 %v1852, %v1851
        %v2147 = vpack.c.b16 %v1854, %v1853
        %v2148 = vpack.c.b16 %v1856, %v1855
        %v2149 = vpack.c.b16 %v1858, %v1857
        %v2150 = vpack.c.b16 %v1860, %v1859
        %v2151 = vpack.c.b16 %v1862, %v1861
        %v2152 = vpack.c.b16 %v1864, %v1863
        %v2153 = vpack.c.b16 %v1866, %v1865
        %v2154 = vpack.c.b16 %v1868, %v1867
        %v2155 = vpack.c.b16 %v1870, %v1869
        %v2156 = vpack.c.b16 %v1872, %v1871
        %v2157 = vpack.c.b16 %v1874, %v1873
        %v2158 = vpack.c.b16 %v1876, %v1875
        %v2159 = vpack.c.b16 %v1878, %v1877
        %v2160 = vpack.c.b16 %v1880, %v1879
        %v2161 = vpack.c.b16 %v1882, %v1881
        %v2162 = vpack.c.b16 %v1884, %v1883
        %v2163 = vpack.c.b16 %v1886, %v1885
        %v2164 = vpack.c.b16 %v1888, %v1887
        %v2165 = vpack.c.b16 %v1890, %v1889
        %v2166 = vpack.c.b16 %v1892, %v1891
        %v2167 = vpack.c.b16 %v1894, %v1893
        %v2168 = vpack.c.b16 %v1896, %v1895
        %v2169 = vpack.c.b16 %v1898, %v1897
        %v2170 = vpack.c.b16 %v1900, %v1899
        %v2171 = vpack.c.b16 %v1902, %v1901
        %v2172 = vpack.c.b16 %v1904, %v1903
        %v2173 = vpack.c.b16 %v1906, %v1905
        %v2174 = vpack.c.b16 %v1908, %v1907
        %v2175 = vpack.c.b16 %v1910, %v1909
        %v2176 = vpack.c.b16 %v1912, %v1911
        %v2177 = vpack.c.b16 %v1914, %v1913
        %v2178 = vpack.c.b16 %v1916, %v1915
        %v2179 = vpack.c.b16 %v1918, %v1917
        %v2180 = vpack.c.b16 %v1920, %v1919
        %v2181 = vpack.c.b16 %v1922, %v1921
        %v2182 = vpack.c.b16 %v1924, %v1923
        %v2183 = vpack.c.b16 %v1926, %v1925
        %v2184 = vpack.c.b16 %v1928, %v1927
        %v2185 = vpack.c.b16 %v1930, %v1929
        %v2186 = vpack.c.b16 %v1932, %v1931
        %v2187 = vpack.c.b16 %v1934, %v1933
        %v2188 = vpack.c.b16 %v1936, %v1935
        %v2189 = vpack.c.b16 %v1938, %v1937
        %v2190 = vpack.c.b16 %v1940, %v1939
        %v2191 = vpack.c.b16 %v1942, %v1941
        %v2192 = vpack.c.b16 %v1944, %v1943
        %v2193 = vpack.c.b16 %v1946, %v1945
        %v2194 = vpack.c.b16 %v1948, %v1947
        %v2195 = vpack.c.b16 %v1950, %v1949
        %v2196 = vpack.c.b16 %v1952, %v1951
        %v2197 = vpack.c.b16 %v1954, %v1953
        %v2198 = vpack.c.b16 %v1956, %v1955
        %v2199 = vpack.c.b16 %v1958, %v1957
        %v2200 = vpack.c.b16 %v1960, %v1959
        %v2201 = vpack.c.b16 %v1962, %v1961
        %v2202 = vpack.c.b16 %v1964, %v1963
        %v2203 = vpack.c.b16 %v1966, %v1965
        %v2204 = vpack.c.b16 %v1968, %v1967
        %v2205 = vpack.c.b16 %v1970, %v1969
        %v2206 = vpack.c.b16 %v1972, %v1971
        %v2207 = vpack.c.b16 %v1974, %v1973
        %v2208 = vpack.c.b16 %v1976, %v1975
        %v2209 = vpack.c.b16 %v1978, %v1977
        %v2210 = vpack.c.b16 %v1980, %v1979
        %v2211 = vpack.c.b16 %v1982, %v1981
        %v2212 = vpack.c.b16 %v1984, %v1983
        %v2213 = vpack.c.b16 %v1986, %v1985
        %v2214 = vpack.c.b16 %v1988, %v1987
        %v2215 = vpack.c.b16 %v1990, %v1989
        %v2216 = vpack.c.b16 %v1992, %v1991
        %v2217 = vpack.c.b16 %v1994, %v1993
        %v2218 = vpack.c.b16 %v1996, %v1995
        %v2219 = vpack.c.b16 %v1998, %v1997
        %v2220 = vpack.c.b16 %v2000, %v1999
        %v2221 = vpack.c.b16 %v2002, %v2001
        %v2222 = vpack.c.b16 %v2004, %v2003
        %v2223 = vpack.c.b16 %v2006, %v2005
        %v2224 = vpack.c.b16 %v2008, %v2007
        %v2225 = vpack.c.b16 %v2010, %v2009
        %v2226 = vpack.c.b16 %v2012, %v2011
        %v2227 = vpack.c.b16 %v2014, %v2013
        %v2228 = vpack.c.b16 %v2016, %v2015
        %v2229 = vpack.c.b16 %v2018, %v2017
        %v2230 = vpack.c.b16 %v2020, %v2019
        %v2231 = vpack.c.b16 %v2022, %v2021
        %v2232 = vpack.c.b16 %v2024, %v2023
        %v2233 = vpack.c.b16 %v2026, %v2025
        %v2234 = vpack.c.b16 %v2028, %v2027
        %v2235 = vpack.c.b16 %v2030, %v2029
        %v2236 = vpack.c.b16 %v2032, %v2031
        %v2237 = vpack.c.b16 %v2034, %v2033
        %v2238 = vpack.c.b16 %v2036, %v2035
        %v2239 = vpack.c.b16 %v2038, %v2037
        %v2240 = vpack.c.b16 %v2040, %v2039
        %v2241 = vpack.c.b16 %v2042, %v2041
        %v2242 = vpack.c.b16 %v2044, %v2043
        %v2243 = vpack.c.b16 %v2046, %v2045
        %v2244 = vpack.c.b16 %v2048, %v2047
        %v2245 = vpack.c.b16 %v2050, %v2049
        %v2246 = vpack.c.b16 %v2052, %v2051
        %v2247 = vpack.c.b16 %v2054, %v2053
        %v2248 = vpack.c.b16 %v2056, %v2055
        %2441 = vmatpush.bf16.msra.mxu0 %v2064
        %2442 = vmatpush.bf16.msra.mxu0 %v2063
        %2443 = vmatpush.bf16.msra.mxu0 %v2062
        %2444 = vmatpush.bf16.msra.mxu0 %v2061
        %2445 = vmatpush.bf16.msra.mxu0 %v2060
        %2446 = vmatpush.bf16.msra.mxu0 %v2059
        %2447 = vmatpush.bf16.msra.mxu0 %v2058
        %2448 = vmatpush.bf16.msra.mxu0 %v2057
        %2449 = vmatmul.bf16.gmra.mxu0 %v709
        %v2450 = vpop.f32.mrf.mxu0
        %v2451 = vadd.f32 %v1287, %v2450
        %v2452 = vpop.f32.mrf.mxu0
        %v2453 = vadd.f32 %v1287, %v2452
        %2454 = vmatmul.bf16.gmra.mxu0 %v733
        %v2455 = vpop.f32.mrf.mxu0
        %v2456 = vadd.f32 %v1287, %v2455
        %v2457 = vpop.f32.mrf.mxu0
        %v2458 = vadd.f32 %v1287, %v2457
        %2459 = vmatmul.bf16.gmra.mxu0 %v757
        %v2460 = vpop.f32.mrf.mxu0
        %v2461 = vadd.f32 %v1287, %v2460
        %v2462 = vpop.f32.mrf.mxu0
        %v2463 = vadd.f32 %v1287, %v2462
        %2464 = vmatmul.bf16.gmra.mxu0 %v781
        %v2465 = vpop.f32.mrf.mxu0
        %v2466 = vadd.f32 %v1287, %v2465
        %v2467 = vpop.f32.mrf.mxu0
        %v2468 = vadd.f32 %v1287, %v2467
        %2469 = vmatmul.bf16.gmra.mxu0 %v805
        %v2470 = vpop.f32.mrf.mxu0
        %v2471 = vadd.f32 %v1287, %v2470
        %v2472 = vpop.f32.mrf.mxu0
        %v2473 = vadd.f32 %v1287, %v2472
        %2474 = vmatmul.bf16.gmra.mxu0 %v829
        %v2475 = vpop.f32.mrf.mxu0
        %v2476 = vadd.f32 %v1287, %v2475
        %v2477 = vpop.f32.mrf.mxu0
        %v2478 = vadd.f32 %v1287, %v2477
        %2479 = vmatmul.bf16.gmra.mxu0 %v853
        %v2480 = vpop.f32.mrf.mxu0
        %v2481 = vadd.f32 %v1287, %v2480
        %v2482 = vpop.f32.mrf.mxu0
        %v2483 = vadd.f32 %v1287, %v2482
        %2484 = vmatmul.bf16.gmra.mxu0 %v877
        %v2485 = vpop.f32.mrf.mxu0
        %v2486 = vadd.f32 %v1287, %v2485
        %v2487 = vpop.f32.mrf.mxu0
        %v2488 = vadd.f32 %v1287, %v2487
        %2489 = vdwg.mxu0
        %2490 = vmatpush.bf16.msra.mxu0 %v2072
        %2491 = vmatpush.bf16.msra.mxu0 %v2071
        %2492 = vmatpush.bf16.msra.mxu0 %v2070
        %2493 = vmatpush.bf16.msra.mxu0 %v2069
        %2494 = vmatpush.bf16.msra.mxu0 %v2068
        %2495 = vmatpush.bf16.msra.mxu0 %v2067
        %2496 = vmatpush.bf16.msra.mxu0 %v2066
        %2497 = vmatpush.bf16.msra.mxu0 %v2065
        %2498 = vmatmul.bf16.gmra.mxu0 %v710
        %v2499 = vpop.f32.mrf.mxu0
        %v2500 = vadd.f32 %v2451, %v2499
        %v2501 = vpop.f32.mrf.mxu0
        %v2502 = vadd.f32 %v2453, %v2501
        %2503 = vmatmul.bf16.gmra.mxu0 %v734
        %v2504 = vpop.f32.mrf.mxu0
        %v2505 = vadd.f32 %v2456, %v2504
        %v2506 = vpop.f32.mrf.mxu0
        %v2507 = vadd.f32 %v2458, %v2506
        %2508 = vmatmul.bf16.gmra.mxu0 %v758
        %v2509 = vpop.f32.mrf.mxu0
        %v2510 = vadd.f32 %v2461, %v2509
        %v2511 = vpop.f32.mrf.mxu0
        %v2512 = vadd.f32 %v2463, %v2511
        %2513 = vmatmul.bf16.gmra.mxu0 %v782
        %v2514 = vpop.f32.mrf.mxu0
        %v2515 = vadd.f32 %v2466, %v2514
        %v2516 = vpop.f32.mrf.mxu0
        %v2517 = vadd.f32 %v2468, %v2516
        %2518 = vmatmul.bf16.gmra.mxu0 %v806
        %v2519 = vpop.f32.mrf.mxu0
        %v2520 = vadd.f32 %v2471, %v2519
        %v2521 = vpop.f32.mrf.mxu0
        %v2522 = vadd.f32 %v2473, %v2521
        %2523 = vmatmul.bf16.gmra.mxu0 %v830
        %v2524 = vpop.f32.mrf.mxu0
        %v2525 = vadd.f32 %v2476, %v2524
        %v2526 = vpop.f32.mrf.mxu0
        %v2527 = vadd.f32 %v2478, %v2526
        %2528 = vmatmul.bf16.gmra.mxu0 %v854
        %v2529 = vpop.f32.mrf.mxu0
        %v2530 = vadd.f32 %v2481, %v2529
        %v2531 = vpop.f32.mrf.mxu0
        %v2532 = vadd.f32 %v2483, %v2531
        %2533 = vmatmul.bf16.gmra.mxu0 %v878
        %v2534 = vpop.f32.mrf.mxu0
        %v2535 = vadd.f32 %v2486, %v2534
        %v2536 = vpop.f32.mrf.mxu0
        %v2537 = vadd.f32 %v2488, %v2536
        %2538 = vdwg.mxu0
        %2539 = vmatpush.bf16.msra.mxu0 %v2080
        %2540 = vmatpush.bf16.msra.mxu0 %v2079
        %2541 = vmatpush.bf16.msra.mxu0 %v2078
        %2542 = vmatpush.bf16.msra.mxu0 %v2077
        %2543 = vmatpush.bf16.msra.mxu0 %v2076
        %2544 = vmatpush.bf16.msra.mxu0 %v2075
        %2545 = vmatpush.bf16.msra.mxu0 %v2074
        %2546 = vmatpush.bf16.msra.mxu0 %v2073
        %2547 = vmatmul.bf16.gmra.mxu0 %v711
        %v2548 = vpop.f32.mrf.mxu0
        %v2549 = vadd.f32 %v2500, %v2548
        %v2550 = vpop.f32.mrf.mxu0
        %v2551 = vadd.f32 %v2502, %v2550
        %2552 = vmatmul.bf16.gmra.mxu0 %v735
        %v2553 = vpop.f32.mrf.mxu0
        %v2554 = vadd.f32 %v2505, %v2553
        %v2555 = vpop.f32.mrf.mxu0
        %v2556 = vadd.f32 %v2507, %v2555
        %2557 = vmatmul.bf16.gmra.mxu0 %v759
        %v2558 = vpop.f32.mrf.mxu0
        %v2559 = vadd.f32 %v2510, %v2558
        %v2560 = vpop.f32.mrf.mxu0
        %v2561 = vadd.f32 %v2512, %v2560
        %2562 = vmatmul.bf16.gmra.mxu0 %v783
        %v2563 = vpop.f32.mrf.mxu0
        %v2564 = vadd.f32 %v2515, %v2563
        %v2565 = vpop.f32.mrf.mxu0
        %v2566 = vadd.f32 %v2517, %v2565
        %2567 = vmatmul.bf16.gmra.mxu0 %v807
        %v2568 = vpop.f32.mrf.mxu0
        %v2569 = vadd.f32 %v2520, %v2568
        %v2570 = vpop.f32.mrf.mxu0
        %v2571 = vadd.f32 %v2522, %v2570
        %2572 = vmatmul.bf16.gmra.mxu0 %v831
        %v2573 = vpop.f32.mrf.mxu0
        %v2574 = vadd.f32 %v2525, %v2573
        %v2575 = vpop.f32.mrf.mxu0
        %v2576 = vadd.f32 %v2527, %v2575
        %2577 = vmatmul.bf16.gmra.mxu0 %v855
        %v2578 = vpop.f32.mrf.mxu0
        %v2579 = vadd.f32 %v2530, %v2578
        %v2580 = vpop.f32.mrf.mxu0
        %v2581 = vadd.f32 %v2532, %v2580
        %2582 = vmatmul.bf16.gmra.mxu0 %v879
        %v2583 = vpop.f32.mrf.mxu0
        %v2584 = vadd.f32 %v2535, %v2583
        %v2585 = vpop.f32.mrf.mxu0
        %v2586 = vadd.f32 %v2537, %v2585
        %2587 = vdwg.mxu0
        %2588 = vmatpush.bf16.msra.mxu0 %v2088
        %2589 = vmatpush.bf16.msra.mxu0 %v2087
        %2590 = vmatpush.bf16.msra.mxu0 %v2086
        %2591 = vmatpush.bf16.msra.mxu0 %v2085
        %2592 = vmatpush.bf16.msra.mxu0 %v2084
        %2593 = vmatpush.bf16.msra.mxu0 %v2083
        %2594 = vmatpush.bf16.msra.mxu0 %v2082
        %2595 = vmatpush.bf16.msra.mxu0 %v2081
        %2596 = vmatmul.bf16.gmra.mxu0 %v712
        %v2597 = vpop.f32.mrf.mxu0
        %v2598 = vadd.f32 %v2549, %v2597
        %v2599 = vpop.f32.mrf.mxu0
        %v2600 = vadd.f32 %v2551, %v2599
        %2601 = vmatmul.bf16.gmra.mxu0 %v736
        %v2602 = vpop.f32.mrf.mxu0
        %v2603 = vadd.f32 %v2554, %v2602
        %v2604 = vpop.f32.mrf.mxu0
        %v2605 = vadd.f32 %v2556, %v2604
        %2606 = vmatmul.bf16.gmra.mxu0 %v760
        %v2607 = vpop.f32.mrf.mxu0
        %v2608 = vadd.f32 %v2559, %v2607
        %v2609 = vpop.f32.mrf.mxu0
        %v2610 = vadd.f32 %v2561, %v2609
        %2611 = vmatmul.bf16.gmra.mxu0 %v784
        %v2612 = vpop.f32.mrf.mxu0
        %v2613 = vadd.f32 %v2564, %v2612
        %v2614 = vpop.f32.mrf.mxu0
        %v2615 = vadd.f32 %v2566, %v2614
        %2616 = vmatmul.bf16.gmra.mxu0 %v808
        %v2617 = vpop.f32.mrf.mxu0
        %v2618 = vadd.f32 %v2569, %v2617
        %v2619 = vpop.f32.mrf.mxu0
        %v2620 = vadd.f32 %v2571, %v2619
        %2621 = vmatmul.bf16.gmra.mxu0 %v832
        %v2622 = vpop.f32.mrf.mxu0
        %v2623 = vadd.f32 %v2574, %v2622
        %v2624 = vpop.f32.mrf.mxu0
        %v2625 = vadd.f32 %v2576, %v2624
        %2626 = vmatmul.bf16.gmra.mxu0 %v856
        %v2627 = vpop.f32.mrf.mxu0
        %v2628 = vadd.f32 %v2579, %v2627
        %v2629 = vpop.f32.mrf.mxu0
        %v2630 = vadd.f32 %v2581, %v2629
        %2631 = vmatmul.bf16.gmra.mxu0 %v880
        %v2632 = vpop.f32.mrf.mxu0
        %v2633 = vadd.f32 %v2584, %v2632
        %v2634 = vpop.f32.mrf.mxu0
        %v2635 = vadd.f32 %v2586, %v2634
        %2636 = vdwg.mxu0
        %2637 = vmatpush.bf16.msra.mxu0 %v2096
        %2638 = vmatpush.bf16.msra.mxu0 %v2095
        %2639 = vmatpush.bf16.msra.mxu0 %v2094
        %2640 = vmatpush.bf16.msra.mxu0 %v2093
        %2641 = vmatpush.bf16.msra.mxu0 %v2092
        %2642 = vmatpush.bf16.msra.mxu0 %v2091
        %2643 = vmatpush.bf16.msra.mxu0 %v2090
        %2644 = vmatpush.bf16.msra.mxu0 %v2089
        %2645 = vmatmul.bf16.gmra.mxu0 %v713
        %v2646 = vpop.f32.mrf.mxu0
        %v2647 = vadd.f32 %v2598, %v2646
        %v2648 = vpop.f32.mrf.mxu0
        %v2649 = vadd.f32 %v2600, %v2648
        %2650 = vmatmul.bf16.gmra.mxu0 %v737
        %v2651 = vpop.f32.mrf.mxu0
        %v2652 = vadd.f32 %v2603, %v2651
        %v2653 = vpop.f32.mrf.mxu0
        %v2654 = vadd.f32 %v2605, %v2653
        %2655 = vmatmul.bf16.gmra.mxu0 %v761
        %v2656 = vpop.f32.mrf.mxu0
        %v2657 = vadd.f32 %v2608, %v2656
        %v2658 = vpop.f32.mrf.mxu0
        %v2659 = vadd.f32 %v2610, %v2658
        %2660 = vmatmul.bf16.gmra.mxu0 %v785
        %v2661 = vpop.f32.mrf.mxu0
        %v2662 = vadd.f32 %v2613, %v2661
        %v2663 = vpop.f32.mrf.mxu0
        %v2664 = vadd.f32 %v2615, %v2663
        %2665 = vmatmul.bf16.gmra.mxu0 %v809
        %v2666 = vpop.f32.mrf.mxu0
        %v2667 = vadd.f32 %v2618, %v2666
        %v2668 = vpop.f32.mrf.mxu0
        %v2669 = vadd.f32 %v2620, %v2668
        %2670 = vmatmul.bf16.gmra.mxu0 %v833
        %v2671 = vpop.f32.mrf.mxu0
        %v2672 = vadd.f32 %v2623, %v2671
        %v2673 = vpop.f32.mrf.mxu0
        %v2674 = vadd.f32 %v2625, %v2673
        %2675 = vmatmul.bf16.gmra.mxu0 %v857
        %v2676 = vpop.f32.mrf.mxu0
        %v2677 = vadd.f32 %v2628, %v2676
        %v2678 = vpop.f32.mrf.mxu0
        %v2679 = vadd.f32 %v2630, %v2678
        %2680 = vmatmul.bf16.gmra.mxu0 %v881
        %v2681 = vpop.f32.mrf.mxu0
        %v2682 = vadd.f32 %v2633, %v2681
        %v2683 = vpop.f32.mrf.mxu0
        %v2684 = vadd.f32 %v2635, %v2683
        %2685 = vdwg.mxu0
        %2686 = vmatpush.bf16.msra.mxu0 %v2104
        %2687 = vmatpush.bf16.msra.mxu0 %v2103
        %2688 = vmatpush.bf16.msra.mxu0 %v2102
        %2689 = vmatpush.bf16.msra.mxu0 %v2101
        %2690 = vmatpush.bf16.msra.mxu0 %v2100
        %2691 = vmatpush.bf16.msra.mxu0 %v2099
        %2692 = vmatpush.bf16.msra.mxu0 %v2098
        %2693 = vmatpush.bf16.msra.mxu0 %v2097
        %2694 = vmatmul.bf16.gmra.mxu0 %v714
        %v2695 = vpop.f32.mrf.mxu0
        %v2696 = vadd.f32 %v2647, %v2695
        %v2697 = vpop.f32.mrf.mxu0
        %v2698 = vadd.f32 %v2649, %v2697
        %2699 = vmatmul.bf16.gmra.mxu0 %v738
        %v2700 = vpop.f32.mrf.mxu0
        %v2701 = vadd.f32 %v2652, %v2700
        %v2702 = vpop.f32.mrf.mxu0
        %v2703 = vadd.f32 %v2654, %v2702
        %2704 = vmatmul.bf16.gmra.mxu0 %v762
        %v2705 = vpop.f32.mrf.mxu0
        %v2706 = vadd.f32 %v2657, %v2705
        %v2707 = vpop.f32.mrf.mxu0
        %v2708 = vadd.f32 %v2659, %v2707
        %2709 = vmatmul.bf16.gmra.mxu0 %v786
        %v2710 = vpop.f32.mrf.mxu0
        %v2711 = vadd.f32 %v2662, %v2710
        %v2712 = vpop.f32.mrf.mxu0
        %v2713 = vadd.f32 %v2664, %v2712
        %2714 = vmatmul.bf16.gmra.mxu0 %v810
        %v2715 = vpop.f32.mrf.mxu0
        %v2716 = vadd.f32 %v2667, %v2715
        %v2717 = vpop.f32.mrf.mxu0
        %v2718 = vadd.f32 %v2669, %v2717
        %2719 = vmatmul.bf16.gmra.mxu0 %v834
        %v2720 = vpop.f32.mrf.mxu0
        %v2721 = vadd.f32 %v2672, %v2720
        %v2722 = vpop.f32.mrf.mxu0
        %v2723 = vadd.f32 %v2674, %v2722
        %2724 = vmatmul.bf16.gmra.mxu0 %v858
        %v2725 = vpop.f32.mrf.mxu0
        %v2726 = vadd.f32 %v2677, %v2725
        %v2727 = vpop.f32.mrf.mxu0
        %v2728 = vadd.f32 %v2679, %v2727
        %2729 = vmatmul.bf16.gmra.mxu0 %v882
        %v2730 = vpop.f32.mrf.mxu0
        %v2731 = vadd.f32 %v2682, %v2730
        %v2732 = vpop.f32.mrf.mxu0
        %v2733 = vadd.f32 %v2684, %v2732
        %2734 = vdwg.mxu0
        %2735 = vmatpush.bf16.msra.mxu0 %v2112
        %2736 = vmatpush.bf16.msra.mxu0 %v2111
        %2737 = vmatpush.bf16.msra.mxu0 %v2110
        %2738 = vmatpush.bf16.msra.mxu0 %v2109
        %2739 = vmatpush.bf16.msra.mxu0 %v2108
        %2740 = vmatpush.bf16.msra.mxu0 %v2107
        %2741 = vmatpush.bf16.msra.mxu0 %v2106
        %2742 = vmatpush.bf16.msra.mxu0 %v2105
        %2743 = vmatmul.bf16.gmra.mxu0 %v715
        %v2744 = vpop.f32.mrf.mxu0
        %v2745 = vadd.f32 %v2696, %v2744
        %v2746 = vpop.f32.mrf.mxu0
        %v2747 = vadd.f32 %v2698, %v2746
        %2748 = vmatmul.bf16.gmra.mxu0 %v739
        %v2749 = vpop.f32.mrf.mxu0
        %v2750 = vadd.f32 %v2701, %v2749
        %v2751 = vpop.f32.mrf.mxu0
        %v2752 = vadd.f32 %v2703, %v2751
        %2753 = vmatmul.bf16.gmra.mxu0 %v763
        %v2754 = vpop.f32.mrf.mxu0
        %v2755 = vadd.f32 %v2706, %v2754
        %v2756 = vpop.f32.mrf.mxu0
        %v2757 = vadd.f32 %v2708, %v2756
        %2758 = vmatmul.bf16.gmra.mxu0 %v787
        %v2759 = vpop.f32.mrf.mxu0
        %v2760 = vadd.f32 %v2711, %v2759
        %v2761 = vpop.f32.mrf.mxu0
        %v2762 = vadd.f32 %v2713, %v2761
        %2763 = vmatmul.bf16.gmra.mxu0 %v811
        %v2764 = vpop.f32.mrf.mxu0
        %v2765 = vadd.f32 %v2716, %v2764
        %v2766 = vpop.f32.mrf.mxu0
        %v2767 = vadd.f32 %v2718, %v2766
        %2768 = vmatmul.bf16.gmra.mxu0 %v835
        %v2769 = vpop.f32.mrf.mxu0
        %v2770 = vadd.f32 %v2721, %v2769
        %v2771 = vpop.f32.mrf.mxu0
        %v2772 = vadd.f32 %v2723, %v2771
        %2773 = vmatmul.bf16.gmra.mxu0 %v859
        %v2774 = vpop.f32.mrf.mxu0
        %v2775 = vadd.f32 %v2726, %v2774
        %v2776 = vpop.f32.mrf.mxu0
        %v2777 = vadd.f32 %v2728, %v2776
        %2778 = vmatmul.bf16.gmra.mxu0 %v883
        %v2779 = vpop.f32.mrf.mxu0
        %v2780 = vadd.f32 %v2731, %v2779
        %v2781 = vpop.f32.mrf.mxu0
        %v2782 = vadd.f32 %v2733, %v2781
        %2783 = vdwg.mxu0
        %2784 = vmatpush.bf16.msra.mxu0 %v2120
        %2785 = vmatpush.bf16.msra.mxu0 %v2119
        %2786 = vmatpush.bf16.msra.mxu0 %v2118
        %2787 = vmatpush.bf16.msra.mxu0 %v2117
        %2788 = vmatpush.bf16.msra.mxu0 %v2116
        %2789 = vmatpush.bf16.msra.mxu0 %v2115
        %2790 = vmatpush.bf16.msra.mxu0 %v2114
        %2791 = vmatpush.bf16.msra.mxu0 %v2113
        %2792 = vmatmul.bf16.gmra.mxu0 %v716
        %v2793 = vpop.f32.mrf.mxu0
        %v2794 = vadd.f32 %v2745, %v2793
        %v2795 = vpop.f32.mrf.mxu0
        %v2796 = vadd.f32 %v2747, %v2795
        %2797 = vmatmul.bf16.gmra.mxu0 %v740
        %v2798 = vpop.f32.mrf.mxu0
        %v2799 = vadd.f32 %v2750, %v2798
        %v2800 = vpop.f32.mrf.mxu0
        %v2801 = vadd.f32 %v2752, %v2800
        %2802 = vmatmul.bf16.gmra.mxu0 %v764
        %v2803 = vpop.f32.mrf.mxu0
        %v2804 = vadd.f32 %v2755, %v2803
        %v2805 = vpop.f32.mrf.mxu0
        %v2806 = vadd.f32 %v2757, %v2805
        %2807 = vmatmul.bf16.gmra.mxu0 %v788
        %v2808 = vpop.f32.mrf.mxu0
        %v2809 = vadd.f32 %v2760, %v2808
        %v2810 = vpop.f32.mrf.mxu0
        %v2811 = vadd.f32 %v2762, %v2810
        %2812 = vmatmul.bf16.gmra.mxu0 %v812
        %v2813 = vpop.f32.mrf.mxu0
        %v2814 = vadd.f32 %v2765, %v2813
        %v2815 = vpop.f32.mrf.mxu0
        %v2816 = vadd.f32 %v2767, %v2815
        %2817 = vmatmul.bf16.gmra.mxu0 %v836
        %v2818 = vpop.f32.mrf.mxu0
        %v2819 = vadd.f32 %v2770, %v2818
        %v2820 = vpop.f32.mrf.mxu0
        %v2821 = vadd.f32 %v2772, %v2820
        %2822 = vmatmul.bf16.gmra.mxu0 %v860
        %v2823 = vpop.f32.mrf.mxu0
        %v2824 = vadd.f32 %v2775, %v2823
        %v2825 = vpop.f32.mrf.mxu0
        %v2826 = vadd.f32 %v2777, %v2825
        %2827 = vmatmul.bf16.gmra.mxu0 %v884
        %v2828 = vpop.f32.mrf.mxu0
        %v2829 = vadd.f32 %v2780, %v2828
        %v2830 = vpop.f32.mrf.mxu0
        %v2831 = vadd.f32 %v2782, %v2830
        %2832 = vdwg.mxu0
        %2833 = vmatpush.bf16.msra.mxu0 %v2128
        %2834 = vmatpush.bf16.msra.mxu0 %v2127
        %2835 = vmatpush.bf16.msra.mxu0 %v2126
        %2836 = vmatpush.bf16.msra.mxu0 %v2125
        %2837 = vmatpush.bf16.msra.mxu0 %v2124
        %2838 = vmatpush.bf16.msra.mxu0 %v2123
        %2839 = vmatpush.bf16.msra.mxu0 %v2122
        %2840 = vmatpush.bf16.msra.mxu0 %v2121
        %2841 = vmatmul.bf16.gmra.mxu0 %v717
        %v2842 = vpop.f32.mrf.mxu0
        %v2843 = vadd.f32 %v2794, %v2842
        %v2844 = vpop.f32.mrf.mxu0
        %v2845 = vadd.f32 %v2796, %v2844
        %2846 = vmatmul.bf16.gmra.mxu0 %v741
        %v2847 = vpop.f32.mrf.mxu0
        %v2848 = vadd.f32 %v2799, %v2847
        %v2849 = vpop.f32.mrf.mxu0
        %v2850 = vadd.f32 %v2801, %v2849
        %2851 = vmatmul.bf16.gmra.mxu0 %v765
        %v2852 = vpop.f32.mrf.mxu0
        %v2853 = vadd.f32 %v2804, %v2852
        %v2854 = vpop.f32.mrf.mxu0
        %v2855 = vadd.f32 %v2806, %v2854
        %2856 = vmatmul.bf16.gmra.mxu0 %v789
        %v2857 = vpop.f32.mrf.mxu0
        %v2858 = vadd.f32 %v2809, %v2857
        %v2859 = vpop.f32.mrf.mxu0
        %v2860 = vadd.f32 %v2811, %v2859
        %2861 = vmatmul.bf16.gmra.mxu0 %v813
        %v2862 = vpop.f32.mrf.mxu0
        %v2863 = vadd.f32 %v2814, %v2862
        %v2864 = vpop.f32.mrf.mxu0
        %v2865 = vadd.f32 %v2816, %v2864
        %2866 = vmatmul.bf16.gmra.mxu0 %v837
        %v2867 = vpop.f32.mrf.mxu0
        %v2868 = vadd.f32 %v2819, %v2867
        %v2869 = vpop.f32.mrf.mxu0
        %v2870 = vadd.f32 %v2821, %v2869
        %2871 = vmatmul.bf16.gmra.mxu0 %v861
        %v2872 = vpop.f32.mrf.mxu0
        %v2873 = vadd.f32 %v2824, %v2872
        %v2874 = vpop.f32.mrf.mxu0
        %v2875 = vadd.f32 %v2826, %v2874
        %2876 = vmatmul.bf16.gmra.mxu0 %v885
        %v2877 = vpop.f32.mrf.mxu0
        %v2878 = vadd.f32 %v2829, %v2877
        %v2879 = vpop.f32.mrf.mxu0
        %v2880 = vadd.f32 %v2831, %v2879
        %2881 = vdwg.mxu0
        %2882 = vmatpush.bf16.msra.mxu0 %v2136
        %2883 = vmatpush.bf16.msra.mxu0 %v2135
        %2884 = vmatpush.bf16.msra.mxu0 %v2134
        %2885 = vmatpush.bf16.msra.mxu0 %v2133
        %2886 = vmatpush.bf16.msra.mxu0 %v2132
        %2887 = vmatpush.bf16.msra.mxu0 %v2131
        %2888 = vmatpush.bf16.msra.mxu0 %v2130
        %2889 = vmatpush.bf16.msra.mxu0 %v2129
        %2890 = vmatmul.bf16.gmra.mxu0 %v718
        %v2891 = vpop.f32.mrf.mxu0
        %v2892 = vadd.f32 %v2843, %v2891
        %v2893 = vpop.f32.mrf.mxu0
        %v2894 = vadd.f32 %v2845, %v2893
        %2895 = vmatmul.bf16.gmra.mxu0 %v742
        %v2896 = vpop.f32.mrf.mxu0
        %v2897 = vadd.f32 %v2848, %v2896
        %v2898 = vpop.f32.mrf.mxu0
        %v2899 = vadd.f32 %v2850, %v2898
        %2900 = vmatmul.bf16.gmra.mxu0 %v766
        %v2901 = vpop.f32.mrf.mxu0
        %v2902 = vadd.f32 %v2853, %v2901
        %v2903 = vpop.f32.mrf.mxu0
        %v2904 = vadd.f32 %v2855, %v2903
        %2905 = vmatmul.bf16.gmra.mxu0 %v790
        %v2906 = vpop.f32.mrf.mxu0
        %v2907 = vadd.f32 %v2858, %v2906
        %v2908 = vpop.f32.mrf.mxu0
        %v2909 = vadd.f32 %v2860, %v2908
        %2910 = vmatmul.bf16.gmra.mxu0 %v814
        %v2911 = vpop.f32.mrf.mxu0
        %v2912 = vadd.f32 %v2863, %v2911
        %v2913 = vpop.f32.mrf.mxu0
        %v2914 = vadd.f32 %v2865, %v2913
        %2915 = vmatmul.bf16.gmra.mxu0 %v838
        %v2916 = vpop.f32.mrf.mxu0
        %v2917 = vadd.f32 %v2868, %v2916
        %v2918 = vpop.f32.mrf.mxu0
        %v2919 = vadd.f32 %v2870, %v2918
        %2920 = vmatmul.bf16.gmra.mxu0 %v862
        %v2921 = vpop.f32.mrf.mxu0
        %v2922 = vadd.f32 %v2873, %v2921
        %v2923 = vpop.f32.mrf.mxu0
        %v2924 = vadd.f32 %v2875, %v2923
        %2925 = vmatmul.bf16.gmra.mxu0 %v886
        %v2926 = vpop.f32.mrf.mxu0
        %v2927 = vadd.f32 %v2878, %v2926
        %v2928 = vpop.f32.mrf.mxu0
        %v2929 = vadd.f32 %v2880, %v2928
        %2930 = vdwg.mxu0
        %2931 = vmatpush.bf16.msra.mxu0 %v2144
        %2932 = vmatpush.bf16.msra.mxu0 %v2143
        %2933 = vmatpush.bf16.msra.mxu0 %v2142
        %2934 = vmatpush.bf16.msra.mxu0 %v2141
        %2935 = vmatpush.bf16.msra.mxu0 %v2140
        %2936 = vmatpush.bf16.msra.mxu0 %v2139
        %2937 = vmatpush.bf16.msra.mxu0 %v2138
        %2938 = vmatpush.bf16.msra.mxu0 %v2137
        %2939 = vmatmul.bf16.gmra.mxu0 %v719
        %v2940 = vpop.f32.mrf.mxu0
        %v2941 = vadd.f32 %v2892, %v2940
        %v2942 = vpop.f32.mrf.mxu0
        %v2943 = vadd.f32 %v2894, %v2942
        %2944 = vmatmul.bf16.gmra.mxu0 %v743
        %v2945 = vpop.f32.mrf.mxu0
        %v2946 = vadd.f32 %v2897, %v2945
        %v2947 = vpop.f32.mrf.mxu0
        %v2948 = vadd.f32 %v2899, %v2947
        %2949 = vmatmul.bf16.gmra.mxu0 %v767
        %v2950 = vpop.f32.mrf.mxu0
        %v2951 = vadd.f32 %v2902, %v2950
        %v2952 = vpop.f32.mrf.mxu0
        %v2953 = vadd.f32 %v2904, %v2952
        %2954 = vmatmul.bf16.gmra.mxu0 %v791
        %v2955 = vpop.f32.mrf.mxu0
        %v2956 = vadd.f32 %v2907, %v2955
        %v2957 = vpop.f32.mrf.mxu0
        %v2958 = vadd.f32 %v2909, %v2957
        %2959 = vmatmul.bf16.gmra.mxu0 %v815
        %v2960 = vpop.f32.mrf.mxu0
        %v2961 = vadd.f32 %v2912, %v2960
        %v2962 = vpop.f32.mrf.mxu0
        %v2963 = vadd.f32 %v2914, %v2962
        %2964 = vmatmul.bf16.gmra.mxu0 %v839
        %v2965 = vpop.f32.mrf.mxu0
        %v2966 = vadd.f32 %v2917, %v2965
        %v2967 = vpop.f32.mrf.mxu0
        %v2968 = vadd.f32 %v2919, %v2967
        %2969 = vmatmul.bf16.gmra.mxu0 %v863
        %v2970 = vpop.f32.mrf.mxu0
        %v2971 = vadd.f32 %v2922, %v2970
        %v2972 = vpop.f32.mrf.mxu0
        %v2973 = vadd.f32 %v2924, %v2972
        %2974 = vmatmul.bf16.gmra.mxu0 %v887
        %v2975 = vpop.f32.mrf.mxu0
        %v2976 = vadd.f32 %v2927, %v2975
        %v2977 = vpop.f32.mrf.mxu0
        %v2978 = vadd.f32 %v2929, %v2977
        %2979 = vdwg.mxu0
        %2980 = vmatpush.bf16.msra.mxu0 %v2152
        %2981 = vmatpush.bf16.msra.mxu0 %v2151
        %2982 = vmatpush.bf16.msra.mxu0 %v2150
        %2983 = vmatpush.bf16.msra.mxu0 %v2149
        %2984 = vmatpush.bf16.msra.mxu0 %v2148
        %2985 = vmatpush.bf16.msra.mxu0 %v2147
        %2986 = vmatpush.bf16.msra.mxu0 %v2146
        %2987 = vmatpush.bf16.msra.mxu0 %v2145
        %2988 = vmatmul.bf16.gmra.mxu0 %v720
        %v2989 = vpop.f32.mrf.mxu0
        %v2990 = vadd.f32 %v2941, %v2989
        %v2991 = vpop.f32.mrf.mxu0
        %v2992 = vadd.f32 %v2943, %v2991
        %2993 = vmatmul.bf16.gmra.mxu0 %v744
        %v2994 = vpop.f32.mrf.mxu0
        %v2995 = vadd.f32 %v2946, %v2994
        %v2996 = vpop.f32.mrf.mxu0
        %v2997 = vadd.f32 %v2948, %v2996
        %2998 = vmatmul.bf16.gmra.mxu0 %v768
        %v2999 = vpop.f32.mrf.mxu0
        %v3000 = vadd.f32 %v2951, %v2999
        %v3001 = vpop.f32.mrf.mxu0
        %v3002 = vadd.f32 %v2953, %v3001
        %3003 = vmatmul.bf16.gmra.mxu0 %v792
        %v3004 = vpop.f32.mrf.mxu0
        %v3005 = vadd.f32 %v2956, %v3004
        %v3006 = vpop.f32.mrf.mxu0
        %v3007 = vadd.f32 %v2958, %v3006
        %3008 = vmatmul.bf16.gmra.mxu0 %v816
        %v3009 = vpop.f32.mrf.mxu0
        %v3010 = vadd.f32 %v2961, %v3009
        %v3011 = vpop.f32.mrf.mxu0
        %v3012 = vadd.f32 %v2963, %v3011
        %3013 = vmatmul.bf16.gmra.mxu0 %v840
        %v3014 = vpop.f32.mrf.mxu0
        %v3015 = vadd.f32 %v2966, %v3014
        %v3016 = vpop.f32.mrf.mxu0
        %v3017 = vadd.f32 %v2968, %v3016
        %3018 = vmatmul.bf16.gmra.mxu0 %v864
        %v3019 = vpop.f32.mrf.mxu0
        %v3020 = vadd.f32 %v2971, %v3019
        %v3021 = vpop.f32.mrf.mxu0
        %v3022 = vadd.f32 %v2973, %v3021
        %3023 = vmatmul.bf16.gmra.mxu0 %v888
        %v3024 = vpop.f32.mrf.mxu0
        %v3025 = vadd.f32 %v2976, %v3024
        %v3026 = vpop.f32.mrf.mxu0
        %v3027 = vadd.f32 %v2978, %v3026
        %3028 = vdwg.mxu0
        %3029 = vmatpush.bf16.msra.mxu0 %v2160
        %3030 = vmatpush.bf16.msra.mxu0 %v2159
        %3031 = vmatpush.bf16.msra.mxu0 %v2158
        %3032 = vmatpush.bf16.msra.mxu0 %v2157
        %3033 = vmatpush.bf16.msra.mxu0 %v2156
        %3034 = vmatpush.bf16.msra.mxu0 %v2155
        %3035 = vmatpush.bf16.msra.mxu0 %v2154
        %3036 = vmatpush.bf16.msra.mxu0 %v2153
        %3037 = vmatmul.bf16.gmra.mxu0 %v721
        %v3038 = vpop.f32.mrf.mxu0
        %v3039 = vadd.f32 %v2990, %v3038
        %v3040 = vpop.f32.mrf.mxu0
        %v3041 = vadd.f32 %v2992, %v3040
        %3042 = vmatmul.bf16.gmra.mxu0 %v745
        %v3043 = vpop.f32.mrf.mxu0
        %v3044 = vadd.f32 %v2995, %v3043
        %v3045 = vpop.f32.mrf.mxu0
        %v3046 = vadd.f32 %v2997, %v3045
        %3047 = vmatmul.bf16.gmra.mxu0 %v769
        %v3048 = vpop.f32.mrf.mxu0
        %v3049 = vadd.f32 %v3000, %v3048
        %v3050 = vpop.f32.mrf.mxu0
        %v3051 = vadd.f32 %v3002, %v3050
        %3052 = vmatmul.bf16.gmra.mxu0 %v793
        %v3053 = vpop.f32.mrf.mxu0
        %v3054 = vadd.f32 %v3005, %v3053
        %v3055 = vpop.f32.mrf.mxu0
        %v3056 = vadd.f32 %v3007, %v3055
        %3057 = vmatmul.bf16.gmra.mxu0 %v817
        %v3058 = vpop.f32.mrf.mxu0
        %v3059 = vadd.f32 %v3010, %v3058
        %v3060 = vpop.f32.mrf.mxu0
        %v3061 = vadd.f32 %v3012, %v3060
        %3062 = vmatmul.bf16.gmra.mxu0 %v841
        %v3063 = vpop.f32.mrf.mxu0
        %v3064 = vadd.f32 %v3015, %v3063
        %v3065 = vpop.f32.mrf.mxu0
        %v3066 = vadd.f32 %v3017, %v3065
        %3067 = vmatmul.bf16.gmra.mxu0 %v865
        %v3068 = vpop.f32.mrf.mxu0
        %v3069 = vadd.f32 %v3020, %v3068
        %v3070 = vpop.f32.mrf.mxu0
        %v3071 = vadd.f32 %v3022, %v3070
        %3072 = vmatmul.bf16.gmra.mxu0 %v889
        %v3073 = vpop.f32.mrf.mxu0
        %v3074 = vadd.f32 %v3025, %v3073
        %v3075 = vpop.f32.mrf.mxu0
        %v3076 = vadd.f32 %v3027, %v3075
        %3077 = vdwg.mxu0
        %3078 = vmatpush.bf16.msra.mxu0 %v2168
        %3079 = vmatpush.bf16.msra.mxu0 %v2167
        %3080 = vmatpush.bf16.msra.mxu0 %v2166
        %3081 = vmatpush.bf16.msra.mxu0 %v2165
        %3082 = vmatpush.bf16.msra.mxu0 %v2164
        %3083 = vmatpush.bf16.msra.mxu0 %v2163
        %3084 = vmatpush.bf16.msra.mxu0 %v2162
        %3085 = vmatpush.bf16.msra.mxu0 %v2161
        %3086 = vmatmul.bf16.gmra.mxu0 %v722
        %v3087 = vpop.f32.mrf.mxu0
        %v3088 = vadd.f32 %v3039, %v3087
        %v3089 = vpop.f32.mrf.mxu0
        %v3090 = vadd.f32 %v3041, %v3089
        %3091 = vmatmul.bf16.gmra.mxu0 %v746
        %v3092 = vpop.f32.mrf.mxu0
        %v3093 = vadd.f32 %v3044, %v3092
        %v3094 = vpop.f32.mrf.mxu0
        %v3095 = vadd.f32 %v3046, %v3094
        %3096 = vmatmul.bf16.gmra.mxu0 %v770
        %v3097 = vpop.f32.mrf.mxu0
        %v3098 = vadd.f32 %v3049, %v3097
        %v3099 = vpop.f32.mrf.mxu0
        %v3100 = vadd.f32 %v3051, %v3099
        %3101 = vmatmul.bf16.gmra.mxu0 %v794
        %v3102 = vpop.f32.mrf.mxu0
        %v3103 = vadd.f32 %v3054, %v3102
        %v3104 = vpop.f32.mrf.mxu0
        %v3105 = vadd.f32 %v3056, %v3104
        %3106 = vmatmul.bf16.gmra.mxu0 %v818
        %v3107 = vpop.f32.mrf.mxu0
        %v3108 = vadd.f32 %v3059, %v3107
        %v3109 = vpop.f32.mrf.mxu0
        %v3110 = vadd.f32 %v3061, %v3109
        %3111 = vmatmul.bf16.gmra.mxu0 %v842
        %v3112 = vpop.f32.mrf.mxu0
        %v3113 = vadd.f32 %v3064, %v3112
        %v3114 = vpop.f32.mrf.mxu0
        %v3115 = vadd.f32 %v3066, %v3114
        %3116 = vmatmul.bf16.gmra.mxu0 %v866
        %v3117 = vpop.f32.mrf.mxu0
        %v3118 = vadd.f32 %v3069, %v3117
        %v3119 = vpop.f32.mrf.mxu0
        %v3120 = vadd.f32 %v3071, %v3119
        %3121 = vmatmul.bf16.gmra.mxu0 %v890
        %v3122 = vpop.f32.mrf.mxu0
        %v3123 = vadd.f32 %v3074, %v3122
        %v3124 = vpop.f32.mrf.mxu0
        %v3125 = vadd.f32 %v3076, %v3124
        %3126 = vdwg.mxu0
        %3127 = vmatpush.bf16.msra.mxu0 %v2176
        %3128 = vmatpush.bf16.msra.mxu0 %v2175
        %3129 = vmatpush.bf16.msra.mxu0 %v2174
        %3130 = vmatpush.bf16.msra.mxu0 %v2173
        %3131 = vmatpush.bf16.msra.mxu0 %v2172
        %3132 = vmatpush.bf16.msra.mxu0 %v2171
        %3133 = vmatpush.bf16.msra.mxu0 %v2170
        %3134 = vmatpush.bf16.msra.mxu0 %v2169
        %3135 = vmatmul.bf16.gmra.mxu0 %v723
        %v3136 = vpop.f32.mrf.mxu0
        %v3137 = vadd.f32 %v3088, %v3136
        %v3138 = vpop.f32.mrf.mxu0
        %v3139 = vadd.f32 %v3090, %v3138
        %3140 = vmatmul.bf16.gmra.mxu0 %v747
        %v3141 = vpop.f32.mrf.mxu0
        %v3142 = vadd.f32 %v3093, %v3141
        %v3143 = vpop.f32.mrf.mxu0
        %v3144 = vadd.f32 %v3095, %v3143
        %3145 = vmatmul.bf16.gmra.mxu0 %v771
        %v3146 = vpop.f32.mrf.mxu0
        %v3147 = vadd.f32 %v3098, %v3146
        %v3148 = vpop.f32.mrf.mxu0
        %v3149 = vadd.f32 %v3100, %v3148
        %3150 = vmatmul.bf16.gmra.mxu0 %v795
        %v3151 = vpop.f32.mrf.mxu0
        %v3152 = vadd.f32 %v3103, %v3151
        %v3153 = vpop.f32.mrf.mxu0
        %v3154 = vadd.f32 %v3105, %v3153
        %3155 = vmatmul.bf16.gmra.mxu0 %v819
        %v3156 = vpop.f32.mrf.mxu0
        %v3157 = vadd.f32 %v3108, %v3156
        %v3158 = vpop.f32.mrf.mxu0
        %v3159 = vadd.f32 %v3110, %v3158
        %3160 = vmatmul.bf16.gmra.mxu0 %v843
        %v3161 = vpop.f32.mrf.mxu0
        %v3162 = vadd.f32 %v3113, %v3161
        %v3163 = vpop.f32.mrf.mxu0
        %v3164 = vadd.f32 %v3115, %v3163
        %3165 = vmatmul.bf16.gmra.mxu0 %v867
        %v3166 = vpop.f32.mrf.mxu0
        %v3167 = vadd.f32 %v3118, %v3166
        %v3168 = vpop.f32.mrf.mxu0
        %v3169 = vadd.f32 %v3120, %v3168
        %3170 = vmatmul.bf16.gmra.mxu0 %v891
        %v3171 = vpop.f32.mrf.mxu0
        %v3172 = vadd.f32 %v3123, %v3171
        %v3173 = vpop.f32.mrf.mxu0
        %v3174 = vadd.f32 %v3125, %v3173
        %3175 = vdwg.mxu0
        %3176 = vmatpush.bf16.msra.mxu0 %v2184
        %3177 = vmatpush.bf16.msra.mxu0 %v2183
        %3178 = vmatpush.bf16.msra.mxu0 %v2182
        %3179 = vmatpush.bf16.msra.mxu0 %v2181
        %3180 = vmatpush.bf16.msra.mxu0 %v2180
        %3181 = vmatpush.bf16.msra.mxu0 %v2179
        %3182 = vmatpush.bf16.msra.mxu0 %v2178
        %3183 = vmatpush.bf16.msra.mxu0 %v2177
        %3184 = vmatmul.bf16.gmra.mxu0 %v724
        %v3185 = vpop.f32.mrf.mxu0
        %v3186 = vadd.f32 %v3137, %v3185
        %v3187 = vpop.f32.mrf.mxu0
        %v3188 = vadd.f32 %v3139, %v3187
        %3189 = vmatmul.bf16.gmra.mxu0 %v748
        %v3190 = vpop.f32.mrf.mxu0
        %v3191 = vadd.f32 %v3142, %v3190
        %v3192 = vpop.f32.mrf.mxu0
        %v3193 = vadd.f32 %v3144, %v3192
        %3194 = vmatmul.bf16.gmra.mxu0 %v772
        %v3195 = vpop.f32.mrf.mxu0
        %v3196 = vadd.f32 %v3147, %v3195
        %v3197 = vpop.f32.mrf.mxu0
        %v3198 = vadd.f32 %v3149, %v3197
        %3199 = vmatmul.bf16.gmra.mxu0 %v796
        %v3200 = vpop.f32.mrf.mxu0
        %v3201 = vadd.f32 %v3152, %v3200
        %v3202 = vpop.f32.mrf.mxu0
        %v3203 = vadd.f32 %v3154, %v3202
        %3204 = vmatmul.bf16.gmra.mxu0 %v820
        %v3205 = vpop.f32.mrf.mxu0
        %v3206 = vadd.f32 %v3157, %v3205
        %v3207 = vpop.f32.mrf.mxu0
        %v3208 = vadd.f32 %v3159, %v3207
        %3209 = vmatmul.bf16.gmra.mxu0 %v844
        %v3210 = vpop.f32.mrf.mxu0
        %v3211 = vadd.f32 %v3162, %v3210
        %v3212 = vpop.f32.mrf.mxu0
        %v3213 = vadd.f32 %v3164, %v3212
        %3214 = vmatmul.bf16.gmra.mxu0 %v868
        %v3215 = vpop.f32.mrf.mxu0
        %v3216 = vadd.f32 %v3167, %v3215
        %v3217 = vpop.f32.mrf.mxu0
        %v3218 = vadd.f32 %v3169, %v3217
        %3219 = vmatmul.bf16.gmra.mxu0 %v892
        %v3220 = vpop.f32.mrf.mxu0
        %v3221 = vadd.f32 %v3172, %v3220
        %v3222 = vpop.f32.mrf.mxu0
        %v3223 = vadd.f32 %v3174, %v3222
        %3224 = vdwg.mxu0
        %3225 = vmatpush.bf16.msra.mxu0 %v2192
        %3226 = vmatpush.bf16.msra.mxu0 %v2191
        %3227 = vmatpush.bf16.msra.mxu0 %v2190
        %3228 = vmatpush.bf16.msra.mxu0 %v2189
        %3229 = vmatpush.bf16.msra.mxu0 %v2188
        %3230 = vmatpush.bf16.msra.mxu0 %v2187
        %3231 = vmatpush.bf16.msra.mxu0 %v2186
        %3232 = vmatpush.bf16.msra.mxu0 %v2185
        %3233 = vmatmul.bf16.gmra.mxu0 %v725
        %v3234 = vpop.f32.mrf.mxu0
        %v3235 = vadd.f32 %v3186, %v3234
        %v3236 = vpop.f32.mrf.mxu0
        %v3237 = vadd.f32 %v3188, %v3236
        %3238 = vmatmul.bf16.gmra.mxu0 %v749
        %v3239 = vpop.f32.mrf.mxu0
        %v3240 = vadd.f32 %v3191, %v3239
        %v3241 = vpop.f32.mrf.mxu0
        %v3242 = vadd.f32 %v3193, %v3241
        %3243 = vmatmul.bf16.gmra.mxu0 %v773
        %v3244 = vpop.f32.mrf.mxu0
        %v3245 = vadd.f32 %v3196, %v3244
        %v3246 = vpop.f32.mrf.mxu0
        %v3247 = vadd.f32 %v3198, %v3246
        %3248 = vmatmul.bf16.gmra.mxu0 %v797
        %v3249 = vpop.f32.mrf.mxu0
        %v3250 = vadd.f32 %v3201, %v3249
        %v3251 = vpop.f32.mrf.mxu0
        %v3252 = vadd.f32 %v3203, %v3251
        %3253 = vmatmul.bf16.gmra.mxu0 %v821
        %v3254 = vpop.f32.mrf.mxu0
        %v3255 = vadd.f32 %v3206, %v3254
        %v3256 = vpop.f32.mrf.mxu0
        %v3257 = vadd.f32 %v3208, %v3256
        %3258 = vmatmul.bf16.gmra.mxu0 %v845
        %v3259 = vpop.f32.mrf.mxu0
        %v3260 = vadd.f32 %v3211, %v3259
        %v3261 = vpop.f32.mrf.mxu0
        %v3262 = vadd.f32 %v3213, %v3261
        %3263 = vmatmul.bf16.gmra.mxu0 %v869
        %v3264 = vpop.f32.mrf.mxu0
        %v3265 = vadd.f32 %v3216, %v3264
        %v3266 = vpop.f32.mrf.mxu0
        %v3267 = vadd.f32 %v3218, %v3266
        %3268 = vmatmul.bf16.gmra.mxu0 %v893
        %v3269 = vpop.f32.mrf.mxu0
        %v3270 = vadd.f32 %v3221, %v3269
        %v3271 = vpop.f32.mrf.mxu0
        %v3272 = vadd.f32 %v3223, %v3271
        %3273 = vdwg.mxu0
        %3274 = vmatpush.bf16.msra.mxu0 %v2200
        %3275 = vmatpush.bf16.msra.mxu0 %v2199
        %3276 = vmatpush.bf16.msra.mxu0 %v2198
        %3277 = vmatpush.bf16.msra.mxu0 %v2197
        %3278 = vmatpush.bf16.msra.mxu0 %v2196
        %3279 = vmatpush.bf16.msra.mxu0 %v2195
        %3280 = vmatpush.bf16.msra.mxu0 %v2194
        %3281 = vmatpush.bf16.msra.mxu0 %v2193
        %3282 = vmatmul.bf16.gmra.mxu0 %v726
        %v3283 = vpop.f32.mrf.mxu0
        %v3284 = vadd.f32 %v3235, %v3283
        %v3285 = vpop.f32.mrf.mxu0
        %v3286 = vadd.f32 %v3237, %v3285
        %3287 = vmatmul.bf16.gmra.mxu0 %v750
        %v3288 = vpop.f32.mrf.mxu0
        %v3289 = vadd.f32 %v3240, %v3288
        %v3290 = vpop.f32.mrf.mxu0
        %v3291 = vadd.f32 %v3242, %v3290
        %3292 = vmatmul.bf16.gmra.mxu0 %v774
        %v3293 = vpop.f32.mrf.mxu0
        %v3294 = vadd.f32 %v3245, %v3293
        %v3295 = vpop.f32.mrf.mxu0
        %v3296 = vadd.f32 %v3247, %v3295
        %3297 = vmatmul.bf16.gmra.mxu0 %v798
        %v3298 = vpop.f32.mrf.mxu0
        %v3299 = vadd.f32 %v3250, %v3298
        %v3300 = vpop.f32.mrf.mxu0
        %v3301 = vadd.f32 %v3252, %v3300
        %3302 = vmatmul.bf16.gmra.mxu0 %v822
        %v3303 = vpop.f32.mrf.mxu0
        %v3304 = vadd.f32 %v3255, %v3303
        %v3305 = vpop.f32.mrf.mxu0
        %v3306 = vadd.f32 %v3257, %v3305
        %3307 = vmatmul.bf16.gmra.mxu0 %v846
        %v3308 = vpop.f32.mrf.mxu0
        %v3309 = vadd.f32 %v3260, %v3308
        %v3310 = vpop.f32.mrf.mxu0
        %v3311 = vadd.f32 %v3262, %v3310
        %3312 = vmatmul.bf16.gmra.mxu0 %v870
        %v3313 = vpop.f32.mrf.mxu0
        %v3314 = vadd.f32 %v3265, %v3313
        %v3315 = vpop.f32.mrf.mxu0
        %v3316 = vadd.f32 %v3267, %v3315
        %3317 = vmatmul.bf16.gmra.mxu0 %v894
        %v3318 = vpop.f32.mrf.mxu0
        %v3319 = vadd.f32 %v3270, %v3318
        %v3320 = vpop.f32.mrf.mxu0
        %v3321 = vadd.f32 %v3272, %v3320
        %3322 = vdwg.mxu0
        %3323 = vmatpush.bf16.msra.mxu0 %v2208
        %3324 = vmatpush.bf16.msra.mxu0 %v2207
        %3325 = vmatpush.bf16.msra.mxu0 %v2206
        %3326 = vmatpush.bf16.msra.mxu0 %v2205
        %3327 = vmatpush.bf16.msra.mxu0 %v2204
        %3328 = vmatpush.bf16.msra.mxu0 %v2203
        %3329 = vmatpush.bf16.msra.mxu0 %v2202
        %3330 = vmatpush.bf16.msra.mxu0 %v2201
        %3331 = vmatmul.bf16.gmra.mxu0 %v727
        %v3332 = vpop.f32.mrf.mxu0
        %v3333 = vadd.f32 %v3284, %v3332
        %v3334 = vpop.f32.mrf.mxu0
        %v3335 = vadd.f32 %v3286, %v3334
        %3336 = vmatmul.bf16.gmra.mxu0 %v751
        %v3337 = vpop.f32.mrf.mxu0
        %v3338 = vadd.f32 %v3289, %v3337
        %v3339 = vpop.f32.mrf.mxu0
        %v3340 = vadd.f32 %v3291, %v3339
        %3341 = vmatmul.bf16.gmra.mxu0 %v775
        %v3342 = vpop.f32.mrf.mxu0
        %v3343 = vadd.f32 %v3294, %v3342
        %v3344 = vpop.f32.mrf.mxu0
        %v3345 = vadd.f32 %v3296, %v3344
        %3346 = vmatmul.bf16.gmra.mxu0 %v799
        %v3347 = vpop.f32.mrf.mxu0
        %v3348 = vadd.f32 %v3299, %v3347
        %v3349 = vpop.f32.mrf.mxu0
        %v3350 = vadd.f32 %v3301, %v3349
        %3351 = vmatmul.bf16.gmra.mxu0 %v823
        %v3352 = vpop.f32.mrf.mxu0
        %v3353 = vadd.f32 %v3304, %v3352
        %v3354 = vpop.f32.mrf.mxu0
        %v3355 = vadd.f32 %v3306, %v3354
        %3356 = vmatmul.bf16.gmra.mxu0 %v847
        %v3357 = vpop.f32.mrf.mxu0
        %v3358 = vadd.f32 %v3309, %v3357
        %v3359 = vpop.f32.mrf.mxu0
        %v3360 = vadd.f32 %v3311, %v3359
        %3361 = vmatmul.bf16.gmra.mxu0 %v871
        %v3362 = vpop.f32.mrf.mxu0
        %v3363 = vadd.f32 %v3314, %v3362
        %v3364 = vpop.f32.mrf.mxu0
        %v3365 = vadd.f32 %v3316, %v3364
        %3366 = vmatmul.bf16.gmra.mxu0 %v895
        %v3367 = vpop.f32.mrf.mxu0
        %v3368 = vadd.f32 %v3319, %v3367
        %v3369 = vpop.f32.mrf.mxu0
        %v3370 = vadd.f32 %v3321, %v3369
        %3371 = vdwg.mxu0
        %3372 = vmatpush.bf16.msra.mxu0 %v2216
        %3373 = vmatpush.bf16.msra.mxu0 %v2215
        %3374 = vmatpush.bf16.msra.mxu0 %v2214
        %3375 = vmatpush.bf16.msra.mxu0 %v2213
        %3376 = vmatpush.bf16.msra.mxu0 %v2212
        %3377 = vmatpush.bf16.msra.mxu0 %v2211
        %3378 = vmatpush.bf16.msra.mxu0 %v2210
        %3379 = vmatpush.bf16.msra.mxu0 %v2209
        %3380 = vmatmul.bf16.gmra.mxu0 %v728
        %v3381 = vpop.f32.mrf.mxu0
        %v3382 = vadd.f32 %v3333, %v3381
        %v3383 = vpop.f32.mrf.mxu0
        %v3384 = vadd.f32 %v3335, %v3383
        %3385 = vmatmul.bf16.gmra.mxu0 %v752
        %v3386 = vpop.f32.mrf.mxu0
        %v3387 = vadd.f32 %v3338, %v3386
        %v3388 = vpop.f32.mrf.mxu0
        %v3389 = vadd.f32 %v3340, %v3388
        %3390 = vmatmul.bf16.gmra.mxu0 %v776
        %v3391 = vpop.f32.mrf.mxu0
        %v3392 = vadd.f32 %v3343, %v3391
        %v3393 = vpop.f32.mrf.mxu0
        %v3394 = vadd.f32 %v3345, %v3393
        %3395 = vmatmul.bf16.gmra.mxu0 %v800
        %v3396 = vpop.f32.mrf.mxu0
        %v3397 = vadd.f32 %v3348, %v3396
        %v3398 = vpop.f32.mrf.mxu0
        %v3399 = vadd.f32 %v3350, %v3398
        %3400 = vmatmul.bf16.gmra.mxu0 %v824
        %v3401 = vpop.f32.mrf.mxu0
        %v3402 = vadd.f32 %v3353, %v3401
        %v3403 = vpop.f32.mrf.mxu0
        %v3404 = vadd.f32 %v3355, %v3403
        %3405 = vmatmul.bf16.gmra.mxu0 %v848
        %v3406 = vpop.f32.mrf.mxu0
        %v3407 = vadd.f32 %v3358, %v3406
        %v3408 = vpop.f32.mrf.mxu0
        %v3409 = vadd.f32 %v3360, %v3408
        %3410 = vmatmul.bf16.gmra.mxu0 %v872
        %v3411 = vpop.f32.mrf.mxu0
        %v3412 = vadd.f32 %v3363, %v3411
        %v3413 = vpop.f32.mrf.mxu0
        %v3414 = vadd.f32 %v3365, %v3413
        %3415 = vmatmul.bf16.gmra.mxu0 %v896
        %v3416 = vpop.f32.mrf.mxu0
        %v3417 = vadd.f32 %v3368, %v3416
        %v3418 = vpop.f32.mrf.mxu0
        %v3419 = vadd.f32 %v3370, %v3418
        %3420 = vdwg.mxu0
        %3421 = vmatpush.bf16.msra.mxu0 %v2224
        %3422 = vmatpush.bf16.msra.mxu0 %v2223
        %3423 = vmatpush.bf16.msra.mxu0 %v2222
        %3424 = vmatpush.bf16.msra.mxu0 %v2221
        %3425 = vmatpush.bf16.msra.mxu0 %v2220
        %3426 = vmatpush.bf16.msra.mxu0 %v2219
        %3427 = vmatpush.bf16.msra.mxu0 %v2218
        %3428 = vmatpush.bf16.msra.mxu0 %v2217
        %3429 = vmatmul.bf16.gmra.mxu0 %v729
        %v3430 = vpop.f32.mrf.mxu0
        %v3431 = vadd.f32 %v3382, %v3430
        %v3432 = vpop.f32.mrf.mxu0
        %v3433 = vadd.f32 %v3384, %v3432
        %3434 = vmatmul.bf16.gmra.mxu0 %v753
        %v3435 = vpop.f32.mrf.mxu0
        %v3436 = vadd.f32 %v3387, %v3435
        %v3437 = vpop.f32.mrf.mxu0
        %v3438 = vadd.f32 %v3389, %v3437
        %3439 = vmatmul.bf16.gmra.mxu0 %v777
        %v3440 = vpop.f32.mrf.mxu0
        %v3441 = vadd.f32 %v3392, %v3440
        %v3442 = vpop.f32.mrf.mxu0
        %v3443 = vadd.f32 %v3394, %v3442
        %3444 = vmatmul.bf16.gmra.mxu0 %v801
        %v3445 = vpop.f32.mrf.mxu0
        %v3446 = vadd.f32 %v3397, %v3445
        %v3447 = vpop.f32.mrf.mxu0
        %v3448 = vadd.f32 %v3399, %v3447
        %3449 = vmatmul.bf16.gmra.mxu0 %v825
        %v3450 = vpop.f32.mrf.mxu0
        %v3451 = vadd.f32 %v3402, %v3450
        %v3452 = vpop.f32.mrf.mxu0
        %v3453 = vadd.f32 %v3404, %v3452
        %3454 = vmatmul.bf16.gmra.mxu0 %v849
        %v3455 = vpop.f32.mrf.mxu0
        %v3456 = vadd.f32 %v3407, %v3455
        %v3457 = vpop.f32.mrf.mxu0
        %v3458 = vadd.f32 %v3409, %v3457
        %3459 = vmatmul.bf16.gmra.mxu0 %v873
        %v3460 = vpop.f32.mrf.mxu0
        %v3461 = vadd.f32 %v3412, %v3460
        %v3462 = vpop.f32.mrf.mxu0
        %v3463 = vadd.f32 %v3414, %v3462
        %3464 = vmatmul.bf16.gmra.mxu0 %v897
        %v3465 = vpop.f32.mrf.mxu0
        %v3466 = vadd.f32 %v3417, %v3465
        %v3467 = vpop.f32.mrf.mxu0
        %v3468 = vadd.f32 %v3419, %v3467
        %3469 = vdwg.mxu0
        %3470 = vmatpush.bf16.msra.mxu0 %v2232
        %3471 = vmatpush.bf16.msra.mxu0 %v2231
        %3472 = vmatpush.bf16.msra.mxu0 %v2230
        %3473 = vmatpush.bf16.msra.mxu0 %v2229
        %3474 = vmatpush.bf16.msra.mxu0 %v2228
        %3475 = vmatpush.bf16.msra.mxu0 %v2227
        %3476 = vmatpush.bf16.msra.mxu0 %v2226
        %3477 = vmatpush.bf16.msra.mxu0 %v2225
        %3478 = vmatmul.bf16.gmra.mxu0 %v730
        %v3479 = vpop.f32.mrf.mxu0
        %v3480 = vadd.f32 %v3431, %v3479
        %v3481 = vpop.f32.mrf.mxu0
        %v3482 = vadd.f32 %v3433, %v3481
        %3483 = vmatmul.bf16.gmra.mxu0 %v754
        %v3484 = vpop.f32.mrf.mxu0
        %v3485 = vadd.f32 %v3436, %v3484
        %v3486 = vpop.f32.mrf.mxu0
        %v3487 = vadd.f32 %v3438, %v3486
        %3488 = vmatmul.bf16.gmra.mxu0 %v778
        %v3489 = vpop.f32.mrf.mxu0
        %v3490 = vadd.f32 %v3441, %v3489
        %v3491 = vpop.f32.mrf.mxu0
        %v3492 = vadd.f32 %v3443, %v3491
        %3493 = vmatmul.bf16.gmra.mxu0 %v802
        %v3494 = vpop.f32.mrf.mxu0
        %v3495 = vadd.f32 %v3446, %v3494
        %v3496 = vpop.f32.mrf.mxu0
        %v3497 = vadd.f32 %v3448, %v3496
        %3498 = vmatmul.bf16.gmra.mxu0 %v826
        %v3499 = vpop.f32.mrf.mxu0
        %v3500 = vadd.f32 %v3451, %v3499
        %v3501 = vpop.f32.mrf.mxu0
        %v3502 = vadd.f32 %v3453, %v3501
        %3503 = vmatmul.bf16.gmra.mxu0 %v850
        %v3504 = vpop.f32.mrf.mxu0
        %v3505 = vadd.f32 %v3456, %v3504
        %v3506 = vpop.f32.mrf.mxu0
        %v3507 = vadd.f32 %v3458, %v3506
        %3508 = vmatmul.bf16.gmra.mxu0 %v874
        %v3509 = vpop.f32.mrf.mxu0
        %v3510 = vadd.f32 %v3461, %v3509
        %v3511 = vpop.f32.mrf.mxu0
        %v3512 = vadd.f32 %v3463, %v3511
        %3513 = vmatmul.bf16.gmra.mxu0 %v898
        %v3514 = vpop.f32.mrf.mxu0
        %v3515 = vadd.f32 %v3466, %v3514
        %v3516 = vpop.f32.mrf.mxu0
        %v3517 = vadd.f32 %v3468, %v3516
        %3518 = vdwg.mxu0
        %3519 = vmatpush.bf16.msra.mxu0 %v2240
        %3520 = vmatpush.bf16.msra.mxu0 %v2239
        %3521 = vmatpush.bf16.msra.mxu0 %v2238
        %3522 = vmatpush.bf16.msra.mxu0 %v2237
        %3523 = vmatpush.bf16.msra.mxu0 %v2236
        %3524 = vmatpush.bf16.msra.mxu0 %v2235
        %3525 = vmatpush.bf16.msra.mxu0 %v2234
        %3526 = vmatpush.bf16.msra.mxu0 %v2233
        %3527 = vmatmul.bf16.gmra.mxu0 %v731
        %v3528 = vpop.f32.mrf.mxu0
        %v3529 = vadd.f32 %v3480, %v3528
        %v3530 = vpop.f32.mrf.mxu0
        %v3531 = vadd.f32 %v3482, %v3530
        %3532 = vmatmul.bf16.gmra.mxu0 %v755
        %v3533 = vpop.f32.mrf.mxu0
        %v3534 = vadd.f32 %v3485, %v3533
        %v3535 = vpop.f32.mrf.mxu0
        %v3536 = vadd.f32 %v3487, %v3535
        %3537 = vmatmul.bf16.gmra.mxu0 %v779
        %v3538 = vpop.f32.mrf.mxu0
        %v3539 = vadd.f32 %v3490, %v3538
        %v3540 = vpop.f32.mrf.mxu0
        %v3541 = vadd.f32 %v3492, %v3540
        %3542 = vmatmul.bf16.gmra.mxu0 %v803
        %v3543 = vpop.f32.mrf.mxu0
        %v3544 = vadd.f32 %v3495, %v3543
        %v3545 = vpop.f32.mrf.mxu0
        %v3546 = vadd.f32 %v3497, %v3545
        %3547 = vmatmul.bf16.gmra.mxu0 %v827
        %v3548 = vpop.f32.mrf.mxu0
        %v3549 = vadd.f32 %v3500, %v3548
        %v3550 = vpop.f32.mrf.mxu0
        %v3551 = vadd.f32 %v3502, %v3550
        %3552 = vmatmul.bf16.gmra.mxu0 %v851
        %v3553 = vpop.f32.mrf.mxu0
        %v3554 = vadd.f32 %v3505, %v3553
        %v3555 = vpop.f32.mrf.mxu0
        %v3556 = vadd.f32 %v3507, %v3555
        %3557 = vmatmul.bf16.gmra.mxu0 %v875
        %v3558 = vpop.f32.mrf.mxu0
        %v3559 = vadd.f32 %v3510, %v3558
        %v3560 = vpop.f32.mrf.mxu0
        %v3561 = vadd.f32 %v3512, %v3560
        %3562 = vmatmul.bf16.gmra.mxu0 %v899
        %v3563 = vpop.f32.mrf.mxu0
        %v3564 = vadd.f32 %v3515, %v3563
        %v3565 = vpop.f32.mrf.mxu0
        %v3566 = vadd.f32 %v3517, %v3565
        %3567 = vdwg.mxu0
        %3568 = vmatpush.bf16.msra.mxu0 %v2248
        %3569 = vmatpush.bf16.msra.mxu0 %v2247
        %3570 = vmatpush.bf16.msra.mxu0 %v2246
        %3571 = vmatpush.bf16.msra.mxu0 %v2245
        %3572 = vmatpush.bf16.msra.mxu0 %v2244
        %3573 = vmatpush.bf16.msra.mxu0 %v2243
        %3574 = vmatpush.bf16.msra.mxu0 %v2242
        %3575 = vmatpush.bf16.msra.mxu0 %v2241
        %3576 = vmatmul.bf16.gmra.mxu0 %v732
        %v3577 = vpop.f32.mrf.mxu0
        %v3578 = vadd.f32 %v3529, %v3577
        %v3579 = vpop.f32.mrf.mxu0
        %v3580 = vadd.f32 %v3531, %v3579
        %3581 = vmatmul.bf16.gmra.mxu0 %v756
        %v3582 = vpop.f32.mrf.mxu0
        %v3583 = vadd.f32 %v3534, %v3582
        %v3584 = vpop.f32.mrf.mxu0
        %v3585 = vadd.f32 %v3536, %v3584
        %3586 = vmatmul.bf16.gmra.mxu0 %v780
        %v3587 = vpop.f32.mrf.mxu0
        %v3588 = vadd.f32 %v3539, %v3587
        %v3589 = vpop.f32.mrf.mxu0
        %v3590 = vadd.f32 %v3541, %v3589
        %3591 = vmatmul.bf16.gmra.mxu0 %v804
        %v3592 = vpop.f32.mrf.mxu0
        %v3593 = vadd.f32 %v3544, %v3592
        %v3594 = vpop.f32.mrf.mxu0
        %v3595 = vadd.f32 %v3546, %v3594
        %3596 = vmatmul.bf16.gmra.mxu0 %v828
        %v3597 = vpop.f32.mrf.mxu0
        %v3598 = vadd.f32 %v3549, %v3597
        %v3599 = vpop.f32.mrf.mxu0
        %v3600 = vadd.f32 %v3551, %v3599
        %3601 = vmatmul.bf16.gmra.mxu0 %v852
        %v3602 = vpop.f32.mrf.mxu0
        %v3603 = vadd.f32 %v3554, %v3602
        %v3604 = vpop.f32.mrf.mxu0
        %v3605 = vadd.f32 %v3556, %v3604
        %3606 = vmatmul.bf16.gmra.mxu0 %v876
        %v3607 = vpop.f32.mrf.mxu0
        %v3608 = vadd.f32 %v3559, %v3607
        %v3609 = vpop.f32.mrf.mxu0
        %v3610 = vadd.f32 %v3561, %v3609
        %3611 = vmatmul.bf16.gmra.mxu0 %v900
        %v3612 = vpop.f32.mrf.mxu0
        %v3613 = vadd.f32 %v3564, %v3612
        %v3614 = vpop.f32.mrf.mxu0
        %v3615 = vadd.f32 %v3566, %v3614
        %3616 = vdwg.mxu0
        %v3617 = vmax.f32 %v3578, 0.0
        %v3618 = vmax.f32 %v3580, 0.0
        %v3619 = vmax.f32 %v3583, 0.0
        %v3620 = vmax.f32 %v3585, 0.0
        %v3621 = vmax.f32 %v3588, 0.0
        %v3622 = vmax.f32 %v3590, 0.0
        %v3623 = vmax.f32 %v3593, 0.0
        %v3624 = vmax.f32 %v3595, 0.0
        %v3625 = vmax.f32 %v3598, 0.0
        %v3626 = vmax.f32 %v3600, 0.0
        %v3627 = vmax.f32 %v3603, 0.0
        %v3628 = vmax.f32 %v3605, 0.0
        %v3629 = vmax.f32 %v3608, 0.0
        %v3630 = vmax.f32 %v3610, 0.0
        %v3631 = vmax.f32 %v3613, 0.0
        %v3632 = vmax.f32 %v3615, 0.0
        %v3633 = vld [vmem:[#allocation2] sm:$0xff]
        %v3634 = vld [vmem:[#allocation2 + $0x8] sm:$0xff]
        %v3635 = vld [vmem:[#allocation2 + $0x10] sm:$0xff]
        %v3636 = vld [vmem:[#allocation2 + $0x18] sm:$0xff]
        %v3637 = vld [vmem:[#allocation2 + $0x20] sm:$0xff]
        %v3638 = vld [vmem:[#allocation2 + $0x28] sm:$0xff]
        %v3639 = vld [vmem:[#allocation2 + $0x30] sm:$0xff]
        %v3640 = vld [vmem:[#allocation2 + $0x38] sm:$0xff]
        %v3641 = vld [vmem:[#allocation2 + $0x40] sm:$0xff]
        %v3642 = vld [vmem:[#allocation2 + $0x48] sm:$0xff]
        %v3643 = vld [vmem:[#allocation2 + $0x50] sm:$0xff]
        %v3644 = vld [vmem:[#allocation2 + $0x58] sm:$0xff]
        %v3645 = vld [vmem:[#allocation2 + $0x60] sm:$0xff]
        %v3646 = vld [vmem:[#allocation2 + $0x68] sm:$0xff]
        %v3647 = vld [vmem:[#allocation2 + $0x70] sm:$0xff]
        %v3648 = vld [vmem:[#allocation2 + $0x78] sm:$0xff]
        %v3649 = vld [vmem:[%s4] sm:$0x1]
        %v3651 = vperm.slane %v3649, 0
        %3653 = vmatpush.msra.mxu0 %v3648
        %3654 = vmatpush.msra.mxu0 %v3647
        %3655 = vmatpush.msra.mxu0 %v3646
        %3656 = vmatpush.msra.mxu0 %v3645
        %3657 = vmatpush.msra.mxu0 %v3644
        %3658 = vmatpush.msra.mxu0 %v3643
        %3659 = vmatpush.msra.mxu0 %v3642
        %3660 = vmatpush.msra.mxu0 %v3641
        %3661 = vmatpush.msra.mxu0 %v3640
        %3662 = vmatpush.msra.mxu0 %v3639
        %3663 = vmatpush.msra.mxu0 %v3638
        %3664 = vmatpush.msra.mxu0 %v3637
        %3665 = vmatpush.msra.mxu0 %v3636
        %3666 = vmatpush.msra.mxu0 %v3635
        %3667 = vmatpush.msra.mxu0 %v3634
        %3668 = vmatpush.msra.mxu0 %v3633
        %3669 = vmatmul.f32.gmra.mxu0 %v3617
        %v3670 = vpop.f32.mrf.mxu0
        %v3671 = vadd.f32 %v3651, %v3670
        %3672 = vmatmul.f32.gmra.mxu0 %v3618
        %v3673 = vpop.f32.mrf.mxu0
        %v3674 = vadd.f32 %v3651, %v3673
        %3675 = vmatmul.f32.gmra.mxu0 %v3619
        %v3676 = vpop.f32.mrf.mxu0
        %v3677 = vadd.f32 %v3651, %v3676
        %3678 = vmatmul.f32.gmra.mxu0 %v3620
        %v3679 = vpop.f32.mrf.mxu0
        %v3680 = vadd.f32 %v3651, %v3679
        %3681 = vmatmul.f32.gmra.mxu0 %v3621
        %v3682 = vpop.f32.mrf.mxu0
        %v3683 = vadd.f32 %v3651, %v3682
        %3684 = vmatmul.f32.gmra.mxu0 %v3622
        %v3685 = vpop.f32.mrf.mxu0
        %v3686 = vadd.f32 %v3651, %v3685
        %3687 = vmatmul.f32.gmra.mxu0 %v3623
        %v3688 = vpop.f32.mrf.mxu0
        %v3689 = vadd.f32 %v3651, %v3688
        %3690 = vmatmul.f32.gmra.mxu0 %v3624
        %v3691 = vpop.f32.mrf.mxu0
        %v3692 = vadd.f32 %v3651, %v3691
        %3693 = vmatmul.f32.gmra.mxu0 %v3625
        %v3694 = vpop.f32.mrf.mxu0
        %v3695 = vadd.f32 %v3651, %v3694
        %3696 = vmatmul.f32.gmra.mxu0 %v3626
        %v3697 = vpop.f32.mrf.mxu0
        %v3698 = vadd.f32 %v3651, %v3697
        %3699 = vmatmul.f32.gmra.mxu0 %v3627
        %v3700 = vpop.f32.mrf.mxu0
        %v3701 = vadd.f32 %v3651, %v3700
        %3702 = vmatmul.f32.gmra.mxu0 %v3628
        %v3703 = vpop.f32.mrf.mxu0
        %v3704 = vadd.f32 %v3651, %v3703
        %3705 = vmatmul.f32.gmra.mxu0 %v3629
        %v3706 = vpop.f32.mrf.mxu0
        %v3707 = vadd.f32 %v3651, %v3706
        %3708 = vmatmul.f32.gmra.mxu0 %v3630
        %v3709 = vpop.f32.mrf.mxu0
        %v3710 = vadd.f32 %v3651, %v3709
        %3711 = vmatmul.f32.gmra.mxu0 %v3631
        %v3712 = vpop.f32.mrf.mxu0
        %v3713 = vadd.f32 %v3651, %v3712
        %3714 = vmatmul.f32.gmra.mxu0 %v3632
        %v3715 = vpop.f32.mrf.mxu0
        %v3716 = vadd.f32 %v3651, %v3715
        %3717 = vdwg.mxu0
        %v3718 = vadd.f32 %v3578, %v3671
        %v3719 = vadd.f32 %v3580, %v3674
        %v3720 = vadd.f32 %v3583, %v3677
        %v3721 = vadd.f32 %v3585, %v3680
        %v3722 = vadd.f32 %v3588, %v3683
        %v3723 = vadd.f32 %v3590, %v3686
        %v3724 = vadd.f32 %v3593, %v3689
        %v3725 = vadd.f32 %v3595, %v3692
        %v3726 = vadd.f32 %v3598, %v3695
        %v3727 = vadd.f32 %v3600, %v3698
        %v3728 = vadd.f32 %v3603, %v3701
        %v3729 = vadd.f32 %v3605, %v3704
        %v3730 = vadd.f32 %v3608, %v3707
        %v3731 = vadd.f32 %v3610, %v3710
        %v3732 = vadd.f32 %v3613, %v3713
        %v3733 = vadd.f32 %v3615, %v3716
        %v3734 = vmax.f32 %v3718, 0.0
        %v3735 = vmax.f32 %v3719, 0.0
        %v3736 = vmax.f32 %v3720, 0.0
        %v3737 = vmax.f32 %v3721, 0.0
        %v3738 = vmax.f32 %v3722, 0.0
        %v3739 = vmax.f32 %v3723, 0.0
        %v3740 = vmax.f32 %v3724, 0.0
        %v3741 = vmax.f32 %v3725, 0.0
        %v3742 = vmax.f32 %v3726, 0.0
        %v3743 = vmax.f32 %v3727, 0.0
        %v3744 = vmax.f32 %v3728, 0.0
        %v3745 = vmax.f32 %v3729, 0.0
        %v3746 = vmax.f32 %v3730, 0.0
        %v3747 = vmax.f32 %v3731, 0.0
        %v3748 = vmax.f32 %v3732, 0.0
        %v3749 = vmax.f32 %v3733, 0.0
        %s3750 = scalar_lea.vmem [#allocation2], 128
        %v3751 = vld [vmem:[%s3750] sm:$0xff]
        %v3752 = vld [vmem:[%s3750 + $0x8] sm:$0xff]
        %v3753 = vld [vmem:[%s3750 + $0x10] sm:$0xff]
        %v3754 = vld [vmem:[%s3750 + $0x18] sm:$0xff]
        %v3755 = vld [vmem:[%s3750 + $0x20] sm:$0xff]
        %v3756 = vld [vmem:[%s3750 + $0x28] sm:$0xff]
        %v3757 = vld [vmem:[%s3750 + $0x30] sm:$0xff]
        %v3758 = vld [vmem:[%s3750 + $0x38] sm:$0xff]
        %v3759 = vld [vmem:[%s3750 + $0x40] sm:$0xff]
        %v3760 = vld [vmem:[%s3750 + $0x48] sm:$0xff]
        %v3761 = vld [vmem:[%s3750 + $0x50] sm:$0xff]
        %v3762 = vld [vmem:[%s3750 + $0x58] sm:$0xff]
        %v3763 = vld [vmem:[%s3750 + $0x60] sm:$0xff]
        %v3764 = vld [vmem:[%s3750 + $0x68] sm:$0xff]
        %v3765 = vld [vmem:[%s3750 + $0x70] sm:$0xff]
        %v3766 = vld [vmem:[%s3750 + $0x78] sm:$0xff]
        %s3767 = scalar_lea.vmem %s4, 1
        %v3768 = vld [vmem:[%s3767] sm:$0x1]
        %v3770 = vperm.slane %v3768, 0
        %3772 = vmatpush.msra.mxu0 %v3766
        %3773 = vmatpush.msra.mxu0 %v3765
        %3774 = vmatpush.msra.mxu0 %v3764
        %3775 = vmatpush.msra.mxu0 %v3763
        %3776 = vmatpush.msra.mxu0 %v3762
        %3777 = vmatpush.msra.mxu0 %v3761
        %3778 = vmatpush.msra.mxu0 %v3760
        %3779 = vmatpush.msra.mxu0 %v3759
        %3780 = vmatpush.msra.mxu0 %v3758
        %3781 = vmatpush.msra.mxu0 %v3757
        %3782 = vmatpush.msra.mxu0 %v3756
        %3783 = vmatpush.msra.mxu0 %v3755
        %3784 = vmatpush.msra.mxu0 %v3754
        %3785 = vmatpush.msra.mxu0 %v3753
        %3786 = vmatpush.msra.mxu0 %v3752
        %3787 = vmatpush.msra.mxu0 %v3751
        %3788 = vmatmul.f32.gmra.mxu0 %v3734
        %v3789 = vpop.f32.mrf.mxu0
        %v3790 = vadd.f32 %v3770, %v3789
        %3791 = vmatmul.f32.gmra.mxu0 %v3735
        %v3792 = vpop.f32.mrf.mxu0
        %v3793 = vadd.f32 %v3770, %v3792
        %3794 = vmatmul.f32.gmra.mxu0 %v3736
        %v3795 = vpop.f32.mrf.mxu0
        %v3796 = vadd.f32 %v3770, %v3795
        %3797 = vmatmul.f32.gmra.mxu0 %v3737
        %v3798 = vpop.f32.mrf.mxu0
        %v3799 = vadd.f32 %v3770, %v3798
        %3800 = vmatmul.f32.gmra.mxu0 %v3738
        %v3801 = vpop.f32.mrf.mxu0
        %v3802 = vadd.f32 %v3770, %v3801
        %3803 = vmatmul.f32.gmra.mxu0 %v3739
        %v3804 = vpop.f32.mrf.mxu0
        %v3805 = vadd.f32 %v3770, %v3804
        %3806 = vmatmul.f32.gmra.mxu0 %v3740
        %v3807 = vpop.f32.mrf.mxu0
        %v3808 = vadd.f32 %v3770, %v3807
        %3809 = vmatmul.f32.gmra.mxu0 %v3741
        %v3810 = vpop.f32.mrf.mxu0
        %v3811 = vadd.f32 %v3770, %v3810
        %3812 = vmatmul.f32.gmra.mxu0 %v3742
        %v3813 = vpop.f32.mrf.mxu0
        %v3814 = vadd.f32 %v3770, %v3813
        %3815 = vmatmul.f32.gmra.mxu0 %v3743
        %v3816 = vpop.f32.mrf.mxu0
        %v3817 = vadd.f32 %v3770, %v3816
        %3818 = vmatmul.f32.gmra.mxu0 %v3744
        %v3819 = vpop.f32.mrf.mxu0
        %v3820 = vadd.f32 %v3770, %v3819
        %3821 = vmatmul.f32.gmra.mxu0 %v3745
        %v3822 = vpop.f32.mrf.mxu0
        %v3823 = vadd.f32 %v3770, %v3822
        %3824 = vmatmul.f32.gmra.mxu0 %v3746
        %v3825 = vpop.f32.mrf.mxu0
        %v3826 = vadd.f32 %v3770, %v3825
        %3827 = vmatmul.f32.gmra.mxu0 %v3747
        %v3828 = vpop.f32.mrf.mxu0
        %v3829 = vadd.f32 %v3770, %v3828
        %3830 = vmatmul.f32.gmra.mxu0 %v3748
        %v3831 = vpop.f32.mrf.mxu0
        %v3832 = vadd.f32 %v3770, %v3831
        %3833 = vmatmul.f32.gmra.mxu0 %v3749
        %v3834 = vpop.f32.mrf.mxu0
        %v3835 = vadd.f32 %v3770, %v3834
        %3836 = vdwg.mxu0
        %v3837 = vadd.f32 %v3718, %v3790
        %v3838 = vadd.f32 %v3719, %v3793
        %v3839 = vadd.f32 %v3720, %v3796
        %v3840 = vadd.f32 %v3721, %v3799
        %v3841 = vadd.f32 %v3722, %v3802
        %v3842 = vadd.f32 %v3723, %v3805
        %v3843 = vadd.f32 %v3724, %v3808
        %v3844 = vadd.f32 %v3725, %v3811
        %v3845 = vadd.f32 %v3726, %v3814
        %v3846 = vadd.f32 %v3727, %v3817
        %v3847 = vadd.f32 %v3728, %v3820
        %v3848 = vadd.f32 %v3729, %v3823
        %v3849 = vadd.f32 %v3730, %v3826
        %v3850 = vadd.f32 %v3731, %v3829
        %v3851 = vadd.f32 %v3732, %v3832
        %v3852 = vadd.f32 %v3733, %v3835
        %v3853 = vmax.f32 %v3837, 0.0
        %v3854 = vmax.f32 %v3838, 0.0
        %v3855 = vmax.f32 %v3839, 0.0
        %v3856 = vmax.f32 %v3840, 0.0
        %v3857 = vmax.f32 %v3841, 0.0
        %v3858 = vmax.f32 %v3842, 0.0
        %v3859 = vmax.f32 %v3843, 0.0
        %v3860 = vmax.f32 %v3844, 0.0
        %v3861 = vmax.f32 %v3845, 0.0
        %v3862 = vmax.f32 %v3846, 0.0
        %v3863 = vmax.f32 %v3847, 0.0
        %v3864 = vmax.f32 %v3848, 0.0
        %v3865 = vmax.f32 %v3849, 0.0
        %v3866 = vmax.f32 %v3850, 0.0
        %v3867 = vmax.f32 %v3851, 0.0
        %v3868 = vmax.f32 %v3852, 0.0
        %s3869 = scalar_lea.vmem [#allocation2], 256
        %v3870 = vld [vmem:[%s3869] sm:$0xff]
        %v3871 = vld [vmem:[%s3869 + $0x8] sm:$0xff]
        %v3872 = vld [vmem:[%s3869 + $0x10] sm:$0xff]
        %v3873 = vld [vmem:[%s3869 + $0x18] sm:$0xff]
        %v3874 = vld [vmem:[%s3869 + $0x20] sm:$0xff]
        %v3875 = vld [vmem:[%s3869 + $0x28] sm:$0xff]
        %v3876 = vld [vmem:[%s3869 + $0x30] sm:$0xff]
        %v3877 = vld [vmem:[%s3869 + $0x38] sm:$0xff]
        %v3878 = vld [vmem:[%s3869 + $0x40] sm:$0xff]
        %v3879 = vld [vmem:[%s3869 + $0x48] sm:$0xff]
        %v3880 = vld [vmem:[%s3869 + $0x50] sm:$0xff]
        %v3881 = vld [vmem:[%s3869 + $0x58] sm:$0xff]
        %v3882 = vld [vmem:[%s3869 + $0x60] sm:$0xff]
        %v3883 = vld [vmem:[%s3869 + $0x68] sm:$0xff]
        %v3884 = vld [vmem:[%s3869 + $0x70] sm:$0xff]
        %v3885 = vld [vmem:[%s3869 + $0x78] sm:$0xff]
        %s3886 = scalar_lea.vmem %s4, 2
        %v3887 = vld [vmem:[%s3886] sm:$0x1]
        %v3889 = vperm.slane %v3887, 0
        %3891 = vmatpush.msra.mxu0 %v3885
        %3892 = vmatpush.msra.mxu0 %v3884
        %3893 = vmatpush.msra.mxu0 %v3883
        %3894 = vmatpush.msra.mxu0 %v3882
        %3895 = vmatpush.msra.mxu0 %v3881
        %3896 = vmatpush.msra.mxu0 %v3880
        %3897 = vmatpush.msra.mxu0 %v3879
        %3898 = vmatpush.msra.mxu0 %v3878
        %3899 = vmatpush.msra.mxu0 %v3877
        %3900 = vmatpush.msra.mxu0 %v3876
        %3901 = vmatpush.msra.mxu0 %v3875
        %3902 = vmatpush.msra.mxu0 %v3874
        %3903 = vmatpush.msra.mxu0 %v3873
        %3904 = vmatpush.msra.mxu0 %v3872
        %3905 = vmatpush.msra.mxu0 %v3871
        %3906 = vmatpush.msra.mxu0 %v3870
        %3907 = vmatmul.f32.gmra.mxu0 %v3853
        %v3908 = vpop.f32.mrf.mxu0
        %v3909 = vadd.f32 %v3889, %v3908
        %3910 = vmatmul.f32.gmra.mxu0 %v3854
        %v3911 = vpop.f32.mrf.mxu0
        %v3912 = vadd.f32 %v3889, %v3911
        %3913 = vmatmul.f32.gmra.mxu0 %v3855
        %v3914 = vpop.f32.mrf.mxu0
        %v3915 = vadd.f32 %v3889, %v3914
        %3916 = vmatmul.f32.gmra.mxu0 %v3856
        %v3917 = vpop.f32.mrf.mxu0
        %v3918 = vadd.f32 %v3889, %v3917
        %3919 = vmatmul.f32.gmra.mxu0 %v3857
        %v3920 = vpop.f32.mrf.mxu0
        %v3921 = vadd.f32 %v3889, %v3920
        %3922 = vmatmul.f32.gmra.mxu0 %v3858
        %v3923 = vpop.f32.mrf.mxu0
        %v3924 = vadd.f32 %v3889, %v3923
        %3925 = vmatmul.f32.gmra.mxu0 %v3859
        %v3926 = vpop.f32.mrf.mxu0
        %v3927 = vadd.f32 %v3889, %v3926
        %3928 = vmatmul.f32.gmra.mxu0 %v3860
        %v3929 = vpop.f32.mrf.mxu0
        %v3930 = vadd.f32 %v3889, %v3929
        %3931 = vmatmul.f32.gmra.mxu0 %v3861
        %v3932 = vpop.f32.mrf.mxu0
        %v3933 = vadd.f32 %v3889, %v3932
        %3934 = vmatmul.f32.gmra.mxu0 %v3862
        %v3935 = vpop.f32.mrf.mxu0
        %v3936 = vadd.f32 %v3889, %v3935
        %3937 = vmatmul.f32.gmra.mxu0 %v3863
        %v3938 = vpop.f32.mrf.mxu0
        %v3939 = vadd.f32 %v3889, %v3938
        %3940 = vmatmul.f32.gmra.mxu0 %v3864
        %v3941 = vpop.f32.mrf.mxu0
        %v3942 = vadd.f32 %v3889, %v3941
        %3943 = vmatmul.f32.gmra.mxu0 %v3865
        %v3944 = vpop.f32.mrf.mxu0
        %v3945 = vadd.f32 %v3889, %v3944
        %3946 = vmatmul.f32.gmra.mxu0 %v3866
        %v3947 = vpop.f32.mrf.mxu0
        %v3948 = vadd.f32 %v3889, %v3947
        %3949 = vmatmul.f32.gmra.mxu0 %v3867
        %v3950 = vpop.f32.mrf.mxu0
        %v3951 = vadd.f32 %v3889, %v3950
        %3952 = vmatmul.f32.gmra.mxu0 %v3868
        %v3953 = vpop.f32.mrf.mxu0
        %v3954 = vadd.f32 %v3889, %v3953
        %3955 = vdwg.mxu0
        %v3956 = vadd.f32 %v3837, %v3909
        %v3957 = vadd.f32 %v3838, %v3912
        %v3958 = vadd.f32 %v3839, %v3915
        %v3959 = vadd.f32 %v3840, %v3918
        %v3960 = vadd.f32 %v3841, %v3921
        %v3961 = vadd.f32 %v3842, %v3924
        %v3962 = vadd.f32 %v3843, %v3927
        %v3963 = vadd.f32 %v3844, %v3930
        %v3964 = vadd.f32 %v3845, %v3933
        %v3965 = vadd.f32 %v3846, %v3936
        %v3966 = vadd.f32 %v3847, %v3939
        %v3967 = vadd.f32 %v3848, %v3942
        %v3968 = vadd.f32 %v3849, %v3945
        %v3969 = vadd.f32 %v3850, %v3948
        %v3970 = vadd.f32 %v3851, %v3951
        %v3971 = vadd.f32 %v3852, %v3954
        %v3972 = vmax.f32 %v3956, 0.0
        %v3973 = vmax.f32 %v3957, 0.0
        %v3974 = vmax.f32 %v3958, 0.0
        %v3975 = vmax.f32 %v3959, 0.0
        %v3976 = vmax.f32 %v3960, 0.0
        %v3977 = vmax.f32 %v3961, 0.0
        %v3978 = vmax.f32 %v3962, 0.0
        %v3979 = vmax.f32 %v3963, 0.0
        %v3980 = vmax.f32 %v3964, 0.0
        %v3981 = vmax.f32 %v3965, 0.0
        %v3982 = vmax.f32 %v3966, 0.0
        %v3983 = vmax.f32 %v3967, 0.0
        %v3984 = vmax.f32 %v3968, 0.0
        %v3985 = vmax.f32 %v3969, 0.0
        %v3986 = vmax.f32 %v3970, 0.0
        %v3987 = vmax.f32 %v3971, 0.0
        %s3988 = scalar_lea.vmem [#allocation2], 384
        %v3989 = vld [vmem:[%s3988] sm:$0xff]
        %v3990 = vld [vmem:[%s3988 + $0x8] sm:$0xff]
        %v3991 = vld [vmem:[%s3988 + $0x10] sm:$0xff]
        %v3992 = vld [vmem:[%s3988 + $0x18] sm:$0xff]
        %v3993 = vld [vmem:[%s3988 + $0x20] sm:$0xff]
        %v3994 = vld [vmem:[%s3988 + $0x28] sm:$0xff]
        %v3995 = vld [vmem:[%s3988 + $0x30] sm:$0xff]
        %v3996 = vld [vmem:[%s3988 + $0x38] sm:$0xff]
        %v3997 = vld [vmem:[%s3988 + $0x40] sm:$0xff]
        %v3998 = vld [vmem:[%s3988 + $0x48] sm:$0xff]
        %v3999 = vld [vmem:[%s3988 + $0x50] sm:$0xff]
        %v4000 = vld [vmem:[%s3988 + $0x58] sm:$0xff]
        %v4001 = vld [vmem:[%s3988 + $0x60] sm:$0xff]
        %v4002 = vld [vmem:[%s3988 + $0x68] sm:$0xff]
        %v4003 = vld [vmem:[%s3988 + $0x70] sm:$0xff]
        %v4004 = vld [vmem:[%s3988 + $0x78] sm:$0xff]
        %s4005 = scalar_lea.vmem %s4, 3
        %v4006 = vld [vmem:[%s4005] sm:$0x1]
        %v4008 = vperm.slane %v4006, 0
        %4010 = vmatpush.msra.mxu0 %v4004
        %4011 = vmatpush.msra.mxu0 %v4003
        %4012 = vmatpush.msra.mxu0 %v4002
        %4013 = vmatpush.msra.mxu0 %v4001
        %4014 = vmatpush.msra.mxu0 %v4000
        %4015 = vmatpush.msra.mxu0 %v3999
        %4016 = vmatpush.msra.mxu0 %v3998
        %4017 = vmatpush.msra.mxu0 %v3997
        %4018 = vmatpush.msra.mxu0 %v3996
        %4019 = vmatpush.msra.mxu0 %v3995
        %4020 = vmatpush.msra.mxu0 %v3994
        %4021 = vmatpush.msra.mxu0 %v3993
        %4022 = vmatpush.msra.mxu0 %v3992
        %4023 = vmatpush.msra.mxu0 %v3991
        %4024 = vmatpush.msra.mxu0 %v3990
        %4025 = vmatpush.msra.mxu0 %v3989
        %4026 = vmatmul.f32.gmra.mxu0 %v3972
        %v4027 = vpop.f32.mrf.mxu0
        %v4028 = vadd.f32 %v4008, %v4027
        %4029 = vmatmul.f32.gmra.mxu0 %v3973
        %v4030 = vpop.f32.mrf.mxu0
        %v4031 = vadd.f32 %v4008, %v4030
        %4032 = vmatmul.f32.gmra.mxu0 %v3974
        %v4033 = vpop.f32.mrf.mxu0
        %v4034 = vadd.f32 %v4008, %v4033
        %4035 = vmatmul.f32.gmra.mxu0 %v3975
        %v4036 = vpop.f32.mrf.mxu0
        %v4037 = vadd.f32 %v4008, %v4036
        %4038 = vmatmul.f32.gmra.mxu0 %v3976
        %v4039 = vpop.f32.mrf.mxu0
        %v4040 = vadd.f32 %v4008, %v4039
        %4041 = vmatmul.f32.gmra.mxu0 %v3977
        %v4042 = vpop.f32.mrf.mxu0
        %v4043 = vadd.f32 %v4008, %v4042
        %4044 = vmatmul.f32.gmra.mxu0 %v3978
        %v4045 = vpop.f32.mrf.mxu0
        %v4046 = vadd.f32 %v4008, %v4045
        %4047 = vmatmul.f32.gmra.mxu0 %v3979
        %v4048 = vpop.f32.mrf.mxu0
        %v4049 = vadd.f32 %v4008, %v4048
        %4050 = vmatmul.f32.gmra.mxu0 %v3980
        %v4051 = vpop.f32.mrf.mxu0
        %v4052 = vadd.f32 %v4008, %v4051
        %4053 = vmatmul.f32.gmra.mxu0 %v3981
        %v4054 = vpop.f32.mrf.mxu0
        %v4055 = vadd.f32 %v4008, %v4054
        %4056 = vmatmul.f32.gmra.mxu0 %v3982
        %v4057 = vpop.f32.mrf.mxu0
        %v4058 = vadd.f32 %v4008, %v4057
        %4059 = vmatmul.f32.gmra.mxu0 %v3983
        %v4060 = vpop.f32.mrf.mxu0
        %v4061 = vadd.f32 %v4008, %v4060
        %4062 = vmatmul.f32.gmra.mxu0 %v3984
        %v4063 = vpop.f32.mrf.mxu0
        %v4064 = vadd.f32 %v4008, %v4063
        %4065 = vmatmul.f32.gmra.mxu0 %v3985
        %v4066 = vpop.f32.mrf.mxu0
        %v4067 = vadd.f32 %v4008, %v4066
        %4068 = vmatmul.f32.gmra.mxu0 %v3986
        %v4069 = vpop.f32.mrf.mxu0
        %v4070 = vadd.f32 %v4008, %v4069
        %4071 = vmatmul.f32.gmra.mxu0 %v3987
        %v4072 = vpop.f32.mrf.mxu0
        %v4073 = vadd.f32 %v4008, %v4072
        %4074 = vdwg.mxu0
        %v4075 = vadd.f32 %v3956, %v4028
        %v4076 = vadd.f32 %v3957, %v4031
        %v4077 = vadd.f32 %v3958, %v4034
        %v4078 = vadd.f32 %v3959, %v4037
        %v4079 = vadd.f32 %v3960, %v4040
        %v4080 = vadd.f32 %v3961, %v4043
        %v4081 = vadd.f32 %v3962, %v4046
        %v4082 = vadd.f32 %v3963, %v4049
        %v4083 = vadd.f32 %v3964, %v4052
        %v4084 = vadd.f32 %v3965, %v4055
        %v4085 = vadd.f32 %v3966, %v4058
        %v4086 = vadd.f32 %v3967, %v4061
        %v4087 = vadd.f32 %v3968, %v4064
        %v4088 = vadd.f32 %v3969, %v4067
        %v4089 = vadd.f32 %v3970, %v4070
        %v4090 = vadd.f32 %v3971, %v4073
        %v4091 = vld [vmem:[%s5] sm:$0xff]
        %v4092 = vld [vmem:[%s5 + $0x8] sm:$0xff]
        %v4093 = vld [vmem:[%s5 + $0x10] sm:$0xff]
        %v4094 = vld [vmem:[%s5 + $0x18] sm:$0xff]
        %v4095 = vld [vmem:[%s5 + $0x20] sm:$0xff]
        %v4096 = vld [vmem:[%s5 + $0x28] sm:$0xff]
        %v4097 = vld [vmem:[%s5 + $0x30] sm:$0xff]
        %v4098 = vld [vmem:[%s5 + $0x38] sm:$0xff]
        %v4099 = vld [vmem:[%s5 + $0x40] sm:$0xff]
        %v4100 = vld [vmem:[%s5 + $0x48] sm:$0xff]
        %v4101 = vld [vmem:[%s5 + $0x50] sm:$0xff]
        %v4102 = vld [vmem:[%s5 + $0x58] sm:$0xff]
        %v4103 = vld [vmem:[%s5 + $0x60] sm:$0xff]
        %v4104 = vld [vmem:[%s5 + $0x68] sm:$0xff]
        %v4105 = vld [vmem:[%s5 + $0x70] sm:$0xff]
        %v4106 = vld [vmem:[%s5 + $0x78] sm:$0xff]
        %v4107 = vld [vmem:[%s6] sm:$0x1]
        %v4109 = vperm.slane %v4107, 0
        %4111 = vmatpush.msra.mxu0 %v4106
        %4112 = vmatpush.msra.mxu0 %v4105
        %4113 = vmatpush.msra.mxu0 %v4104
        %4114 = vmatpush.msra.mxu0 %v4103
        %4115 = vmatpush.msra.mxu0 %v4102
        %4116 = vmatpush.msra.mxu0 %v4101
        %4117 = vmatpush.msra.mxu0 %v4100
        %4118 = vmatpush.msra.mxu0 %v4099
        %4119 = vmatpush.msra.mxu0 %v4098
        %4120 = vmatpush.msra.mxu0 %v4097
        %4121 = vmatpush.msra.mxu0 %v4096
        %4122 = vmatpush.msra.mxu0 %v4095
        %4123 = vmatpush.msra.mxu0 %v4094
        %4124 = vmatpush.msra.mxu0 %v4093
        %4125 = vmatpush.msra.mxu0 %v4092
        %4126 = vmatpush.msra.mxu0 %v4091
        %4127 = vmatmul.f32.gmra.mxu0 %v4075
        %v4128 = vpop.f32.mrf.mxu0
        %v4129 = vadd.f32 %v4109, %v4128
        %4130 = vmatmul.f32.gmra.mxu0 %v4076
        %v4131 = vpop.f32.mrf.mxu0
        %v4132 = vadd.f32 %v4109, %v4131
        %4133 = vmatmul.f32.gmra.mxu0 %v4077
        %v4134 = vpop.f32.mrf.mxu0
        %v4135 = vadd.f32 %v4109, %v4134
        %4136 = vmatmul.f32.gmra.mxu0 %v4078
        %v4137 = vpop.f32.mrf.mxu0
        %v4138 = vadd.f32 %v4109, %v4137
        %4139 = vmatmul.f32.gmra.mxu0 %v4079
        %v4140 = vpop.f32.mrf.mxu0
        %v4141 = vadd.f32 %v4109, %v4140
        %4142 = vmatmul.f32.gmra.mxu0 %v4080
        %v4143 = vpop.f32.mrf.mxu0
        %v4144 = vadd.f32 %v4109, %v4143
        %4145 = vmatmul.f32.gmra.mxu0 %v4081
        %v4146 = vpop.f32.mrf.mxu0
        %v4147 = vadd.f32 %v4109, %v4146
        %4148 = vmatmul.f32.gmra.mxu0 %v4082
        %v4149 = vpop.f32.mrf.mxu0
        %v4150 = vadd.f32 %v4109, %v4149
        %4151 = vmatmul.f32.gmra.mxu0 %v4083
        %v4152 = vpop.f32.mrf.mxu0
        %v4153 = vadd.f32 %v4109, %v4152
        %4154 = vmatmul.f32.gmra.mxu0 %v4084
        %v4155 = vpop.f32.mrf.mxu0
        %v4156 = vadd.f32 %v4109, %v4155
        %4157 = vmatmul.f32.gmra.mxu0 %v4085
        %v4158 = vpop.f32.mrf.mxu0
        %v4159 = vadd.f32 %v4109, %v4158
        %4160 = vmatmul.f32.gmra.mxu0 %v4086
        %v4161 = vpop.f32.mrf.mxu0
        %v4162 = vadd.f32 %v4109, %v4161
        %4163 = vmatmul.f32.gmra.mxu0 %v4087
        %v4164 = vpop.f32.mrf.mxu0
        %v4165 = vadd.f32 %v4109, %v4164
        %4166 = vmatmul.f32.gmra.mxu0 %v4088
        %v4167 = vpop.f32.mrf.mxu0
        %v4168 = vadd.f32 %v4109, %v4167
        %4169 = vmatmul.f32.gmra.mxu0 %v4089
        %v4170 = vpop.f32.mrf.mxu0
        %v4171 = vadd.f32 %v4109, %v4170
        %4172 = vmatmul.f32.gmra.mxu0 %v4090
        %v4173 = vpop.f32.mrf.mxu0
        %v4174 = vadd.f32 %v4109, %v4173
        %4175 = vdwg.mxu0
        %4176 = vst [vmem:[%s302] sm:$0xff] %v4129
        %4177 = vst [vmem:[%s302 + $0x8] sm:$0xff] %v4132
        %4178 = vst [vmem:[%s302 + $0x10] sm:$0xff] %v4135
        %4179 = vst [vmem:[%s302 + $0x18] sm:$0xff] %v4138
        %4180 = vst [vmem:[%s302 + $0x20] sm:$0xff] %v4141
        %4181 = vst [vmem:[%s302 + $0x28] sm:$0xff] %v4144
        %4182 = vst [vmem:[%s302 + $0x30] sm:$0xff] %v4147
        %4183 = vst [vmem:[%s302 + $0x38] sm:$0xff] %v4150
        %4184 = vst [vmem:[%s302 + $0x40] sm:$0xff] %v4153
        %4185 = vst [vmem:[%s302 + $0x48] sm:$0xff] %v4156
        %4186 = vst [vmem:[%s302 + $0x50] sm:$0xff] %v4159
        %4187 = vst [vmem:[%s302 + $0x58] sm:$0xff] %v4162
        %4188 = vst [vmem:[%s302 + $0x60] sm:$0xff] %v4165
        %4189 = vst [vmem:[%s302 + $0x68] sm:$0xff] %v4168
        %4190 = vst [vmem:[%s302 + $0x70] sm:$0xff] %v4171
        %4191 = vst [vmem:[%s302 + $0x78] sm:$0xff] %v4174
        %s4192 = sand.u32 %s179, 1
        %s4193 = sand.u32 %s179, 1
        %s4194 = smul.addr %s4193, 128
        %s4195 = scalar_lea.vmem [#allocation4], %s4194
        // Predicated region
        $region53: #{simple_res_mlp.1} parent=47 // pred_check
          %p4196 = pneg %p189
        $region54: #{simple_res_mlp.1} parent=47 // pred_check_branch
          %4198 = sbr.rel (%p4196) target = $region56
        $region55: #{simple_res_mlp.1} parent=47 // pred_region
          %s4199 = smul.u32 16, %s19
          %s4200 = ssub.s32 25, %s4199
          %p4201 = scmp.lt.s32.totalorder %s4200, 16
          %s4202 = scalar_select %p4201, %s4200, 16
          %s4203 = smul.u32 8, %s4202
          %p4204 = scmp.ne.s32.totalorder 0, %s4203
          %s4205 = smul.addr %s4199, 8
          %s4206 = scalar_lea.vmem %s7, %s4205
          // Predicated region
          $region57: #{simple_res_mlp.1} parent=55 // pred_check
            %p4207 = pneg %p4204
          $region58: #{simple_res_mlp.1} parent=55 // pred_check_branch
            %4209 = sbr.rel (%p4207) target = $region60
          $region59: #{simple_res_mlp.1} parent=55 // pred_region
            // Predicated region
            $region61: #{simple_res_mlp.1} parent=59 // pred_check
              _
            $region62: #{simple_res_mlp.1} parent=59 // pred_check_branch
              %4211 = sbr.rel (0) target = $region64
            $region63: #{simple_res_mlp.1} parent=59 // pred_region
              // Predicated region
              $region83: #{simple_res_mlp.1} parent=63 // pred_check
                _
              $region84: #{simple_res_mlp.1} parent=63 // pred_check_branch
                %4291 = sbr.rel (0) target = $region86
              $region85: #{simple_res_mlp.1} parent=63 // pred_region
                %s4292 = sshrl.u32 %s4202, 4
                // While loop
                $region87: #{simple_res_mlp.1} parent=85 // loop_pre_header
                  _
                $region88: #{simple_res_mlp.1} parent=85 // loop_header
                  %s4294 = sphi 0, %s4296
                  %p4295 = scmp.ge.s32.totalorder %s4294, %s4292
                  %s4299 = sphi 0, %s4336
                  %s4300 = sphi %s4195, %s4339
                  %s4301 = sphi %s4206, %s4340
                $region89: #{simple_res_mlp.1} parent=85 // loop_header_branch
                  %4298 = sbr.rel (%p4295) target = $region93
                $region90: #{simple_res_mlp.1} parent=85 // loop_body
                  %v4302 = vld [vmem:[%s4300] sm:$0xff]
                  %4303 = vst [vmem:[%s4301] sm:$0xff] %v4302
                  %v4304 = vld [vmem:[%s4300 + $0x8] sm:$0xff]
                  %4305 = vst [vmem:[%s4301 + $0x8] sm:$0xff] %v4304
                  %v4306 = vld [vmem:[%s4300 + $0x10] sm:$0xff]
                  %4307 = vst [vmem:[%s4301 + $0x10] sm:$0xff] %v4306
                  %v4308 = vld [vmem:[%s4300 + $0x18] sm:$0xff]
                  %4309 = vst [vmem:[%s4301 + $0x18] sm:$0xff] %v4308
                  %v4310 = vld [vmem:[%s4300 + $0x20] sm:$0xff]
                  %4311 = vst [vmem:[%s4301 + $0x20] sm:$0xff] %v4310
                  %v4312 = vld [vmem:[%s4300 + $0x28] sm:$0xff]
                  %4313 = vst [vmem:[%s4301 + $0x28] sm:$0xff] %v4312
                  %v4314 = vld [vmem:[%s4300 + $0x30] sm:$0xff]
                  %4315 = vst [vmem:[%s4301 + $0x30] sm:$0xff] %v4314
                  %v4316 = vld [vmem:[%s4300 + $0x38] sm:$0xff]
                  %4317 = vst [vmem:[%s4301 + $0x38] sm:$0xff] %v4316
                  %v4318 = vld [vmem:[%s4300 + $0x40] sm:$0xff]
                  %4319 = vst [vmem:[%s4301 + $0x40] sm:$0xff] %v4318
                  %v4320 = vld [vmem:[%s4300 + $0x48] sm:$0xff]
                  %4321 = vst [vmem:[%s4301 + $0x48] sm:$0xff] %v4320
                  %v4322 = vld [vmem:[%s4300 + $0x50] sm:$0xff]
                  %4323 = vst [vmem:[%s4301 + $0x50] sm:$0xff] %v4322
                  %v4324 = vld [vmem:[%s4300 + $0x58] sm:$0xff]
                  %4325 = vst [vmem:[%s4301 + $0x58] sm:$0xff] %v4324
                  %v4326 = vld [vmem:[%s4300 + $0x60] sm:$0xff]
                  %4327 = vst [vmem:[%s4301 + $0x60] sm:$0xff] %v4326
                  %v4328 = vld [vmem:[%s4300 + $0x68] sm:$0xff]
                  %4329 = vst [vmem:[%s4301 + $0x68] sm:$0xff] %v4328
                  %v4330 = vld [vmem:[%s4300 + $0x70] sm:$0xff]
                  %4331 = vst [vmem:[%s4301 + $0x70] sm:$0xff] %v4330
                  %v4332 = vld [vmem:[%s4300 + $0x78] sm:$0xff]
                  %4333 = vst [vmem:[%s4301 + $0x78] sm:$0xff] %v4332
                  %s4334 = sadd.s32 1, %s4299
                  %p4335 = scmp.ge.s32.totalorder %s4334, %s4292
                  %s4336 = scalar_select %p4335, 0, %s4334
                  %s4337 = smul.u32 %s4336, 128
                  %s4338 = smul.u32 %s4336, 128
                  %s4339 = scalar_lea.vmem %s4195, %s4337 [#allocation4]
                  %s4340 = scalar_lea.vmem %s4206, %s4338
                $region91: #{simple_res_mlp.1} parent=85 // loop_footer
                  %s4296 = sadd.s32 %s4294, 1
                $region92: #{simple_res_mlp.1} parent=85 // loop_footer_branch
                  %4293 = sbr.rel target = $region88
                $region93: #{simple_res_mlp.1} parent=85 // loop_exit
                  _
                %s4341 = sshrl.u32 %s4202, 4
                %s4342 = sand.u32 %s4202, 15
                %s4343 = smul.u32 %s4341, 16
                %s4344 = smul.u32 8, %s4343
                %s4345 = scalar_lea.vmem %s4195, %s4344 [#allocation4]
                %s4346 = smul.u32 8, %s4343
                %s4347 = scalar_lea.vmem %s4206, %s4346
                // While loop
                $region94: #{simple_res_mlp.1} parent=85 // loop_pre_header
                  _
                $region95: #{simple_res_mlp.1} parent=85 // loop_header
                  %s4349 = sphi 0, %s4351
                  %p4350 = scmp.ge.s32.totalorder %s4349, %s4342
                  %s4354 = sphi 0, %s4361
                  %s4355 = sphi %s4345, %s4364
                  %s4356 = sphi %s4347, %s4365
                $region96: #{simple_res_mlp.1} parent=85 // loop_header_branch
                  %4353 = sbr.rel (%p4350) target = $region100
                $region97: #{simple_res_mlp.1} parent=85 // loop_body
                  %v4357 = vld [vmem:[%s4355] sm:$0xff]
                  %4358 = vst [vmem:[%s4356] sm:$0xff] %v4357
                  %s4359 = sadd.s32 1, %s4354
                  %p4360 = scmp.ge.s32.totalorder %s4359, %s4342
                  %s4361 = scalar_select %p4360, 0, %s4359
                  %s4362 = smul.u32 %s4361, 8
                  %s4363 = smul.u32 %s4361, 8
                  %s4364 = scalar_lea.vmem %s4345, %s4362 [#allocation4]
                  %s4365 = scalar_lea.vmem %s4347, %s4363
                $region98: #{simple_res_mlp.1} parent=85 // loop_footer
                  %s4351 = sadd.s32 %s4349, 1
                $region99: #{simple_res_mlp.1} parent=85 // loop_footer_branch
                  %4348 = sbr.rel target = $region95
                $region100: #{simple_res_mlp.1} parent=85 // loop_exit
                  _
              $region86: #{simple_res_mlp.1} parent=63 // pred_fallthru
                _
              // Predicated region
              $region101: #{simple_res_mlp.1} parent=63 // pred_check
                _
              $region102: #{simple_res_mlp.1} parent=63 // pred_check_branch
                %4367 = sbr.rel target = $region104
              $region103: #{simple_res_mlp.1} parent=63 // pred_region
                _
              $region104: #{simple_res_mlp.1} parent=63 // pred_fallthru
                _
            $region64: #{simple_res_mlp.1} parent=59 // pred_fallthru
              _
            // Predicated region
            $region65: #{simple_res_mlp.1} parent=59 // pred_check
              _
            $region66: #{simple_res_mlp.1} parent=59 // pred_check_branch
              %4213 = sbr.rel target = $region68
            $region67: #{simple_res_mlp.1} parent=59 // pred_region
              %s4215 = ssub.s32 256, 1
              %s4216 = sshrl.u32 %s4202, 4
              // While loop
              $region69: #{simple_res_mlp.1} parent=67 // loop_pre_header
                _
              $region70: #{simple_res_mlp.1} parent=67 // loop_header
                %s4218 = sphi 0, %s4220
                %p4219 = scmp.ge.s32.totalorder %s4218, %s4216
                %s4223 = sphi 0, %s4260
                %s4224 = sphi %s4195, %s4263
                %s4225 = sphi %s4206, %s4264
              $region71: #{simple_res_mlp.1} parent=67 // loop_header_branch
                %4222 = sbr.rel (%p4219) target = $region75
              $region72: #{simple_res_mlp.1} parent=67 // loop_body
                %v4226 = vld [vmem:[%s4224] sm:%s4215]
                %4227 = vst [vmem:[%s4225] sm:%s4215] %v4226
                %v4228 = vld [vmem:[%s4224 + $0x8] sm:%s4215]
                %4229 = vst [vmem:[%s4225 + $0x8] sm:%s4215] %v4228
                %v4230 = vld [vmem:[%s4224 + $0x10] sm:%s4215]
                %4231 = vst [vmem:[%s4225 + $0x10] sm:%s4215] %v4230
                %v4232 = vld [vmem:[%s4224 + $0x18] sm:%s4215]
                %4233 = vst [vmem:[%s4225 + $0x18] sm:%s4215] %v4232
                %v4234 = vld [vmem:[%s4224 + $0x20] sm:%s4215]
                %4235 = vst [vmem:[%s4225 + $0x20] sm:%s4215] %v4234
                %v4236 = vld [vmem:[%s4224 + $0x28] sm:%s4215]
                %4237 = vst [vmem:[%s4225 + $0x28] sm:%s4215] %v4236
                %v4238 = vld [vmem:[%s4224 + $0x30] sm:%s4215]
                %4239 = vst [vmem:[%s4225 + $0x30] sm:%s4215] %v4238
                %v4240 = vld [vmem:[%s4224 + $0x38] sm:%s4215]
                %4241 = vst [vmem:[%s4225 + $0x38] sm:%s4215] %v4240
                %v4242 = vld [vmem:[%s4224 + $0x40] sm:%s4215]
                %4243 = vst [vmem:[%s4225 + $0x40] sm:%s4215] %v4242
                %v4244 = vld [vmem:[%s4224 + $0x48] sm:%s4215]
                %4245 = vst [vmem:[%s4225 + $0x48] sm:%s4215] %v4244
                %v4246 = vld [vmem:[%s4224 + $0x50] sm:%s4215]
                %4247 = vst [vmem:[%s4225 + $0x50] sm:%s4215] %v4246
                %v4248 = vld [vmem:[%s4224 + $0x58] sm:%s4215]
                %4249 = vst [vmem:[%s4225 + $0x58] sm:%s4215] %v4248
                %v4250 = vld [vmem:[%s4224 + $0x60] sm:%s4215]
                %4251 = vst [vmem:[%s4225 + $0x60] sm:%s4215] %v4250
                %v4252 = vld [vmem:[%s4224 + $0x68] sm:%s4215]
                %4253 = vst [vmem:[%s4225 + $0x68] sm:%s4215] %v4252
                %v4254 = vld [vmem:[%s4224 + $0x70] sm:%s4215]
                %4255 = vst [vmem:[%s4225 + $0x70] sm:%s4215] %v4254
                %v4256 = vld [vmem:[%s4224 + $0x78] sm:%s4215]
                %4257 = vst [vmem:[%s4225 + $0x78] sm:%s4215] %v4256
                %s4258 = sadd.s32 1, %s4223
                %p4259 = scmp.ge.s32.totalorder %s4258, %s4216
                %s4260 = scalar_select %p4259, 0, %s4258
                %s4261 = smul.u32 %s4260, 128
                %s4262 = smul.u32 %s4260, 128
                %s4263 = scalar_lea.vmem %s4195, %s4261 [#allocation4]
                %s4264 = scalar_lea.vmem %s4206, %s4262
              $region73: #{simple_res_mlp.1} parent=67 // loop_footer
                %s4220 = sadd.s32 %s4218, 1
              $region74: #{simple_res_mlp.1} parent=67 // loop_footer_branch
                %4217 = sbr.rel target = $region70
              $region75: #{simple_res_mlp.1} parent=67 // loop_exit
                _
              %s4265 = sshrl.u32 %s4202, 4
              %s4266 = sand.u32 %s4202, 15
              %s4267 = smul.u32 %s4265, 16
              %s4268 = smul.u32 8, %s4267
              %s4269 = scalar_lea.vmem %s4195, %s4268 [#allocation4]
              %s4270 = smul.u32 8, %s4267
              %s4271 = scalar_lea.vmem %s4206, %s4270
              // While loop
              $region76: #{simple_res_mlp.1} parent=67 // loop_pre_header
                _
              $region77: #{simple_res_mlp.1} parent=67 // loop_header
                %s4273 = sphi 0, %s4275
                %p4274 = scmp.ge.s32.totalorder %s4273, %s4266
                %s4278 = sphi 0, %s4285
                %s4279 = sphi %s4269, %s4288
                %s4280 = sphi %s4271, %s4289
              $region78: #{simple_res_mlp.1} parent=67 // loop_header_branch
                %4277 = sbr.rel (%p4274) target = $region82
              $region79: #{simple_res_mlp.1} parent=67 // loop_body
                %v4281 = vld [vmem:[%s4279] sm:%s4215]
                %4282 = vst [vmem:[%s4280] sm:%s4215] %v4281
                %s4283 = sadd.s32 1, %s4278
                %p4284 = scmp.ge.s32.totalorder %s4283, %s4266
                %s4285 = scalar_select %p4284, 0, %s4283
                %s4286 = smul.u32 %s4285, 8
                %s4287 = smul.u32 %s4285, 8
                %s4288 = scalar_lea.vmem %s4269, %s4286 [#allocation4]
                %s4289 = scalar_lea.vmem %s4271, %s4287
              $region80: #{simple_res_mlp.1} parent=67 // loop_footer
                %s4275 = sadd.s32 %s4273, 1
              $region81: #{simple_res_mlp.1} parent=67 // loop_footer_branch
                %4272 = sbr.rel target = $region77
              $region82: #{simple_res_mlp.1} parent=67 // loop_exit
                _
            $region68: #{simple_res_mlp.1} parent=59 // pred_fallthru
              _
          $region60: #{simple_res_mlp.1} parent=55 // pred_fallthru
            _
          %4368 = vnop
        $region56: #{simple_res_mlp.1} parent=47 // pred_fallthru
          _
      $region48: #{simple_res_mlp.1} parent=5 // pred_fallthru
        _
      %p4369 = scmp.le.s32.totalorder 2, %s14
      // Predicated region
      $region105: #{simple_res_mlp.1} parent=5 // pred_check
        %p4370 = pneg %p4369
      $region106: #{simple_res_mlp.1} parent=5 // pred_check_branch
        %4372 = sbr.rel (%p4370) target = $region108
      $region107: #{simple_res_mlp.1} parent=5 // pred_region
        %s4373 = ssub.s32 %s14, 2
        // Predicated region
        $region109: #{simple_res_mlp.1} parent=107 // pred_check
          %p4374 = pneg %p195
        $region110: #{simple_res_mlp.1} parent=107 // pred_check_branch
          %4376 = sbr.rel (%p4374) target = $region112
        $region111: #{simple_res_mlp.1} parent=107 // pred_region
          %s4377 = sand.u32 %s180, 1
          %s4378 = sand.u32 %s180, 1
          %s4379 = smul.addr %s4378, 128
          %s4380 = scalar_lea.vmem [#allocation4], %s4379
        $region112: #{simple_res_mlp.1} parent=107 // pred_fallthru
          _
      $region108: #{simple_res_mlp.1} parent=5 // pred_fallthru
        _
    $region6: #{simple_res_mlp.1} parent=1 // loop_footer
      %s18 = sadd.s32 1, %s14
    $region7: #{simple_res_mlp.1} parent=1 // loop_footer_branch
      %13 = sbr.rel target = $region3
    $region8: #{simple_res_mlp.1} parent=1 // loop_exit
      _
    %4381 = vsyncpa [#allocation3], 1
    %s4382 = scalar_lea.sflag [#allocation3], 1
    %4383 = vsyncpa %s4382, 1

</llo_original>
